<compile_context>
chip_gen: v7x
topology: tpu7x:2x2x1
jax: 0.10.0
libtpu: 0.0.40
codegen_flags: <defaults>
</compile_context>

<pallas_src>
import jax
import jax.numpy as jnp
from jax.experimental import pallas as pl
from jax.experimental.pallas import tpu as pltpu
import numpy as np


def _fold_bn(conv_bias, gamma, beta, running_mean, running_var, eps=1e-5):
    scale = gamma / jnp.sqrt(running_var + eps)          # (C,)
    shift = beta + (conv_bias - running_mean) * scale    # (C,)
    return scale.reshape(-1, 1), shift.reshape(-1, 1)    # (C, 1) columns (broadcast over L)


# TODO(synk): training-mode BatchNorm (batch statistics + running-stat update) is not
# implemented; the kernel folds eval-mode running stats into per-channel scale/shift.
def kanres_init_forward(x, params, stride):
    """x: (N, Cin, L) -> (N, f2, L2); both Conv1d-BN-ReLU stages fused in one pallas_call."""
    N, C_in, L = x.shape
    f1, _, k1 = params["w1"].shape
    f2, _, k2 = params["w2"].shape
    L1 = (L - k1) // stride + 1
    L2 = L1 - k2 + 1
    Lh = -(-L // stride)                    # phase length; always >= (k1-1)//stride + L1

    # ---- grid / per-step batch: >=2 steps for v7x's two TCs, unroll capped at 8 ----
    B_MAX = 8
    G = max(2 if N >= 2 else 1, -(-N // B_MAX))
    B = -(-N // G)
    Npad = G * B
    x_p = x if Npad == N else jnp.pad(x, ((0, Npad - N), (0, 0), (0, 0)))

    # ---- pack parameters: tap-major weights with folded BN scale/shift appended ----
    KC1, KC2 = k1 * C_in, k2 * f1
    w1m = jnp.transpose(params["w1"], (0, 2, 1)).reshape(f1, KC1)
    w2m = jnp.transpose(params["w2"], (0, 2, 1)).reshape(f2, KC2)
    s1, b1 = _fold_bn(params["b1"], params["g1"], params["be1"], params["m1"], params["v1"])
    s2, b2 = _fold_bn(params["b2"], params["g2"], params["be2"], params["m2"], params["v2"])
    p1 = jnp.concatenate([w1m, s1, b1], axis=1)          # (f1, KC1 + 2)
    p2 = jnp.concatenate([w2m, s2, b2], axis=1)          # (f2, KC2 + 2)

    def kernel(x_ref, p1_ref, p2_ref, o_ref):
        # packed params: [W_tapmajor | bn_scale | bn_shift]  (loaded once per grid step)
        p1v = p1_ref[...]
        w1 = p1v[:, :KC1]
        sc1 = p1v[:, KC1:KC1 + 1]
        sh1 = p1v[:, KC1 + 1:KC1 + 2]
        p2v = p2_ref[...]
        w2 = p2v[:, :KC2]
        sc2 = p2v[:, KC2:KC2 + 1]
        sh2 = p2v[:, KC2 + 1:KC2 + 2]

        # 0/1 deinterleave matrices D_r[j, u] = (j == u*stride + r); built once per step.
        jrow = jax.lax.broadcasted_iota(jnp.int32, (L, Lh), 0)
        ucol = jax.lax.broadcasted_iota(jnp.int32, (L, Lh), 1)
        deint = [(jrow == stride * ucol + r).astype(jnp.float32) for r in range(stride)]

        for b in range(B):                                # static unroll, B <= 8
            xr = x_ref[b]                                 # (Cin, L), length on lanes
            # phase split on the MXU: xph[r][c, u] = x[c, u*stride + r]
            xph = [jnp.dot(xr, d, preferred_element_type=jnp.float32) for d in deint]

            # ---- stage 1: Conv1d(k1, stride) as VPU broadcast-MACs over taps/channels ----
            h1 = jnp.zeros((f1, L1), jnp.float32)
            for k in range(k1):
                r, q = k % stride, k // stride
                for c in range(C_in):
                    col = w1[:, k * C_in + c: k * C_in + c + 1]        # (f1, 1)
                    row_v = xph[r][c:c + 1, q:q + L1]                  # (1, L1) contiguous
                    h1 = h1 + col * row_v
            h1 = jnp.maximum(h1 * sc1 + sh1, 0.0)                      # folded BN + ReLU

            # ---- stage 2: Conv1d(k2, stride=1), fed from the VMEM/vreg-resident h1 ----
            h2 = jnp.zeros((f2, L2), jnp.float32)
            for q in range(k2):
                for c in range(f1):
                    col = w2[:, q * f1 + c: q * f1 + c + 1]            # (f2, 1)
                    row_v = h1[c:c + 1, q:q + L2]                      # (1, L2)
                    h2 = h2 + col * row_v
            h2 = jnp.maximum(h2 * sc2 + sh2, 0.0)                      # folded BN + ReLU

            o_ref[b, :, :] = h2.astype(o_ref.dtype)                    # NCL out, length on lanes

    out = pl.pallas_call(
        kernel,
        out_shape=jax.ShapeDtypeStruct((Npad, f2, L2), jnp.float32),
        grid=(G,),
        in_specs=[
            pl.BlockSpec((B, C_in, L), lambda g: (g, 0, 0)),
            pl.BlockSpec((f1, KC1 + 2), lambda g: (0, 0)),
            pl.BlockSpec((f2, KC2 + 2), lambda g: (0, 0)),
        ],
        out_specs=pl.BlockSpec((B, f2, L2), lambda g: (g, 0, 0)),
        compiler_params=pltpu.CompilerParams(dimension_semantics=("parallel",)),
    )(x_p, p1, p2)
    return out if Npad == N else out[:N]


# --------------------------- pure-JAX reference --------------------------------
def _ref_forward(x, params, stride, eps=1e-5):
    def block(x, w, b, g, be, m, v, s):
        y = jax.lax.conv_general_dilated(
            x, w, window_strides=(s,), padding="VALID",
            dimension_numbers=("NCH", "OIH", "NCH"))
        y = y + b[None, :, None]
        y = g[None, :, None] * (y - m[None, :, None]) / jnp.sqrt(v[None, :, None] + eps) \
            + be[None, :, None]
        return jnp.maximum(y, 0.0)
    x = block(x, params["w1"], params["b1"], params["g1"], params["be1"],
              params["m1"], params["v1"], stride)
    x = block(x, params["w2"], params["b2"], params["g2"], params["be2"],
              params["m2"], params["v2"], 1)
    return x


# --------------------------------- main ----------------------------------------
if __name__ == "__main__":
    # Module config: KanResInit(in_channels=4, filterno_1=8, filterno_2=16,
    #                           filtersize_1=8, filtersize_2=3, stride=2)
    in_channels, f1, f2, k1, k2, stride = 4, 8, 16, 8, 3, 2
    N, L = 8, 64                      # N=8 -> 2 grid steps x 4 samples per step

    key = jax.random.PRNGKey(0)
    ks = jax.random.split(key, 12)
    params = {
        "w1": jax.random.normal(ks[0], (f1, in_channels, k1), jnp.float32) * 0.1,
        "b1": jax.random.normal(ks[1], (f1,), jnp.float32) * 0.1,
        "g1": 1.0 + 0.1 * jax.random.normal(ks[2], (f1,), jnp.float32),
        "be1": 0.1 * jax.random.normal(ks[3], (f1,), jnp.float32),
        "m1": 0.1 * jax.random.normal(ks[4], (f1,), jnp.float32),
        "v1": 1.0 + 0.1 * jax.random.uniform(ks[5], (f1,), jnp.float32),
        "w2": jax.random.normal(ks[6], (f2, f1, k2), jnp.float32) * 0.1,
        "b2": jax.random.normal(ks[7], (f2,), jnp.float32) * 0.1,
        "g2": 1.0 + 0.1 * jax.random.normal(ks[8], (f2,), jnp.float32),
        "be2": 0.1 * jax.random.normal(ks[9], (f2,), jnp.float32),
        "m2": 0.1 * jax.random.normal(ks[10], (f2,), jnp.float32),
        "v2": 1.0 + 0.1 * jax.random.uniform(ks[11], (f2,), jnp.float32),
    }
    x = jax.random.normal(jax.random.PRNGKey(42), (N, in_channels, L), jnp.float32)

    fwd = jax.jit(kanres_init_forward, static_argnums=(2,))
    out = jax.block_until_ready(fwd(x, params, stride))
    ref = jax.block_until_ready(_ref_forward(x, params, stride))

    np.testing.assert_allclose(np.asarray(out), np.asarray(ref), rtol=1e-5, atol=1e-5)
    assert out.shape == (N, f2, (L - k1) // stride + 1 - k2 + 1)

    print("KERNEL_OK")
</pallas_src>

<mosaic_0001>
module attributes {stable_mosaic.version = 11 : i64} {
  func.func @kernel(%arg0: i32, %arg1: memref<4x4x64xf32, #tpu.memory_space<vmem>>, %arg2: memref<8x34xf32, #tpu.memory_space<vmem>>, %arg3: memref<16x26xf32, #tpu.memory_space<vmem>>, %arg4: memref<4x16x27xf32, #tpu.memory_space<vmem>>) attributes {dimension_semantics = [#tpu.dimension_semantics<parallel>], iteration_bounds = array<i64: 2>, scalar_prefetch = 0 : i64, scratch_operands = 0 : i64, tpu.core_type = #tpu.core_type<tc>, window_params = [{transform_indices = @transform_0, window_bounds = array<i64: 4, 4, 64>}, {pipeline_mode = #tpu.pipeline_mode<synchronous>, transform_indices = @transform_1, window_bounds = array<i64: 8, 34>}, {pipeline_mode = #tpu.pipeline_mode<synchronous>, transform_indices = @transform_2, window_bounds = array<i64: 16, 26>}, {transform_indices = @transform_3, window_bounds = array<i64: 4, 16, 27>}]} {
    %c0 = arith.constant 0 : index
    %c0_0 = arith.constant 0 : index
    %0 = vector.load %arg2[%c0, %c0_0] : memref<8x34xf32, #tpu.memory_space<vmem>>, vector<8x34xf32>
    %1 = vector.extract_strided_slice %0 {offsets = [0, 0], sizes = [8, 32], strides = [1, 1]} : vector<8x34xf32> to vector<8x32xf32>
    %2 = vector.extract_strided_slice %0 {offsets = [0, 32], sizes = [8, 1], strides = [1, 1]} : vector<8x34xf32> to vector<8x1xf32>
    %3 = vector.extract_strided_slice %0 {offsets = [0, 33], sizes = [8, 1], strides = [1, 1]} : vector<8x34xf32> to vector<8x1xf32>
    %c0_1 = arith.constant 0 : index
    %c0_2 = arith.constant 0 : index
    %4 = vector.load %arg3[%c0_1, %c0_2] : memref<16x26xf32, #tpu.memory_space<vmem>>, vector<16x26xf32>
    %5 = vector.extract_strided_slice %4 {offsets = [0, 0], sizes = [16, 24], strides = [1, 1]} : vector<16x26xf32> to vector<16x24xf32>
    %6 = vector.extract_strided_slice %4 {offsets = [0, 24], sizes = [16, 1], strides = [1, 1]} : vector<16x26xf32> to vector<16x1xf32>
    %7 = vector.extract_strided_slice %4 {offsets = [0, 25], sizes = [16, 1], strides = [1, 1]} : vector<16x26xf32> to vector<16x1xf32>
    %8 = tpu.iota {dimensions = array<i32: 0>} : vector<64x32xi32>
    %9 = tpu.iota {dimensions = array<i32: 1>} : vector<64x32xi32>
    %c2_i32 = arith.constant 2 : i32
    %10 = vector.broadcast %c2_i32 : i32 to vector<64x32xi32>
    %11 = arith.muli %10, %9 : vector<64x32xi32>
    %c0_i32 = arith.constant 0 : i32
    %12 = vector.broadcast %c0_i32 : i32 to vector<64x32xi32>
    %13 = arith.addi %11, %12 : vector<64x32xi32>
    %14 = arith.cmpi eq, %8, %13 : vector<64x32xi32>
    %15 = arith.extui %14 : vector<64x32xi1> to vector<64x32xi32>
    %16 = arith.sitofp %15 : vector<64x32xi32> to vector<64x32xf32>
    %c2_i32_3 = arith.constant 2 : i32
    %17 = vector.broadcast %c2_i32_3 : i32 to vector<64x32xi32>
    %18 = arith.muli %17, %9 : vector<64x32xi32>
    %c1_i32 = arith.constant 1 : i32
    %19 = vector.broadcast %c1_i32 : i32 to vector<64x32xi32>
    %20 = arith.addi %18, %19 : vector<64x32xi32>
    %21 = arith.cmpi eq, %8, %20 : vector<64x32xi32>
    %22 = arith.extui %21 : vector<64x32xi1> to vector<64x32xi32>
    %23 = arith.sitofp %22 : vector<64x32xi32> to vector<64x32xf32>
    %c0_4 = arith.constant 0 : index
    %c0_5 = arith.constant 0 : index
    %c0_6 = arith.constant 0 : index
    %24 = vector.load %arg1[%c0_4, %c0_5, %c0_6] : memref<4x4x64xf32, #tpu.memory_space<vmem>>, vector<1x4x64xf32>
    %25 = vector.shape_cast %24 : vector<1x4x64xf32> to vector<4x64xf32>
    %cst = arith.constant dense<0.000000e+00> : vector<4x32xf32>
    %26 = tpu.matmul %25, %16, %cst {dimension_numbers = #tpu.dot_dimension_numbers<[1], [0], [0], [1], [0, 0, 1, 1], [], []>} : vector<4x64xf32>, vector<64x32xf32>, vector<4x32xf32> -> vector<4x32xf32>
    %cst_7 = arith.constant dense<0.000000e+00> : vector<4x32xf32>
    %27 = tpu.matmul %25, %23, %cst_7 {dimension_numbers = #tpu.dot_dimension_numbers<[1], [0], [0], [1], [0, 0, 1, 1], [], []>} : vector<4x64xf32>, vector<64x32xf32>, vector<4x32xf32> -> vector<4x32xf32>
    %cst_8 = arith.constant 0.000000e+00 : f32
    %28 = vector.broadcast %cst_8 : f32 to vector<8x29xf32>
    %29 = vector.extract_strided_slice %1 {offsets = [0, 0], sizes = [8, 1], strides = [1, 1]} : vector<8x32xf32> to vector<8x1xf32>
    %30 = vector.extract_strided_slice %26 {offsets = [0, 0], sizes = [1, 29], strides = [1, 1]} : vector<4x32xf32> to vector<1x29xf32>
    %31 = vector.broadcast %29 : vector<8x1xf32> to vector<8x29xf32>
    %32 = vector.broadcast %30 : vector<1x29xf32> to vector<8x29xf32>
    %33 = arith.mulf %31, %32 : vector<8x29xf32>
    %34 = arith.addf %28, %33 : vector<8x29xf32>
    %35 = vector.extract_strided_slice %1 {offsets = [0, 1], sizes = [8, 1], strides = [1, 1]} : vector<8x32xf32> to vector<8x1xf32>
    %36 = vector.extract_strided_slice %26 {offsets = [1, 0], sizes = [1, 29], strides = [1, 1]} : vector<4x32xf32> to vector<1x29xf32>
    %37 = vector.broadcast %35 : vector<8x1xf32> to vector<8x29xf32>
    %38 = vector.broadcast %36 : vector<1x29xf32> to vector<8x29xf32>
    %39 = arith.mulf %37, %38 : vector<8x29xf32>
    %40 = arith.addf %34, %39 : vector<8x29xf32>
    %41 = vector.extract_strided_slice %1 {offsets = [0, 2], sizes = [8, 1], strides = [1, 1]} : vector<8x32xf32> to vector<8x1xf32>
    %42 = vector.extract_strided_slice %26 {offsets = [2, 0], sizes = [1, 29], strides = [1, 1]} : vector<4x32xf32> to vector<1x29xf32>
    %43 = vector.broadcast %41 : vector<8x1xf32> to vector<8x29xf32>
    %44 = vector.broadcast %42 : vector<1x29xf32> to vector<8x29xf32>
    %45 = arith.mulf %43, %44 : vector<8x29xf32>
    %46 = arith.addf %40, %45 : vector<8x29xf32>
    %47 = vector.extract_strided_slice %1 {offsets = [0, 3], sizes = [8, 1], strides = [1, 1]} : vector<8x32xf32> to vector<8x1xf32>
    %48 = vector.extract_strided_slice %26 {offsets = [3, 0], sizes = [1, 29], strides = [1, 1]} : vector<4x32xf32> to vector<1x29xf32>
    %49 = vector.broadcast %47 : vector<8x1xf32> to vector<8x29xf32>
    %50 = vector.broadcast %48 : vector<1x29xf32> to vector<8x29xf32>
    %51 = arith.mulf %49, %50 : vector<8x29xf32>
    %52 = arith.addf %46, %51 : vector<8x29xf32>
    %53 = vector.extract_strided_slice %1 {offsets = [0, 4], sizes = [8, 1], strides = [1, 1]} : vector<8x32xf32> to vector<8x1xf32>
    %54 = vector.extract_strided_slice %27 {offsets = [0, 0], sizes = [1, 29], strides = [1, 1]} : vector<4x32xf32> to vector<1x29xf32>
    %55 = vector.broadcast %53 : vector<8x1xf32> to vector<8x29xf32>
    %56 = vector.broadcast %54 : vector<1x29xf32> to vector<8x29xf32>
    %57 = arith.mulf %55, %56 : vector<8x29xf32>
    %58 = arith.addf %52, %57 : vector<8x29xf32>
    %59 = vector.extract_strided_slice %1 {offsets = [0, 5], sizes = [8, 1], strides = [1, 1]} : vector<8x32xf32> to vector<8x1xf32>
    %60 = vector.extract_strided_slice %27 {offsets = [1, 0], sizes = [1, 29], strides = [1, 1]} : vector<4x32xf32> to vector<1x29xf32>
    %61 = vector.broadcast %59 : vector<8x1xf32> to vector<8x29xf32>
    %62 = vector.broadcast %60 : vector<1x29xf32> to vector<8x29xf32>
    %63 = arith.mulf %61, %62 : vector<8x29xf32>
    %64 = arith.addf %58, %63 : vector<8x29xf32>
    %65 = vector.extract_strided_slice %1 {offsets = [0, 6], sizes = [8, 1], strides = [1, 1]} : vector<8x32xf32> to vector<8x1xf32>
    %66 = vector.extract_strided_slice %27 {offsets = [2, 0], sizes = [1, 29], strides = [1, 1]} : vector<4x32xf32> to vector<1x29xf32>
    %67 = vector.broadcast %65 : vector<8x1xf32> to vector<8x29xf32>
    %68 = vector.broadcast %66 : vector<1x29xf32> to vector<8x29xf32>
    %69 = arith.mulf %67, %68 : vector<8x29xf32>
    %70 = arith.addf %64, %69 : vector<8x29xf32>
    %71 = vector.extract_strided_slice %1 {offsets = [0, 7], sizes = [8, 1], strides = [1, 1]} : vector<8x32xf32> to vector<8x1xf32>
    %72 = vector.extract_strided_slice %27 {offsets = [3, 0], sizes = [1, 29], strides = [1, 1]} : vector<4x32xf32> to vector<1x29xf32>
    %73 = vector.broadcast %71 : vector<8x1xf32> to vector<8x29xf32>
    %74 = vector.broadcast %72 : vector<1x29xf32> to vector<8x29xf32>
    %75 = arith.mulf %73, %74 : vector<8x29xf32>
    %76 = arith.addf %70, %75 : vector<8x29xf32>
    %77 = vector.extract_strided_slice %1 {offsets = [0, 8], sizes = [8, 1], strides = [1, 1]} : vector<8x32xf32> to vector<8x1xf32>
    %78 = vector.extract_strided_slice %26 {offsets = [0, 1], sizes = [1, 29], strides = [1, 1]} : vector<4x32xf32> to vector<1x29xf32>
    %79 = vector.broadcast %77 : vector<8x1xf32> to vector<8x29xf32>
    %80 = vector.broadcast %78 : vector<1x29xf32> to vector<8x29xf32>
    %81 = arith.mulf %79, %80 : vector<8x29xf32>
    %82 = arith.addf %76, %81 : vector<8x29xf32>
    %83 = vector.extract_strided_slice %1 {offsets = [0, 9], sizes = [8, 1], strides = [1, 1]} : vector<8x32xf32> to vector<8x1xf32>
    %84 = vector.extract_strided_slice %26 {offsets = [1, 1], sizes = [1, 29], strides = [1, 1]} : vector<4x32xf32> to vector<1x29xf32>
    %85 = vector.broadcast %83 : vector<8x1xf32> to vector<8x29xf32>
    %86 = vector.broadcast %84 : vector<1x29xf32> to vector<8x29xf32>
    %87 = arith.mulf %85, %86 : vector<8x29xf32>
    %88 = arith.addf %82, %87 : vector<8x29xf32>
    %89 = vector.extract_strided_slice %1 {offsets = [0, 10], sizes = [8, 1], strides = [1, 1]} : vector<8x32xf32> to vector<8x1xf32>
    %90 = vector.extract_strided_slice %26 {offsets = [2, 1], sizes = [1, 29], strides = [1, 1]} : vector<4x32xf32> to vector<1x29xf32>
    %91 = vector.broadcast %89 : vector<8x1xf32> to vector<8x29xf32>
    %92 = vector.broadcast %90 : vector<1x29xf32> to vector<8x29xf32>
    %93 = arith.mulf %91, %92 : vector<8x29xf32>
    %94 = arith.addf %88, %93 : vector<8x29xf32>
    %95 = vector.extract_strided_slice %1 {offsets = [0, 11], sizes = [8, 1], strides = [1, 1]} : vector<8x32xf32> to vector<8x1xf32>
    %96 = vector.extract_strided_slice %26 {offsets = [3, 1], sizes = [1, 29], strides = [1, 1]} : vector<4x32xf32> to vector<1x29xf32>
    %97 = vector.broadcast %95 : vector<8x1xf32> to vector<8x29xf32>
    %98 = vector.broadcast %96 : vector<1x29xf32> to vector<8x29xf32>
    %99 = arith.mulf %97, %98 : vector<8x29xf32>
    %100 = arith.addf %94, %99 : vector<8x29xf32>
    %101 = vector.extract_strided_slice %1 {offsets = [0, 12], sizes = [8, 1], strides = [1, 1]} : vector<8x32xf32> to vector<8x1xf32>
    %102 = vector.extract_strided_slice %27 {offsets = [0, 1], sizes = [1, 29], strides = [1, 1]} : vector<4x32xf32> to vector<1x29xf32>
    %103 = vector.broadcast %101 : vector<8x1xf32> to vector<8x29xf32>
    %104 = vector.broadcast %102 : vector<1x29xf32> to vector<8x29xf32>
    %105 = arith.mulf %103, %104 : vector<8x29xf32>
    %106 = arith.addf %100, %105 : vector<8x29xf32>
    %107 = vector.extract_strided_slice %1 {offsets = [0, 13], sizes = [8, 1], strides = [1, 1]} : vector<8x32xf32> to vector<8x1xf32>
    %108 = vector.extract_strided_slice %27 {offsets = [1, 1], sizes = [1, 29], strides = [1, 1]} : vector<4x32xf32> to vector<1x29xf32>
    %109 = vector.broadcast %107 : vector<8x1xf32> to vector<8x29xf32>
    %110 = vector.broadcast %108 : vector<1x29xf32> to vector<8x29xf32>
    %111 = arith.mulf %109, %110 : vector<8x29xf32>
    %112 = arith.addf %106, %111 : vector<8x29xf32>
    %113 = vector.extract_strided_slice %1 {offsets = [0, 14], sizes = [8, 1], strides = [1, 1]} : vector<8x32xf32> to vector<8x1xf32>
    %114 = vector.extract_strided_slice %27 {offsets = [2, 1], sizes = [1, 29], strides = [1, 1]} : vector<4x32xf32> to vector<1x29xf32>
    %115 = vector.broadcast %113 : vector<8x1xf32> to vector<8x29xf32>
    %116 = vector.broadcast %114 : vector<1x29xf32> to vector<8x29xf32>
    %117 = arith.mulf %115, %116 : vector<8x29xf32>
    %118 = arith.addf %112, %117 : vector<8x29xf32>
    %119 = vector.extract_strided_slice %1 {offsets = [0, 15], sizes = [8, 1], strides = [1, 1]} : vector<8x32xf32> to vector<8x1xf32>
    %120 = vector.extract_strided_slice %27 {offsets = [3, 1], sizes = [1, 29], strides = [1, 1]} : vector<4x32xf32> to vector<1x29xf32>
    %121 = vector.broadcast %119 : vector<8x1xf32> to vector<8x29xf32>
    %122 = vector.broadcast %120 : vector<1x29xf32> to vector<8x29xf32>
    %123 = arith.mulf %121, %122 : vector<8x29xf32>
    %124 = arith.addf %118, %123 : vector<8x29xf32>
    %125 = vector.extract_strided_slice %1 {offsets = [0, 16], sizes = [8, 1], strides = [1, 1]} : vector<8x32xf32> to vector<8x1xf32>
    %126 = vector.extract_strided_slice %26 {offsets = [0, 2], sizes = [1, 29], strides = [1, 1]} : vector<4x32xf32> to vector<1x29xf32>
    %127 = vector.broadcast %125 : vector<8x1xf32> to vector<8x29xf32>
    %128 = vector.broadcast %126 : vector<1x29xf32> to vector<8x29xf32>
    %129 = arith.mulf %127, %128 : vector<8x29xf32>
    %130 = arith.addf %124, %129 : vector<8x29xf32>
    %131 = vector.extract_strided_slice %1 {offsets = [0, 17], sizes = [8, 1], strides = [1, 1]} : vector<8x32xf32> to vector<8x1xf32>
    %132 = vector.extract_strided_slice %26 {offsets = [1, 2], sizes = [1, 29], strides = [1, 1]} : vector<4x32xf32> to vector<1x29xf32>
    %133 = vector.broadcast %131 : vector<8x1xf32> to vector<8x29xf32>
    %134 = vector.broadcast %132 : vector<1x29xf32> to vector<8x29xf32>
    %135 = arith.mulf %133, %134 : vector<8x29xf32>
    %136 = arith.addf %130, %135 : vector<8x29xf32>
    %137 = vector.extract_strided_slice %1 {offsets = [0, 18], sizes = [8, 1], strides = [1, 1]} : vector<8x32xf32> to vector<8x1xf32>
    %138 = vector.extract_strided_slice %26 {offsets = [2, 2], sizes = [1, 29], strides = [1, 1]} : vector<4x32xf32> to vector<1x29xf32>
    %139 = vector.broadcast %137 : vector<8x1xf32> to vector<8x29xf32>
    %140 = vector.broadcast %138 : vector<1x29xf32> to vector<8x29xf32>
    %141 = arith.mulf %139, %140 : vector<8x29xf32>
    %142 = arith.addf %136, %141 : vector<8x29xf32>
    %143 = vector.extract_strided_slice %1 {offsets = [0, 19], sizes = [8, 1], strides = [1, 1]} : vector<8x32xf32> to vector<8x1xf32>
    %144 = vector.extract_strided_slice %26 {offsets = [3, 2], sizes = [1, 29], strides = [1, 1]} : vector<4x32xf32> to vector<1x29xf32>
    %145 = vector.broadcast %143 : vector<8x1xf32> to vector<8x29xf32>
    %146 = vector.broadcast %144 : vector<1x29xf32> to vector<8x29xf32>
    %147 = arith.mulf %145, %146 : vector<8x29xf32>
    %148 = arith.addf %142, %147 : vector<8x29xf32>
    %149 = vector.extract_strided_slice %1 {offsets = [0, 20], sizes = [8, 1], strides = [1, 1]} : vector<8x32xf32> to vector<8x1xf32>
    %150 = vector.extract_strided_slice %27 {offsets = [0, 2], sizes = [1, 29], strides = [1, 1]} : vector<4x32xf32> to vector<1x29xf32>
    %151 = vector.broadcast %149 : vector<8x1xf32> to vector<8x29xf32>
    %152 = vector.broadcast %150 : vector<1x29xf32> to vector<8x29xf32>
    %153 = arith.mulf %151, %152 : vector<8x29xf32>
    %154 = arith.addf %148, %153 : vector<8x29xf32>
    %155 = vector.extract_strided_slice %1 {offsets = [0, 21], sizes = [8, 1], strides = [1, 1]} : vector<8x32xf32> to vector<8x1xf32>
    %156 = vector.extract_strided_slice %27 {offsets = [1, 2], sizes = [1, 29], strides = [1, 1]} : vector<4x32xf32> to vector<1x29xf32>
    %157 = vector.broadcast %155 : vector<8x1xf32> to vector<8x29xf32>
    %158 = vector.broadcast %156 : vector<1x29xf32> to vector<8x29xf32>
    %159 = arith.mulf %157, %158 : vector<8x29xf32>
    %160 = arith.addf %154, %159 : vector<8x29xf32>
    %161 = vector.extract_strided_slice %1 {offsets = [0, 22], sizes = [8, 1], strides = [1, 1]} : vector<8x32xf32> to vector<8x1xf32>
    %162 = vector.extract_strided_slice %27 {offsets = [2, 2], sizes = [1, 29], strides = [1, 1]} : vector<4x32xf32> to vector<1x29xf32>
    %163 = vector.broadcast %161 : vector<8x1xf32> to vector<8x29xf32>
    %164 = vector.broadcast %162 : vector<1x29xf32> to vector<8x29xf32>
    %165 = arith.mulf %163, %164 : vector<8x29xf32>
    %166 = arith.addf %160, %165 : vector<8x29xf32>
    %167 = vector.extract_strided_slice %1 {offsets = [0, 23], sizes = [8, 1], strides = [1, 1]} : vector<8x32xf32> to vector<8x1xf32>
    %168 = vector.extract_strided_slice %27 {offsets = [3, 2], sizes = [1, 29], strides = [1, 1]} : vector<4x32xf32> to vector<1x29xf32>
    %169 = vector.broadcast %167 : vector<8x1xf32> to vector<8x29xf32>
    %170 = vector.broadcast %168 : vector<1x29xf32> to vector<8x29xf32>
    %171 = arith.mulf %169, %170 : vector<8x29xf32>
    %172 = arith.addf %166, %171 : vector<8x29xf32>
    %173 = vector.extract_strided_slice %1 {offsets = [0, 24], sizes = [8, 1], strides = [1, 1]} : vector<8x32xf32> to vector<8x1xf32>
    %174 = vector.extract_strided_slice %26 {offsets = [0, 3], sizes = [1, 29], strides = [1, 1]} : vector<4x32xf32> to vector<1x29xf32>
    %175 = vector.broadcast %173 : vector<8x1xf32> to vector<8x29xf32>
    %176 = vector.broadcast %174 : vector<1x29xf32> to vector<8x29xf32>
    %177 = arith.mulf %175, %176 : vector<8x29xf32>
    %178 = arith.addf %172, %177 : vector<8x29xf32>
    %179 = vector.extract_strided_slice %1 {offsets = [0, 25], sizes = [8, 1], strides = [1, 1]} : vector<8x32xf32> to vector<8x1xf32>
    %180 = vector.extract_strided_slice %26 {offsets = [1, 3], sizes = [1, 29], strides = [1, 1]} : vector<4x32xf32> to vector<1x29xf32>
    %181 = vector.broadcast %179 : vector<8x1xf32> to vector<8x29xf32>
    %182 = vector.broadcast %180 : vector<1x29xf32> to vector<8x29xf32>
    %183 = arith.mulf %181, %182 : vector<8x29xf32>
    %184 = arith.addf %178, %183 : vector<8x29xf32>
    %185 = vector.extract_strided_slice %1 {offsets = [0, 26], sizes = [8, 1], strides = [1, 1]} : vector<8x32xf32> to vector<8x1xf32>
    %186 = vector.extract_strided_slice %26 {offsets = [2, 3], sizes = [1, 29], strides = [1, 1]} : vector<4x32xf32> to vector<1x29xf32>
    %187 = vector.broadcast %185 : vector<8x1xf32> to vector<8x29xf32>
    %188 = vector.broadcast %186 : vector<1x29xf32> to vector<8x29xf32>
    %189 = arith.mulf %187, %188 : vector<8x29xf32>
    %190 = arith.addf %184, %189 : vector<8x29xf32>
    %191 = vector.extract_strided_slice %1 {offsets = [0, 27], sizes = [8, 1], strides = [1, 1]} : vector<8x32xf32> to vector<8x1xf32>
    %192 = vector.extract_strided_slice %26 {offsets = [3, 3], sizes = [1, 29], strides = [1, 1]} : vector<4x32xf32> to vector<1x29xf32>
    %193 = vector.broadcast %191 : vector<8x1xf32> to vector<8x29xf32>
    %194 = vector.broadcast %192 : vector<1x29xf32> to vector<8x29xf32>
    %195 = arith.mulf %193, %194 : vector<8x29xf32>
    %196 = arith.addf %190, %195 : vector<8x29xf32>
    %197 = vector.extract_strided_slice %1 {offsets = [0, 28], sizes = [8, 1], strides = [1, 1]} : vector<8x32xf32> to vector<8x1xf32>
    %198 = vector.extract_strided_slice %27 {offsets = [0, 3], sizes = [1, 29], strides = [1, 1]} : vector<4x32xf32> to vector<1x29xf32>
    %199 = vector.broadcast %197 : vector<8x1xf32> to vector<8x29xf32>
    %200 = vector.broadcast %198 : vector<1x29xf32> to vector<8x29xf32>
    %201 = arith.mulf %199, %200 : vector<8x29xf32>
    %202 = arith.addf %196, %201 : vector<8x29xf32>
    %203 = vector.extract_strided_slice %1 {offsets = [0, 29], sizes = [8, 1], strides = [1, 1]} : vector<8x32xf32> to vector<8x1xf32>
    %204 = vector.extract_strided_slice %27 {offsets = [1, 3], sizes = [1, 29], strides = [1, 1]} : vector<4x32xf32> to vector<1x29xf32>
    %205 = vector.broadcast %203 : vector<8x1xf32> to vector<8x29xf32>
    %206 = vector.broadcast %204 : vector<1x29xf32> to vector<8x29xf32>
    %207 = arith.mulf %205, %206 : vector<8x29xf32>
    %208 = arith.addf %202, %207 : vector<8x29xf32>
    %209 = vector.extract_strided_slice %1 {offsets = [0, 30], sizes = [8, 1], strides = [1, 1]} : vector<8x32xf32> to vector<8x1xf32>
    %210 = vector.extract_strided_slice %27 {offsets = [2, 3], sizes = [1, 29], strides = [1, 1]} : vector<4x32xf32> to vector<1x29xf32>
    %211 = vector.broadcast %209 : vector<8x1xf32> to vector<8x29xf32>
    %212 = vector.broadcast %210 : vector<1x29xf32> to vector<8x29xf32>
    %213 = arith.mulf %211, %212 : vector<8x29xf32>
    %214 = arith.addf %208, %213 : vector<8x29xf32>
    %215 = vector.extract_strided_slice %1 {offsets = [0, 31], sizes = [8, 1], strides = [1, 1]} : vector<8x32xf32> to vector<8x1xf32>
    %216 = vector.extract_strided_slice %27 {offsets = [3, 3], sizes = [1, 29], strides = [1, 1]} : vector<4x32xf32> to vector<1x29xf32>
    %217 = vector.broadcast %215 : vector<8x1xf32> to vector<8x29xf32>
    %218 = vector.broadcast %216 : vector<1x29xf32> to vector<8x29xf32>
    %219 = arith.mulf %217, %218 : vector<8x29xf32>
    %220 = arith.addf %214, %219 : vector<8x29xf32>
    %221 = vector.broadcast %2 : vector<8x1xf32> to vector<8x29xf32>
    %222 = arith.mulf %220, %221 : vector<8x29xf32>
    %223 = vector.broadcast %3 : vector<8x1xf32> to vector<8x29xf32>
    %224 = arith.addf %222, %223 : vector<8x29xf32>
    %cst_9 = arith.constant 0.000000e+00 : f32
    %225 = vector.broadcast %cst_9 : f32 to vector<8x29xf32>
    %226 = arith.maximumf %224, %225 : vector<8x29xf32>
    %cst_10 = arith.constant 0.000000e+00 : f32
    %227 = vector.broadcast %cst_10 : f32 to vector<16x27xf32>
    %228 = vector.extract_strided_slice %5 {offsets = [0, 0], sizes = [16, 1], strides = [1, 1]} : vector<16x24xf32> to vector<16x1xf32>
    %229 = vector.extract_strided_slice %226 {offsets = [0, 0], sizes = [1, 27], strides = [1, 1]} : vector<8x29xf32> to vector<1x27xf32>
    %230 = vector.broadcast %228 : vector<16x1xf32> to vector<16x27xf32>
    %231 = vector.broadcast %229 : vector<1x27xf32> to vector<16x27xf32>
    %232 = arith.mulf %230, %231 : vector<16x27xf32>
    %233 = arith.addf %227, %232 : vector<16x27xf32>
    %234 = vector.extract_strided_slice %5 {offsets = [0, 1], sizes = [16, 1], strides = [1, 1]} : vector<16x24xf32> to vector<16x1xf32>
    %235 = vector.extract_strided_slice %226 {offsets = [1, 0], sizes = [1, 27], strides = [1, 1]} : vector<8x29xf32> to vector<1x27xf32>
    %236 = vector.broadcast %234 : vector<16x1xf32> to vector<16x27xf32>
    %237 = vector.broadcast %235 : vector<1x27xf32> to vector<16x27xf32>
    %238 = arith.mulf %236, %237 : vector<16x27xf32>
    %239 = arith.addf %233, %238 : vector<16x27xf32>
    %240 = vector.extract_strided_slice %5 {offsets = [0, 2], sizes = [16, 1], strides = [1, 1]} : vector<16x24xf32> to vector<16x1xf32>
    %241 = vector.extract_strided_slice %226 {offsets = [2, 0], sizes = [1, 27], strides = [1, 1]} : vector<8x29xf32> to vector<1x27xf32>
    %242 = vector.broadcast %240 : vector<16x1xf32> to vector<16x27xf32>
    %243 = vector.broadcast %241 : vector<1x27xf32> to vector<16x27xf32>
    %244 = arith.mulf %242, %243 : vector<16x27xf32>
    %245 = arith.addf %239, %244 : vector<16x27xf32>
    %246 = vector.extract_strided_slice %5 {offsets = [0, 3], sizes = [16, 1], strides = [1, 1]} : vector<16x24xf32> to vector<16x1xf32>
    %247 = vector.extract_strided_slice %226 {offsets = [3, 0], sizes = [1, 27], strides = [1, 1]} : vector<8x29xf32> to vector<1x27xf32>
    %248 = vector.broadcast %246 : vector<16x1xf32> to vector<16x27xf32>
    %249 = vector.broadcast %247 : vector<1x27xf32> to vector<16x27xf32>
    %250 = arith.mulf %248, %249 : vector<16x27xf32>
    %251 = arith.addf %245, %250 : vector<16x27xf32>
    %252 = vector.extract_strided_slice %5 {offsets = [0, 4], sizes = [16, 1], strides = [1, 1]} : vector<16x24xf32> to vector<16x1xf32>
    %253 = vector.extract_strided_slice %226 {offsets = [4, 0], sizes = [1, 27], strides = [1, 1]} : vector<8x29xf32> to vector<1x27xf32>
    %254 = vector.broadcast %252 : vector<16x1xf32> to vector<16x27xf32>
    %255 = vector.broadcast %253 : vector<1x27xf32> to vector<16x27xf32>
    %256 = arith.mulf %254, %255 : vector<16x27xf32>
    %257 = arith.addf %251, %256 : vector<16x27xf32>
    %258 = vector.extract_strided_slice %5 {offsets = [0, 5], sizes = [16, 1], strides = [1, 1]} : vector<16x24xf32> to vector<16x1xf32>
    %259 = vector.extract_strided_slice %226 {offsets = [5, 0], sizes = [1, 27], strides = [1, 1]} : vector<8x29xf32> to vector<1x27xf32>
    %260 = vector.broadcast %258 : vector<16x1xf32> to vector<16x27xf32>
    %261 = vector.broadcast %259 : vector<1x27xf32> to vector<16x27xf32>
    %262 = arith.mulf %260, %261 : vector<16x27xf32>
    %263 = arith.addf %257, %262 : vector<16x27xf32>
    %264 = vector.extract_strided_slice %5 {offsets = [0, 6], sizes = [16, 1], strides = [1, 1]} : vector<16x24xf32> to vector<16x1xf32>
    %265 = vector.extract_strided_slice %226 {offsets = [6, 0], sizes = [1, 27], strides = [1, 1]} : vector<8x29xf32> to vector<1x27xf32>
    %266 = vector.broadcast %264 : vector<16x1xf32> to vector<16x27xf32>
    %267 = vector.broadcast %265 : vector<1x27xf32> to vector<16x27xf32>
    %268 = arith.mulf %266, %267 : vector<16x27xf32>
    %269 = arith.addf %263, %268 : vector<16x27xf32>
    %270 = vector.extract_strided_slice %5 {offsets = [0, 7], sizes = [16, 1], strides = [1, 1]} : vector<16x24xf32> to vector<16x1xf32>
    %271 = vector.extract_strided_slice %226 {offsets = [7, 0], sizes = [1, 27], strides = [1, 1]} : vector<8x29xf32> to vector<1x27xf32>
    %272 = vector.broadcast %270 : vector<16x1xf32> to vector<16x27xf32>
    %273 = vector.broadcast %271 : vector<1x27xf32> to vector<16x27xf32>
    %274 = arith.mulf %272, %273 : vector<16x27xf32>
    %275 = arith.addf %269, %274 : vector<16x27xf32>
    %276 = vector.extract_strided_slice %5 {offsets = [0, 8], sizes = [16, 1], strides = [1, 1]} : vector<16x24xf32> to vector<16x1xf32>
    %277 = vector.extract_strided_slice %226 {offsets = [0, 1], sizes = [1, 27], strides = [1, 1]} : vector<8x29xf32> to vector<1x27xf32>
    %278 = vector.broadcast %276 : vector<16x1xf32> to vector<16x27xf32>
    %279 = vector.broadcast %277 : vector<1x27xf32> to vector<16x27xf32>
    %280 = arith.mulf %278, %279 : vector<16x27xf32>
    %281 = arith.addf %275, %280 : vector<16x27xf32>
    %282 = vector.extract_strided_slice %5 {offsets = [0, 9], sizes = [16, 1], strides = [1, 1]} : vector<16x24xf32> to vector<16x1xf32>
    %283 = vector.extract_strided_slice %226 {offsets = [1, 1], sizes = [1, 27], strides = [1, 1]} : vector<8x29xf32> to vector<1x27xf32>
    %284 = vector.broadcast %282 : vector<16x1xf32> to vector<16x27xf32>
    %285 = vector.broadcast %283 : vector<1x27xf32> to vector<16x27xf32>
    %286 = arith.mulf %284, %285 : vector<16x27xf32>
    %287 = arith.addf %281, %286 : vector<16x27xf32>
    %288 = vector.extract_strided_slice %5 {offsets = [0, 10], sizes = [16, 1], strides = [1, 1]} : vector<16x24xf32> to vector<16x1xf32>
    %289 = vector.extract_strided_slice %226 {offsets = [2, 1], sizes = [1, 27], strides = [1, 1]} : vector<8x29xf32> to vector<1x27xf32>
    %290 = vector.broadcast %288 : vector<16x1xf32> to vector<16x27xf32>
    %291 = vector.broadcast %289 : vector<1x27xf32> to vector<16x27xf32>
    %292 = arith.mulf %290, %291 : vector<16x27xf32>
    %293 = arith.addf %287, %292 : vector<16x27xf32>
    %294 = vector.extract_strided_slice %5 {offsets = [0, 11], sizes = [16, 1], strides = [1, 1]} : vector<16x24xf32> to vector<16x1xf32>
    %295 = vector.extract_strided_slice %226 {offsets = [3, 1], sizes = [1, 27], strides = [1, 1]} : vector<8x29xf32> to vector<1x27xf32>
    %296 = vector.broadcast %294 : vector<16x1xf32> to vector<16x27xf32>
    %297 = vector.broadcast %295 : vector<1x27xf32> to vector<16x27xf32>
    %298 = arith.mulf %296, %297 : vector<16x27xf32>
    %299 = arith.addf %293, %298 : vector<16x27xf32>
    %300 = vector.extract_strided_slice %5 {offsets = [0, 12], sizes = [16, 1], strides = [1, 1]} : vector<16x24xf32> to vector<16x1xf32>
    %301 = vector.extract_strided_slice %226 {offsets = [4, 1], sizes = [1, 27], strides = [1, 1]} : vector<8x29xf32> to vector<1x27xf32>
    %302 = vector.broadcast %300 : vector<16x1xf32> to vector<16x27xf32>
    %303 = vector.broadcast %301 : vector<1x27xf32> to vector<16x27xf32>
    %304 = arith.mulf %302, %303 : vector<16x27xf32>
    %305 = arith.addf %299, %304 : vector<16x27xf32>
    %306 = vector.extract_strided_slice %5 {offsets = [0, 13], sizes = [16, 1], strides = [1, 1]} : vector<16x24xf32> to vector<16x1xf32>
    %307 = vector.extract_strided_slice %226 {offsets = [5, 1], sizes = [1, 27], strides = [1, 1]} : vector<8x29xf32> to vector<1x27xf32>
    %308 = vector.broadcast %306 : vector<16x1xf32> to vector<16x27xf32>
    %309 = vector.broadcast %307 : vector<1x27xf32> to vector<16x27xf32>
    %310 = arith.mulf %308, %309 : vector<16x27xf32>
    %311 = arith.addf %305, %310 : vector<16x27xf32>
    %312 = vector.extract_strided_slice %5 {offsets = [0, 14], sizes = [16, 1], strides = [1, 1]} : vector<16x24xf32> to vector<16x1xf32>
    %313 = vector.extract_strided_slice %226 {offsets = [6, 1], sizes = [1, 27], strides = [1, 1]} : vector<8x29xf32> to vector<1x27xf32>
    %314 = vector.broadcast %312 : vector<16x1xf32> to vector<16x27xf32>
    %315 = vector.broadcast %313 : vector<1x27xf32> to vector<16x27xf32>
    %316 = arith.mulf %314, %315 : vector<16x27xf32>
    %317 = arith.addf %311, %316 : vector<16x27xf32>
    %318 = vector.extract_strided_slice %5 {offsets = [0, 15], sizes = [16, 1], strides = [1, 1]} : vector<16x24xf32> to vector<16x1xf32>
    %319 = vector.extract_strided_slice %226 {offsets = [7, 1], sizes = [1, 27], strides = [1, 1]} : vector<8x29xf32> to vector<1x27xf32>
    %320 = vector.broadcast %318 : vector<16x1xf32> to vector<16x27xf32>
    %321 = vector.broadcast %319 : vector<1x27xf32> to vector<16x27xf32>
    %322 = arith.mulf %320, %321 : vector<16x27xf32>
    %323 = arith.addf %317, %322 : vector<16x27xf32>
    %324 = vector.extract_strided_slice %5 {offsets = [0, 16], sizes = [16, 1], strides = [1, 1]} : vector<16x24xf32> to vector<16x1xf32>
    %325 = vector.extract_strided_slice %226 {offsets = [0, 2], sizes = [1, 27], strides = [1, 1]} : vector<8x29xf32> to vector<1x27xf32>
    %326 = vector.broadcast %324 : vector<16x1xf32> to vector<16x27xf32>
    %327 = vector.broadcast %325 : vector<1x27xf32> to vector<16x27xf32>
    %328 = arith.mulf %326, %327 : vector<16x27xf32>
    %329 = arith.addf %323, %328 : vector<16x27xf32>
    %330 = vector.extract_strided_slice %5 {offsets = [0, 17], sizes = [16, 1], strides = [1, 1]} : vector<16x24xf32> to vector<16x1xf32>
    %331 = vector.extract_strided_slice %226 {offsets = [1, 2], sizes = [1, 27], strides = [1, 1]} : vector<8x29xf32> to vector<1x27xf32>
    %332 = vector.broadcast %330 : vector<16x1xf32> to vector<16x27xf32>
    %333 = vector.broadcast %331 : vector<1x27xf32> to vector<16x27xf32>
    %334 = arith.mulf %332, %333 : vector<16x27xf32>
    %335 = arith.addf %329, %334 : vector<16x27xf32>
    %336 = vector.extract_strided_slice %5 {offsets = [0, 18], sizes = [16, 1], strides = [1, 1]} : vector<16x24xf32> to vector<16x1xf32>
    %337 = vector.extract_strided_slice %226 {offsets = [2, 2], sizes = [1, 27], strides = [1, 1]} : vector<8x29xf32> to vector<1x27xf32>
    %338 = vector.broadcast %336 : vector<16x1xf32> to vector<16x27xf32>
    %339 = vector.broadcast %337 : vector<1x27xf32> to vector<16x27xf32>
    %340 = arith.mulf %338, %339 : vector<16x27xf32>
    %341 = arith.addf %335, %340 : vector<16x27xf32>
    %342 = vector.extract_strided_slice %5 {offsets = [0, 19], sizes = [16, 1], strides = [1, 1]} : vector<16x24xf32> to vector<16x1xf32>
    %343 = vector.extract_strided_slice %226 {offsets = [3, 2], sizes = [1, 27], strides = [1, 1]} : vector<8x29xf32> to vector<1x27xf32>
    %344 = vector.broadcast %342 : vector<16x1xf32> to vector<16x27xf32>
    %345 = vector.broadcast %343 : vector<1x27xf32> to vector<16x27xf32>
    %346 = arith.mulf %344, %345 : vector<16x27xf32>
    %347 = arith.addf %341, %346 : vector<16x27xf32>
    %348 = vector.extract_strided_slice %5 {offsets = [0, 20], sizes = [16, 1], strides = [1, 1]} : vector<16x24xf32> to vector<16x1xf32>
    %349 = vector.extract_strided_slice %226 {offsets = [4, 2], sizes = [1, 27], strides = [1, 1]} : vector<8x29xf32> to vector<1x27xf32>
    %350 = vector.broadcast %348 : vector<16x1xf32> to vector<16x27xf32>
    %351 = vector.broadcast %349 : vector<1x27xf32> to vector<16x27xf32>
    %352 = arith.mulf %350, %351 : vector<16x27xf32>
    %353 = arith.addf %347, %352 : vector<16x27xf32>
    %354 = vector.extract_strided_slice %5 {offsets = [0, 21], sizes = [16, 1], strides = [1, 1]} : vector<16x24xf32> to vector<16x1xf32>
    %355 = vector.extract_strided_slice %226 {offsets = [5, 2], sizes = [1, 27], strides = [1, 1]} : vector<8x29xf32> to vector<1x27xf32>
    %356 = vector.broadcast %354 : vector<16x1xf32> to vector<16x27xf32>
    %357 = vector.broadcast %355 : vector<1x27xf32> to vector<16x27xf32>
    %358 = arith.mulf %356, %357 : vector<16x27xf32>
    %359 = arith.addf %353, %358 : vector<16x27xf32>
    %360 = vector.extract_strided_slice %5 {offsets = [0, 22], sizes = [16, 1], strides = [1, 1]} : vector<16x24xf32> to vector<16x1xf32>
    %361 = vector.extract_strided_slice %226 {offsets = [6, 2], sizes = [1, 27], strides = [1, 1]} : vector<8x29xf32> to vector<1x27xf32>
    %362 = vector.broadcast %360 : vector<16x1xf32> to vector<16x27xf32>
    %363 = vector.broadcast %361 : vector<1x27xf32> to vector<16x27xf32>
    %364 = arith.mulf %362, %363 : vector<16x27xf32>
    %365 = arith.addf %359, %364 : vector<16x27xf32>
    %366 = vector.extract_strided_slice %5 {offsets = [0, 23], sizes = [16, 1], strides = [1, 1]} : vector<16x24xf32> to vector<16x1xf32>
    %367 = vector.extract_strided_slice %226 {offsets = [7, 2], sizes = [1, 27], strides = [1, 1]} : vector<8x29xf32> to vector<1x27xf32>
    %368 = vector.broadcast %366 : vector<16x1xf32> to vector<16x27xf32>
    %369 = vector.broadcast %367 : vector<1x27xf32> to vector<16x27xf32>
    %370 = arith.mulf %368, %369 : vector<16x27xf32>
    %371 = arith.addf %365, %370 : vector<16x27xf32>
    %372 = vector.broadcast %6 : vector<16x1xf32> to vector<16x27xf32>
    %373 = arith.mulf %371, %372 : vector<16x27xf32>
    %374 = vector.broadcast %7 : vector<16x1xf32> to vector<16x27xf32>
    %375 = arith.addf %373, %374 : vector<16x27xf32>
    %cst_11 = arith.constant 0.000000e+00 : f32
    %376 = vector.broadcast %cst_11 : f32 to vector<16x27xf32>
    %377 = arith.maximumf %375, %376 : vector<16x27xf32>
    %c0_12 = arith.constant 0 : index
    %c0_13 = arith.constant 0 : index
    %c0_14 = arith.constant 0 : index
    %378 = vector.load %arg4[%c0_12, %c0_13, %c0_14] : memref<4x16x27xf32, #tpu.memory_space<vmem>>, vector<1x16x27xf32>
    %379 = vector.shape_cast %378 : vector<1x16x27xf32> to vector<16x27xf32>
    %380 = vector.shape_cast %377 : vector<16x27xf32> to vector<1x16x27xf32>
    tpu.vector_store %arg4[%c0_12, %c0_13, %c0_14], %380 {strides = array<i32>} : memref<4x16x27xf32, #tpu.memory_space<vmem>>, vector<1x16x27xf32>,
    %c1 = arith.constant 1 : index
    %c0_15 = arith.constant 0 : index
    %c0_16 = arith.constant 0 : index
    %381 = vector.load %arg1[%c1, %c0_15, %c0_16] : memref<4x4x64xf32, #tpu.memory_space<vmem>>, vector<1x4x64xf32>
    %382 = vector.shape_cast %381 : vector<1x4x64xf32> to vector<4x64xf32>
    %cst_17 = arith.constant dense<0.000000e+00> : vector<4x32xf32>
    %383 = tpu.matmul %382, %16, %cst_17 {dimension_numbers = #tpu.dot_dimension_numbers<[1], [0], [0], [1], [0, 0, 1, 1], [], []>} : vector<4x64xf32>, vector<64x32xf32>, vector<4x32xf32> -> vector<4x32xf32>
    %cst_18 = arith.constant dense<0.000000e+00> : vector<4x32xf32>
    %384 = tpu.matmul %382, %23, %cst_18 {dimension_numbers = #tpu.dot_dimension_numbers<[1], [0], [0], [1], [0, 0, 1, 1], [], []>} : vector<4x64xf32>, vector<64x32xf32>, vector<4x32xf32> -> vector<4x32xf32>
    %cst_19 = arith.constant 0.000000e+00 : f32
    %385 = vector.broadcast %cst_19 : f32 to vector<8x29xf32>
    %386 = vector.extract_strided_slice %1 {offsets = [0, 0], sizes = [8, 1], strides = [1, 1]} : vector<8x32xf32> to vector<8x1xf32>
    %387 = vector.extract_strided_slice %383 {offsets = [0, 0], sizes = [1, 29], strides = [1, 1]} : vector<4x32xf32> to vector<1x29xf32>
    %388 = vector.broadcast %386 : vector<8x1xf32> to vector<8x29xf32>
    %389 = vector.broadcast %387 : vector<1x29xf32> to vector<8x29xf32>
    %390 = arith.mulf %388, %389 : vector<8x29xf32>
    %391 = arith.addf %385, %390 : vector<8x29xf32>
    %392 = vector.extract_strided_slice %1 {offsets = [0, 1], sizes = [8, 1], strides = [1, 1]} : vector<8x32xf32> to vector<8x1xf32>
    %393 = vector.extract_strided_slice %383 {offsets = [1, 0], sizes = [1, 29], strides = [1, 1]} : vector<4x32xf32> to vector<1x29xf32>
    %394 = vector.broadcast %392 : vector<8x1xf32> to vector<8x29xf32>
    %395 = vector.broadcast %393 : vector<1x29xf32> to vector<8x29xf32>
    %396 = arith.mulf %394, %395 : vector<8x29xf32>
    %397 = arith.addf %391, %396 : vector<8x29xf32>
    %398 = vector.extract_strided_slice %1 {offsets = [0, 2], sizes = [8, 1], strides = [1, 1]} : vector<8x32xf32> to vector<8x1xf32>
    %399 = vector.extract_strided_slice %383 {offsets = [2, 0], sizes = [1, 29], strides = [1, 1]} : vector<4x32xf32> to vector<1x29xf32>
    %400 = vector.broadcast %398 : vector<8x1xf32> to vector<8x29xf32>
    %401 = vector.broadcast %399 : vector<1x29xf32> to vector<8x29xf32>
    %402 = arith.mulf %400, %401 : vector<8x29xf32>
    %403 = arith.addf %397, %402 : vector<8x29xf32>
    %404 = vector.extract_strided_slice %1 {offsets = [0, 3], sizes = [8, 1], strides = [1, 1]} : vector<8x32xf32> to vector<8x1xf32>
    %405 = vector.extract_strided_slice %383 {offsets = [3, 0], sizes = [1, 29], strides = [1, 1]} : vector<4x32xf32> to vector<1x29xf32>
    %406 = vector.broadcast %404 : vector<8x1xf32> to vector<8x29xf32>
    %407 = vector.broadcast %405 : vector<1x29xf32> to vector<8x29xf32>
    %408 = arith.mulf %406, %407 : vector<8x29xf32>
    %409 = arith.addf %403, %408 : vector<8x29xf32>
    %410 = vector.extract_strided_slice %1 {offsets = [0, 4], sizes = [8, 1], strides = [1, 1]} : vector<8x32xf32> to vector<8x1xf32>
    %411 = vector.extract_strided_slice %384 {offsets = [0, 0], sizes = [1, 29], strides = [1, 1]} : vector<4x32xf32> to vector<1x29xf32>
    %412 = vector.broadcast %410 : vector<8x1xf32> to vector<8x29xf32>
    %413 = vector.broadcast %411 : vector<1x29xf32> to vector<8x29xf32>
    %414 = arith.mulf %412, %413 : vector<8x29xf32>
    %415 = arith.addf %409, %414 : vector<8x29xf32>
    %416 = vector.extract_strided_slice %1 {offsets = [0, 5], sizes = [8, 1], strides = [1, 1]} : vector<8x32xf32> to vector<8x1xf32>
    %417 = vector.extract_strided_slice %384 {offsets = [1, 0], sizes = [1, 29], strides = [1, 1]} : vector<4x32xf32> to vector<1x29xf32>
    %418 = vector.broadcast %416 : vector<8x1xf32> to vector<8x29xf32>
    %419 = vector.broadcast %417 : vector<1x29xf32> to vector<8x29xf32>
    %420 = arith.mulf %418, %419 : vector<8x29xf32>
    %421 = arith.addf %415, %420 : vector<8x29xf32>
    %422 = vector.extract_strided_slice %1 {offsets = [0, 6], sizes = [8, 1], strides = [1, 1]} : vector<8x32xf32> to vector<8x1xf32>
    %423 = vector.extract_strided_slice %384 {offsets = [2, 0], sizes = [1, 29], strides = [1, 1]} : vector<4x32xf32> to vector<1x29xf32>
    %424 = vector.broadcast %422 : vector<8x1xf32> to vector<8x29xf32>
    %425 = vector.broadcast %423 : vector<1x29xf32> to vector<8x29xf32>
    %426 = arith.mulf %424, %425 : vector<8x29xf32>
    %427 = arith.addf %421, %426 : vector<8x29xf32>
    %428 = vector.extract_strided_slice %1 {offsets = [0, 7], sizes = [8, 1], strides = [1, 1]} : vector<8x32xf32> to vector<8x1xf32>
    %429 = vector.extract_strided_slice %384 {offsets = [3, 0], sizes = [1, 29], strides = [1, 1]} : vector<4x32xf32> to vector<1x29xf32>
    %430 = vector.broadcast %428 : vector<8x1xf32> to vector<8x29xf32>
    %431 = vector.broadcast %429 : vector<1x29xf32> to vector<8x29xf32>
    %432 = arith.mulf %430, %431 : vector<8x29xf32>
    %433 = arith.addf %427, %432 : vector<8x29xf32>
    %434 = vector.extract_strided_slice %1 {offsets = [0, 8], sizes = [8, 1], strides = [1, 1]} : vector<8x32xf32> to vector<8x1xf32>
    %435 = vector.extract_strided_slice %383 {offsets = [0, 1], sizes = [1, 29], strides = [1, 1]} : vector<4x32xf32> to vector<1x29xf32>
    %436 = vector.broadcast %434 : vector<8x1xf32> to vector<8x29xf32>
    %437 = vector.broadcast %435 : vector<1x29xf32> to vector<8x29xf32>
    %438 = arith.mulf %436, %437 : vector<8x29xf32>
    %439 = arith.addf %433, %438 : vector<8x29xf32>
    %440 = vector.extract_strided_slice %1 {offsets = [0, 9], sizes = [8, 1], strides = [1, 1]} : vector<8x32xf32> to vector<8x1xf32>
    %441 = vector.extract_strided_slice %383 {offsets = [1, 1], sizes = [1, 29], strides = [1, 1]} : vector<4x32xf32> to vector<1x29xf32>
    %442 = vector.broadcast %440 : vector<8x1xf32> to vector<8x29xf32>
    %443 = vector.broadcast %441 : vector<1x29xf32> to vector<8x29xf32>
    %444 = arith.mulf %442, %443 : vector<8x29xf32>
    %445 = arith.addf %439, %444 : vector<8x29xf32>
    %446 = vector.extract_strided_slice %1 {offsets = [0, 10], sizes = [8, 1], strides = [1, 1]} : vector<8x32xf32> to vector<8x1xf32>
    %447 = vector.extract_strided_slice %383 {offsets = [2, 1], sizes = [1, 29], strides = [1, 1]} : vector<4x32xf32> to vector<1x29xf32>
    %448 = vector.broadcast %446 : vector<8x1xf32> to vector<8x29xf32>
    %449 = vector.broadcast %447 : vector<1x29xf32> to vector<8x29xf32>
    %450 = arith.mulf %448, %449 : vector<8x29xf32>
    %451 = arith.addf %445, %450 : vector<8x29xf32>
    %452 = vector.extract_strided_slice %1 {offsets = [0, 11], sizes = [8, 1], strides = [1, 1]} : vector<8x32xf32> to vector<8x1xf32>
    %453 = vector.extract_strided_slice %383 {offsets = [3, 1], sizes = [1, 29], strides = [1, 1]} : vector<4x32xf32> to vector<1x29xf32>
    %454 = vector.broadcast %452 : vector<8x1xf32> to vector<8x29xf32>
    %455 = vector.broadcast %453 : vector<1x29xf32> to vector<8x29xf32>
    %456 = arith.mulf %454, %455 : vector<8x29xf32>
    %457 = arith.addf %451, %456 : vector<8x29xf32>
    %458 = vector.extract_strided_slice %1 {offsets = [0, 12], sizes = [8, 1], strides = [1, 1]} : vector<8x32xf32> to vector<8x1xf32>
    %459 = vector.extract_strided_slice %384 {offsets = [0, 1], sizes = [1, 29], strides = [1, 1]} : vector<4x32xf32> to vector<1x29xf32>
    %460 = vector.broadcast %458 : vector<8x1xf32> to vector<8x29xf32>
    %461 = vector.broadcast %459 : vector<1x29xf32> to vector<8x29xf32>
    %462 = arith.mulf %460, %461 : vector<8x29xf32>
    %463 = arith.addf %457, %462 : vector<8x29xf32>
    %464 = vector.extract_strided_slice %1 {offsets = [0, 13], sizes = [8, 1], strides = [1, 1]} : vector<8x32xf32> to vector<8x1xf32>
    %465 = vector.extract_strided_slice %384 {offsets = [1, 1], sizes = [1, 29], strides = [1, 1]} : vector<4x32xf32> to vector<1x29xf32>
    %466 = vector.broadcast %464 : vector<8x1xf32> to vector<8x29xf32>
    %467 = vector.broadcast %465 : vector<1x29xf32> to vector<8x29xf32>
    %468 = arith.mulf %466, %467 : vector<8x29xf32>
    %469 = arith.addf %463, %468 : vector<8x29xf32>
    %470 = vector.extract_strided_slice %1 {offsets = [0, 14], sizes = [8, 1], strides = [1, 1]} : vector<8x32xf32> to vector<8x1xf32>
    %471 = vector.extract_strided_slice %384 {offsets = [2, 1], sizes = [1, 29], strides = [1, 1]} : vector<4x32xf32> to vector<1x29xf32>
    %472 = vector.broadcast %470 : vector<8x1xf32> to vector<8x29xf32>
    %473 = vector.broadcast %471 : vector<1x29xf32> to vector<8x29xf32>
    %474 = arith.mulf %472, %473 : vector<8x29xf32>
    %475 = arith.addf %469, %474 : vector<8x29xf32>
    %476 = vector.extract_strided_slice %1 {offsets = [0, 15], sizes = [8, 1], strides = [1, 1]} : vector<8x32xf32> to vector<8x1xf32>
    %477 = vector.extract_strided_slice %384 {offsets = [3, 1], sizes = [1, 29], strides = [1, 1]} : vector<4x32xf32> to vector<1x29xf32>
    %478 = vector.broadcast %476 : vector<8x1xf32> to vector<8x29xf32>
    %479 = vector.broadcast %477 : vector<1x29xf32> to vector<8x29xf32>
    %480 = arith.mulf %478, %479 : vector<8x29xf32>
    %481 = arith.addf %475, %480 : vector<8x29xf32>
    %482 = vector.extract_strided_slice %1 {offsets = [0, 16], sizes = [8, 1], strides = [1, 1]} : vector<8x32xf32> to vector<8x1xf32>
    %483 = vector.extract_strided_slice %383 {offsets = [0, 2], sizes = [1, 29], strides = [1, 1]} : vector<4x32xf32> to vector<1x29xf32>
    %484 = vector.broadcast %482 : vector<8x1xf32> to vector<8x29xf32>
    %485 = vector.broadcast %483 : vector<1x29xf32> to vector<8x29xf32>
    %486 = arith.mulf %484, %485 : vector<8x29xf32>
    %487 = arith.addf %481, %486 : vector<8x29xf32>
    %488 = vector.extract_strided_slice %1 {offsets = [0, 17], sizes = [8, 1], strides = [1, 1]} : vector<8x32xf32> to vector<8x1xf32>
    %489 = vector.extract_strided_slice %383 {offsets = [1, 2], sizes = [1, 29], strides = [1, 1]} : vector<4x32xf32> to vector<1x29xf32>
    %490 = vector.broadcast %488 : vector<8x1xf32> to vector<8x29xf32>
    %491 = vector.broadcast %489 : vector<1x29xf32> to vector<8x29xf32>
    %492 = arith.mulf %490, %491 : vector<8x29xf32>
    %493 = arith.addf %487, %492 : vector<8x29xf32>
    %494 = vector.extract_strided_slice %1 {offsets = [0, 18], sizes = [8, 1], strides = [1, 1]} : vector<8x32xf32> to vector<8x1xf32>
    %495 = vector.extract_strided_slice %383 {offsets = [2, 2], sizes = [1, 29], strides = [1, 1]} : vector<4x32xf32> to vector<1x29xf32>
    %496 = vector.broadcast %494 : vector<8x1xf32> to vector<8x29xf32>
    %497 = vector.broadcast %495 : vector<1x29xf32> to vector<8x29xf32>
    %498 = arith.mulf %496, %497 : vector<8x29xf32>
    %499 = arith.addf %493, %498 : vector<8x29xf32>
    %500 = vector.extract_strided_slice %1 {offsets = [0, 19], sizes = [8, 1], strides = [1, 1]} : vector<8x32xf32> to vector<8x1xf32>
    %501 = vector.extract_strided_slice %383 {offsets = [3, 2], sizes = [1, 29], strides = [1, 1]} : vector<4x32xf32> to vector<1x29xf32>
    %502 = vector.broadcast %500 : vector<8x1xf32> to vector<8x29xf32>
    %503 = vector.broadcast %501 : vector<1x29xf32> to vector<8x29xf32>
    %504 = arith.mulf %502, %503 : vector<8x29xf32>
    %505 = arith.addf %499, %504 : vector<8x29xf32>
    %506 = vector.extract_strided_slice %1 {offsets = [0, 20], sizes = [8, 1], strides = [1, 1]} : vector<8x32xf32> to vector<8x1xf32>
    %507 = vector.extract_strided_slice %384 {offsets = [0, 2], sizes = [1, 29], strides = [1, 1]} : vector<4x32xf32> to vector<1x29xf32>
    %508 = vector.broadcast %506 : vector<8x1xf32> to vector<8x29xf32>
    %509 = vector.broadcast %507 : vector<1x29xf32> to vector<8x29xf32>
    %510 = arith.mulf %508, %509 : vector<8x29xf32>
    %511 = arith.addf %505, %510 : vector<8x29xf32>
    %512 = vector.extract_strided_slice %1 {offsets = [0, 21], sizes = [8, 1], strides = [1, 1]} : vector<8x32xf32> to vector<8x1xf32>
    %513 = vector.extract_strided_slice %384 {offsets = [1, 2], sizes = [1, 29], strides = [1, 1]} : vector<4x32xf32> to vector<1x29xf32>
    %514 = vector.broadcast %512 : vector<8x1xf32> to vector<8x29xf32>
    %515 = vector.broadcast %513 : vector<1x29xf32> to vector<8x29xf32>
    %516 = arith.mulf %514, %515 : vector<8x29xf32>
    %517 = arith.addf %511, %516 : vector<8x29xf32>
    %518 = vector.extract_strided_slice %1 {offsets = [0, 22], sizes = [8, 1], strides = [1, 1]} : vector<8x32xf32> to vector<8x1xf32>
    %519 = vector.extract_strided_slice %384 {offsets = [2, 2], sizes = [1, 29], strides = [1, 1]} : vector<4x32xf32> to vector<1x29xf32>
    %520 = vector.broadcast %518 : vector<8x1xf32> to vector<8x29xf32>
    %521 = vector.broadcast %519 : vector<1x29xf32> to vector<8x29xf32>
    %522 = arith.mulf %520, %521 : vector<8x29xf32>
    %523 = arith.addf %517, %522 : vector<8x29xf32>
    %524 = vector.extract_strided_slice %1 {offsets = [0, 23], sizes = [8, 1], strides = [1, 1]} : vector<8x32xf32> to vector<8x1xf32>
    %525 = vector.extract_strided_slice %384 {offsets = [3, 2], sizes = [1, 29], strides = [1, 1]} : vector<4x32xf32> to vector<1x29xf32>
    %526 = vector.broadcast %524 : vector<8x1xf32> to vector<8x29xf32>
    %527 = vector.broadcast %525 : vector<1x29xf32> to vector<8x29xf32>
    %528 = arith.mulf %526, %527 : vector<8x29xf32>
    %529 = arith.addf %523, %528 : vector<8x29xf32>
    %530 = vector.extract_strided_slice %1 {offsets = [0, 24], sizes = [8, 1], strides = [1, 1]} : vector<8x32xf32> to vector<8x1xf32>
    %531 = vector.extract_strided_slice %383 {offsets = [0, 3], sizes = [1, 29], strides = [1, 1]} : vector<4x32xf32> to vector<1x29xf32>
    %532 = vector.broadcast %530 : vector<8x1xf32> to vector<8x29xf32>
    %533 = vector.broadcast %531 : vector<1x29xf32> to vector<8x29xf32>
    %534 = arith.mulf %532, %533 : vector<8x29xf32>
    %535 = arith.addf %529, %534 : vector<8x29xf32>
    %536 = vector.extract_strided_slice %1 {offsets = [0, 25], sizes = [8, 1], strides = [1, 1]} : vector<8x32xf32> to vector<8x1xf32>
    %537 = vector.extract_strided_slice %383 {offsets = [1, 3], sizes = [1, 29], strides = [1, 1]} : vector<4x32xf32> to vector<1x29xf32>
    %538 = vector.broadcast %536 : vector<8x1xf32> to vector<8x29xf32>
    %539 = vector.broadcast %537 : vector<1x29xf32> to vector<8x29xf32>
    %540 = arith.mulf %538, %539 : vector<8x29xf32>
    %541 = arith.addf %535, %540 : vector<8x29xf32>
    %542 = vector.extract_strided_slice %1 {offsets = [0, 26], sizes = [8, 1], strides = [1, 1]} : vector<8x32xf32> to vector<8x1xf32>
    %543 = vector.extract_strided_slice %383 {offsets = [2, 3], sizes = [1, 29], strides = [1, 1]} : vector<4x32xf32> to vector<1x29xf32>
    %544 = vector.broadcast %542 : vector<8x1xf32> to vector<8x29xf32>
    %545 = vector.broadcast %543 : vector<1x29xf32> to vector<8x29xf32>
    %546 = arith.mulf %544, %545 : vector<8x29xf32>
    %547 = arith.addf %541, %546 : vector<8x29xf32>
    %548 = vector.extract_strided_slice %1 {offsets = [0, 27], sizes = [8, 1], strides = [1, 1]} : vector<8x32xf32> to vector<8x1xf32>
    %549 = vector.extract_strided_slice %383 {offsets = [3, 3], sizes = [1, 29], strides = [1, 1]} : vector<4x32xf32> to vector<1x29xf32>
    %550 = vector.broadcast %548 : vector<8x1xf32> to vector<8x29xf32>
    %551 = vector.broadcast %549 : vector<1x29xf32> to vector<8x29xf32>
    %552 = arith.mulf %550, %551 : vector<8x29xf32>
    %553 = arith.addf %547, %552 : vector<8x29xf32>
    %554 = vector.extract_strided_slice %1 {offsets = [0, 28], sizes = [8, 1], strides = [1, 1]} : vector<8x32xf32> to vector<8x1xf32>
    %555 = vector.extract_strided_slice %384 {offsets = [0, 3], sizes = [1, 29], strides = [1, 1]} : vector<4x32xf32> to vector<1x29xf32>
    %556 = vector.broadcast %554 : vector<8x1xf32> to vector<8x29xf32>
    %557 = vector.broadcast %555 : vector<1x29xf32> to vector<8x29xf32>
    %558 = arith.mulf %556, %557 : vector<8x29xf32>
    %559 = arith.addf %553, %558 : vector<8x29xf32>
    %560 = vector.extract_strided_slice %1 {offsets = [0, 29], sizes = [8, 1], strides = [1, 1]} : vector<8x32xf32> to vector<8x1xf32>
    %561 = vector.extract_strided_slice %384 {offsets = [1, 3], sizes = [1, 29], strides = [1, 1]} : vector<4x32xf32> to vector<1x29xf32>
    %562 = vector.broadcast %560 : vector<8x1xf32> to vector<8x29xf32>
    %563 = vector.broadcast %561 : vector<1x29xf32> to vector<8x29xf32>
    %564 = arith.mulf %562, %563 : vector<8x29xf32>
    %565 = arith.addf %559, %564 : vector<8x29xf32>
    %566 = vector.extract_strided_slice %1 {offsets = [0, 30], sizes = [8, 1], strides = [1, 1]} : vector<8x32xf32> to vector<8x1xf32>
    %567 = vector.extract_strided_slice %384 {offsets = [2, 3], sizes = [1, 29], strides = [1, 1]} : vector<4x32xf32> to vector<1x29xf32>
    %568 = vector.broadcast %566 : vector<8x1xf32> to vector<8x29xf32>
    %569 = vector.broadcast %567 : vector<1x29xf32> to vector<8x29xf32>
    %570 = arith.mulf %568, %569 : vector<8x29xf32>
    %571 = arith.addf %565, %570 : vector<8x29xf32>
    %572 = vector.extract_strided_slice %1 {offsets = [0, 31], sizes = [8, 1], strides = [1, 1]} : vector<8x32xf32> to vector<8x1xf32>
    %573 = vector.extract_strided_slice %384 {offsets = [3, 3], sizes = [1, 29], strides = [1, 1]} : vector<4x32xf32> to vector<1x29xf32>
    %574 = vector.broadcast %572 : vector<8x1xf32> to vector<8x29xf32>
    %575 = vector.broadcast %573 : vector<1x29xf32> to vector<8x29xf32>
    %576 = arith.mulf %574, %575 : vector<8x29xf32>
    %577 = arith.addf %571, %576 : vector<8x29xf32>
    %578 = vector.broadcast %2 : vector<8x1xf32> to vector<8x29xf32>
    %579 = arith.mulf %577, %578 : vector<8x29xf32>
    %580 = vector.broadcast %3 : vector<8x1xf32> to vector<8x29xf32>
    %581 = arith.addf %579, %580 : vector<8x29xf32>
    %cst_20 = arith.constant 0.000000e+00 : f32
    %582 = vector.broadcast %cst_20 : f32 to vector<8x29xf32>
    %583 = arith.maximumf %581, %582 : vector<8x29xf32>
    %cst_21 = arith.constant 0.000000e+00 : f32
    %584 = vector.broadcast %cst_21 : f32 to vector<16x27xf32>
    %585 = vector.extract_strided_slice %5 {offsets = [0, 0], sizes = [16, 1], strides = [1, 1]} : vector<16x24xf32> to vector<16x1xf32>
    %586 = vector.extract_strided_slice %583 {offsets = [0, 0], sizes = [1, 27], strides = [1, 1]} : vector<8x29xf32> to vector<1x27xf32>
    %587 = vector.broadcast %585 : vector<16x1xf32> to vector<16x27xf32>
    %588 = vector.broadcast %586 : vector<1x27xf32> to vector<16x27xf32>
    %589 = arith.mulf %587, %588 : vector<16x27xf32>
    %590 = arith.addf %584, %589 : vector<16x27xf32>
    %591 = vector.extract_strided_slice %5 {offsets = [0, 1], sizes = [16, 1], strides = [1, 1]} : vector<16x24xf32> to vector<16x1xf32>
    %592 = vector.extract_strided_slice %583 {offsets = [1, 0], sizes = [1, 27], strides = [1, 1]} : vector<8x29xf32> to vector<1x27xf32>
    %593 = vector.broadcast %591 : vector<16x1xf32> to vector<16x27xf32>
    %594 = vector.broadcast %592 : vector<1x27xf32> to vector<16x27xf32>
    %595 = arith.mulf %593, %594 : vector<16x27xf32>
    %596 = arith.addf %590, %595 : vector<16x27xf32>
    %597 = vector.extract_strided_slice %5 {offsets = [0, 2], sizes = [16, 1], strides = [1, 1]} : vector<16x24xf32> to vector<16x1xf32>
    %598 = vector.extract_strided_slice %583 {offsets = [2, 0], sizes = [1, 27], strides = [1, 1]} : vector<8x29xf32> to vector<1x27xf32>
    %599 = vector.broadcast %597 : vector<16x1xf32> to vector<16x27xf32>
    %600 = vector.broadcast %598 : vector<1x27xf32> to vector<16x27xf32>
    %601 = arith.mulf %599, %600 : vector<16x27xf32>
    %602 = arith.addf %596, %601 : vector<16x27xf32>
    %603 = vector.extract_strided_slice %5 {offsets = [0, 3], sizes = [16, 1], strides = [1, 1]} : vector<16x24xf32> to vector<16x1xf32>
    %604 = vector.extract_strided_slice %583 {offsets = [3, 0], sizes = [1, 27], strides = [1, 1]} : vector<8x29xf32> to vector<1x27xf32>
    %605 = vector.broadcast %603 : vector<16x1xf32> to vector<16x27xf32>
    %606 = vector.broadcast %604 : vector<1x27xf32> to vector<16x27xf32>
    %607 = arith.mulf %605, %606 : vector<16x27xf32>
    %608 = arith.addf %602, %607 : vector<16x27xf32>
    %609 = vector.extract_strided_slice %5 {offsets = [0, 4], sizes = [16, 1], strides = [1, 1]} : vector<16x24xf32> to vector<16x1xf32>
    %610 = vector.extract_strided_slice %583 {offsets = [4, 0], sizes = [1, 27], strides = [1, 1]} : vector<8x29xf32> to vector<1x27xf32>
    %611 = vector.broadcast %609 : vector<16x1xf32> to vector<16x27xf32>
    %612 = vector.broadcast %610 : vector<1x27xf32> to vector<16x27xf32>
    %613 = arith.mulf %611, %612 : vector<16x27xf32>
    %614 = arith.addf %608, %613 : vector<16x27xf32>
    %615 = vector.extract_strided_slice %5 {offsets = [0, 5], sizes = [16, 1], strides = [1, 1]} : vector<16x24xf32> to vector<16x1xf32>
    %616 = vector.extract_strided_slice %583 {offsets = [5, 0], sizes = [1, 27], strides = [1, 1]} : vector<8x29xf32> to vector<1x27xf32>
    %617 = vector.broadcast %615 : vector<16x1xf32> to vector<16x27xf32>
    %618 = vector.broadcast %616 : vector<1x27xf32> to vector<16x27xf32>
    %619 = arith.mulf %617, %618 : vector<16x27xf32>
    %620 = arith.addf %614, %619 : vector<16x27xf32>
    %621 = vector.extract_strided_slice %5 {offsets = [0, 6], sizes = [16, 1], strides = [1, 1]} : vector<16x24xf32> to vector<16x1xf32>
    %622 = vector.extract_strided_slice %583 {offsets = [6, 0], sizes = [1, 27], strides = [1, 1]} : vector<8x29xf32> to vector<1x27xf32>
    %623 = vector.broadcast %621 : vector<16x1xf32> to vector<16x27xf32>
    %624 = vector.broadcast %622 : vector<1x27xf32> to vector<16x27xf32>
    %625 = arith.mulf %623, %624 : vector<16x27xf32>
    %626 = arith.addf %620, %625 : vector<16x27xf32>
    %627 = vector.extract_strided_slice %5 {offsets = [0, 7], sizes = [16, 1], strides = [1, 1]} : vector<16x24xf32> to vector<16x1xf32>
    %628 = vector.extract_strided_slice %583 {offsets = [7, 0], sizes = [1, 27], strides = [1, 1]} : vector<8x29xf32> to vector<1x27xf32>
    %629 = vector.broadcast %627 : vector<16x1xf32> to vector<16x27xf32>
    %630 = vector.broadcast %628 : vector<1x27xf32> to vector<16x27xf32>
    %631 = arith.mulf %629, %630 : vector<16x27xf32>
    %632 = arith.addf %626, %631 : vector<16x27xf32>
    %633 = vector.extract_strided_slice %5 {offsets = [0, 8], sizes = [16, 1], strides = [1, 1]} : vector<16x24xf32> to vector<16x1xf32>
    %634 = vector.extract_strided_slice %583 {offsets = [0, 1], sizes = [1, 27], strides = [1, 1]} : vector<8x29xf32> to vector<1x27xf32>
    %635 = vector.broadcast %633 : vector<16x1xf32> to vector<16x27xf32>
    %636 = vector.broadcast %634 : vector<1x27xf32> to vector<16x27xf32>
    %637 = arith.mulf %635, %636 : vector<16x27xf32>
    %638 = arith.addf %632, %637 : vector<16x27xf32>
    %639 = vector.extract_strided_slice %5 {offsets = [0, 9], sizes = [16, 1], strides = [1, 1]} : vector<16x24xf32> to vector<16x1xf32>
    %640 = vector.extract_strided_slice %583 {offsets = [1, 1], sizes = [1, 27], strides = [1, 1]} : vector<8x29xf32> to vector<1x27xf32>
    %641 = vector.broadcast %639 : vector<16x1xf32> to vector<16x27xf32>
    %642 = vector.broadcast %640 : vector<1x27xf32> to vector<16x27xf32>
    %643 = arith.mulf %641, %642 : vector<16x27xf32>
    %644 = arith.addf %638, %643 : vector<16x27xf32>
    %645 = vector.extract_strided_slice %5 {offsets = [0, 10], sizes = [16, 1], strides = [1, 1]} : vector<16x24xf32> to vector<16x1xf32>
    %646 = vector.extract_strided_slice %583 {offsets = [2, 1], sizes = [1, 27], strides = [1, 1]} : vector<8x29xf32> to vector<1x27xf32>
    %647 = vector.broadcast %645 : vector<16x1xf32> to vector<16x27xf32>
    %648 = vector.broadcast %646 : vector<1x27xf32> to vector<16x27xf32>
    %649 = arith.mulf %647, %648 : vector<16x27xf32>
    %650 = arith.addf %644, %649 : vector<16x27xf32>
    %651 = vector.extract_strided_slice %5 {offsets = [0, 11], sizes = [16, 1], strides = [1, 1]} : vector<16x24xf32> to vector<16x1xf32>
    %652 = vector.extract_strided_slice %583 {offsets = [3, 1], sizes = [1, 27], strides = [1, 1]} : vector<8x29xf32> to vector<1x27xf32>
    %653 = vector.broadcast %651 : vector<16x1xf32> to vector<16x27xf32>
    %654 = vector.broadcast %652 : vector<1x27xf32> to vector<16x27xf32>
    %655 = arith.mulf %653, %654 : vector<16x27xf32>
    %656 = arith.addf %650, %655 : vector<16x27xf32>
    %657 = vector.extract_strided_slice %5 {offsets = [0, 12], sizes = [16, 1], strides = [1, 1]} : vector<16x24xf32> to vector<16x1xf32>
    %658 = vector.extract_strided_slice %583 {offsets = [4, 1], sizes = [1, 27], strides = [1, 1]} : vector<8x29xf32> to vector<1x27xf32>
    %659 = vector.broadcast %657 : vector<16x1xf32> to vector<16x27xf32>
    %660 = vector.broadcast %658 : vector<1x27xf32> to vector<16x27xf32>
    %661 = arith.mulf %659, %660 : vector<16x27xf32>
    %662 = arith.addf %656, %661 : vector<16x27xf32>
    %663 = vector.extract_strided_slice %5 {offsets = [0, 13], sizes = [16, 1], strides = [1, 1]} : vector<16x24xf32> to vector<16x1xf32>
    %664 = vector.extract_strided_slice %583 {offsets = [5, 1], sizes = [1, 27], strides = [1, 1]} : vector<8x29xf32> to vector<1x27xf32>
    %665 = vector.broadcast %663 : vector<16x1xf32> to vector<16x27xf32>
    %666 = vector.broadcast %664 : vector<1x27xf32> to vector<16x27xf32>
    %667 = arith.mulf %665, %666 : vector<16x27xf32>
    %668 = arith.addf %662, %667 : vector<16x27xf32>
    %669 = vector.extract_strided_slice %5 {offsets = [0, 14], sizes = [16, 1], strides = [1, 1]} : vector<16x24xf32> to vector<16x1xf32>
    %670 = vector.extract_strided_slice %583 {offsets = [6, 1], sizes = [1, 27], strides = [1, 1]} : vector<8x29xf32> to vector<1x27xf32>
    %671 = vector.broadcast %669 : vector<16x1xf32> to vector<16x27xf32>
    %672 = vector.broadcast %670 : vector<1x27xf32> to vector<16x27xf32>
    %673 = arith.mulf %671, %672 : vector<16x27xf32>
    %674 = arith.addf %668, %673 : vector<16x27xf32>
    %675 = vector.extract_strided_slice %5 {offsets = [0, 15], sizes = [16, 1], strides = [1, 1]} : vector<16x24xf32> to vector<16x1xf32>
    %676 = vector.extract_strided_slice %583 {offsets = [7, 1], sizes = [1, 27], strides = [1, 1]} : vector<8x29xf32> to vector<1x27xf32>
    %677 = vector.broadcast %675 : vector<16x1xf32> to vector<16x27xf32>
    %678 = vector.broadcast %676 : vector<1x27xf32> to vector<16x27xf32>
    %679 = arith.mulf %677, %678 : vector<16x27xf32>
    %680 = arith.addf %674, %679 : vector<16x27xf32>
    %681 = vector.extract_strided_slice %5 {offsets = [0, 16], sizes = [16, 1], strides = [1, 1]} : vector<16x24xf32> to vector<16x1xf32>
    %682 = vector.extract_strided_slice %583 {offsets = [0, 2], sizes = [1, 27], strides = [1, 1]} : vector<8x29xf32> to vector<1x27xf32>
    %683 = vector.broadcast %681 : vector<16x1xf32> to vector<16x27xf32>
    %684 = vector.broadcast %682 : vector<1x27xf32> to vector<16x27xf32>
    %685 = arith.mulf %683, %684 : vector<16x27xf32>
    %686 = arith.addf %680, %685 : vector<16x27xf32>
    %687 = vector.extract_strided_slice %5 {offsets = [0, 17], sizes = [16, 1], strides = [1, 1]} : vector<16x24xf32> to vector<16x1xf32>
    %688 = vector.extract_strided_slice %583 {offsets = [1, 2], sizes = [1, 27], strides = [1, 1]} : vector<8x29xf32> to vector<1x27xf32>
    %689 = vector.broadcast %687 : vector<16x1xf32> to vector<16x27xf32>
    %690 = vector.broadcast %688 : vector<1x27xf32> to vector<16x27xf32>
    %691 = arith.mulf %689, %690 : vector<16x27xf32>
    %692 = arith.addf %686, %691 : vector<16x27xf32>
    %693 = vector.extract_strided_slice %5 {offsets = [0, 18], sizes = [16, 1], strides = [1, 1]} : vector<16x24xf32> to vector<16x1xf32>
    %694 = vector.extract_strided_slice %583 {offsets = [2, 2], sizes = [1, 27], strides = [1, 1]} : vector<8x29xf32> to vector<1x27xf32>
    %695 = vector.broadcast %693 : vector<16x1xf32> to vector<16x27xf32>
    %696 = vector.broadcast %694 : vector<1x27xf32> to vector<16x27xf32>
    %697 = arith.mulf %695, %696 : vector<16x27xf32>
    %698 = arith.addf %692, %697 : vector<16x27xf32>
    %699 = vector.extract_strided_slice %5 {offsets = [0, 19], sizes = [16, 1], strides = [1, 1]} : vector<16x24xf32> to vector<16x1xf32>
    %700 = vector.extract_strided_slice %583 {offsets = [3, 2], sizes = [1, 27], strides = [1, 1]} : vector<8x29xf32> to vector<1x27xf32>
    %701 = vector.broadcast %699 : vector<16x1xf32> to vector<16x27xf32>
    %702 = vector.broadcast %700 : vector<1x27xf32> to vector<16x27xf32>
    %703 = arith.mulf %701, %702 : vector<16x27xf32>
    %704 = arith.addf %698, %703 : vector<16x27xf32>
    %705 = vector.extract_strided_slice %5 {offsets = [0, 20], sizes = [16, 1], strides = [1, 1]} : vector<16x24xf32> to vector<16x1xf32>
    %706 = vector.extract_strided_slice %583 {offsets = [4, 2], sizes = [1, 27], strides = [1, 1]} : vector<8x29xf32> to vector<1x27xf32>
    %707 = vector.broadcast %705 : vector<16x1xf32> to vector<16x27xf32>
    %708 = vector.broadcast %706 : vector<1x27xf32> to vector<16x27xf32>
    %709 = arith.mulf %707, %708 : vector<16x27xf32>
    %710 = arith.addf %704, %709 : vector<16x27xf32>
    %711 = vector.extract_strided_slice %5 {offsets = [0, 21], sizes = [16, 1], strides = [1, 1]} : vector<16x24xf32> to vector<16x1xf32>
    %712 = vector.extract_strided_slice %583 {offsets = [5, 2], sizes = [1, 27], strides = [1, 1]} : vector<8x29xf32> to vector<1x27xf32>
    %713 = vector.broadcast %711 : vector<16x1xf32> to vector<16x27xf32>
    %714 = vector.broadcast %712 : vector<1x27xf32> to vector<16x27xf32>
    %715 = arith.mulf %713, %714 : vector<16x27xf32>
    %716 = arith.addf %710, %715 : vector<16x27xf32>
    %717 = vector.extract_strided_slice %5 {offsets = [0, 22], sizes = [16, 1], strides = [1, 1]} : vector<16x24xf32> to vector<16x1xf32>
    %718 = vector.extract_strided_slice %583 {offsets = [6, 2], sizes = [1, 27], strides = [1, 1]} : vector<8x29xf32> to vector<1x27xf32>
    %719 = vector.broadcast %717 : vector<16x1xf32> to vector<16x27xf32>
    %720 = vector.broadcast %718 : vector<1x27xf32> to vector<16x27xf32>
    %721 = arith.mulf %719, %720 : vector<16x27xf32>
    %722 = arith.addf %716, %721 : vector<16x27xf32>
    %723 = vector.extract_strided_slice %5 {offsets = [0, 23], sizes = [16, 1], strides = [1, 1]} : vector<16x24xf32> to vector<16x1xf32>
    %724 = vector.extract_strided_slice %583 {offsets = [7, 2], sizes = [1, 27], strides = [1, 1]} : vector<8x29xf32> to vector<1x27xf32>
    %725 = vector.broadcast %723 : vector<16x1xf32> to vector<16x27xf32>
    %726 = vector.broadcast %724 : vector<1x27xf32> to vector<16x27xf32>
    %727 = arith.mulf %725, %726 : vector<16x27xf32>
    %728 = arith.addf %722, %727 : vector<16x27xf32>
    %729 = vector.broadcast %6 : vector<16x1xf32> to vector<16x27xf32>
    %730 = arith.mulf %728, %729 : vector<16x27xf32>
    %731 = vector.broadcast %7 : vector<16x1xf32> to vector<16x27xf32>
    %732 = arith.addf %730, %731 : vector<16x27xf32>
    %cst_22 = arith.constant 0.000000e+00 : f32
    %733 = vector.broadcast %cst_22 : f32 to vector<16x27xf32>
    %734 = arith.maximumf %732, %733 : vector<16x27xf32>
    %c1_23 = arith.constant 1 : index
    %c0_24 = arith.constant 0 : index
    %c0_25 = arith.constant 0 : index
    %735 = vector.load %arg4[%c1_23, %c0_24, %c0_25] : memref<4x16x27xf32, #tpu.memory_space<vmem>>, vector<1x16x27xf32>
    %736 = vector.shape_cast %735 : vector<1x16x27xf32> to vector<16x27xf32>
    %737 = vector.shape_cast %734 : vector<16x27xf32> to vector<1x16x27xf32>
    tpu.vector_store %arg4[%c1_23, %c0_24, %c0_25], %737 {strides = array<i32>} : memref<4x16x27xf32, #tpu.memory_space<vmem>>, vector<1x16x27xf32>,
    %c2 = arith.constant 2 : index
    %c0_26 = arith.constant 0 : index
    %c0_27 = arith.constant 0 : index
    %738 = vector.load %arg1[%c2, %c0_26, %c0_27] : memref<4x4x64xf32, #tpu.memory_space<vmem>>, vector<1x4x64xf32>
    %739 = vector.shape_cast %738 : vector<1x4x64xf32> to vector<4x64xf32>
    %cst_28 = arith.constant dense<0.000000e+00> : vector<4x32xf32>
    %740 = tpu.matmul %739, %16, %cst_28 {dimension_numbers = #tpu.dot_dimension_numbers<[1], [0], [0], [1], [0, 0, 1, 1], [], []>} : vector<4x64xf32>, vector<64x32xf32>, vector<4x32xf32> -> vector<4x32xf32>
    %cst_29 = arith.constant dense<0.000000e+00> : vector<4x32xf32>
    %741 = tpu.matmul %739, %23, %cst_29 {dimension_numbers = #tpu.dot_dimension_numbers<[1], [0], [0], [1], [0, 0, 1, 1], [], []>} : vector<4x64xf32>, vector<64x32xf32>, vector<4x32xf32> -> vector<4x32xf32>
    %cst_30 = arith.constant 0.000000e+00 : f32
    %742 = vector.broadcast %cst_30 : f32 to vector<8x29xf32>
    %743 = vector.extract_strided_slice %1 {offsets = [0, 0], sizes = [8, 1], strides = [1, 1]} : vector<8x32xf32> to vector<8x1xf32>
    %744 = vector.extract_strided_slice %740 {offsets = [0, 0], sizes = [1, 29], strides = [1, 1]} : vector<4x32xf32> to vector<1x29xf32>
    %745 = vector.broadcast %743 : vector<8x1xf32> to vector<8x29xf32>
    %746 = vector.broadcast %744 : vector<1x29xf32> to vector<8x29xf32>
    %747 = arith.mulf %745, %746 : vector<8x29xf32>
    %748 = arith.addf %742, %747 : vector<8x29xf32>
    %749 = vector.extract_strided_slice %1 {offsets = [0, 1], sizes = [8, 1], strides = [1, 1]} : vector<8x32xf32> to vector<8x1xf32>
    %750 = vector.extract_strided_slice %740 {offsets = [1, 0], sizes = [1, 29], strides = [1, 1]} : vector<4x32xf32> to vector<1x29xf32>
    %751 = vector.broadcast %749 : vector<8x1xf32> to vector<8x29xf32>
    %752 = vector.broadcast %750 : vector<1x29xf32> to vector<8x29xf32>
    %753 = arith.mulf %751, %752 : vector<8x29xf32>
    %754 = arith.addf %748, %753 : vector<8x29xf32>
    %755 = vector.extract_strided_slice %1 {offsets = [0, 2], sizes = [8, 1], strides = [1, 1]} : vector<8x32xf32> to vector<8x1xf32>
    %756 = vector.extract_strided_slice %740 {offsets = [2, 0], sizes = [1, 29], strides = [1, 1]} : vector<4x32xf32> to vector<1x29xf32>
    %757 = vector.broadcast %755 : vector<8x1xf32> to vector<8x29xf32>
    %758 = vector.broadcast %756 : vector<1x29xf32> to vector<8x29xf32>
    %759 = arith.mulf %757, %758 : vector<8x29xf32>
    %760 = arith.addf %754, %759 : vector<8x29xf32>
    %761 = vector.extract_strided_slice %1 {offsets = [0, 3], sizes = [8, 1], strides = [1, 1]} : vector<8x32xf32> to vector<8x1xf32>
    %762 = vector.extract_strided_slice %740 {offsets = [3, 0], sizes = [1, 29], strides = [1, 1]} : vector<4x32xf32> to vector<1x29xf32>
    %763 = vector.broadcast %761 : vector<8x1xf32> to vector<8x29xf32>
    %764 = vector.broadcast %762 : vector<1x29xf32> to vector<8x29xf32>
    %765 = arith.mulf %763, %764 : vector<8x29xf32>
    %766 = arith.addf %760, %765 : vector<8x29xf32>
    %767 = vector.extract_strided_slice %1 {offsets = [0, 4], sizes = [8, 1], strides = [1, 1]} : vector<8x32xf32> to vector<8x1xf32>
    %768 = vector.extract_strided_slice %741 {offsets = [0, 0], sizes = [1, 29], strides = [1, 1]} : vector<4x32xf32> to vector<1x29xf32>
    %769 = vector.broadcast %767 : vector<8x1xf32> to vector<8x29xf32>
    %770 = vector.broadcast %768 : vector<1x29xf32> to vector<8x29xf32>
    %771 = arith.mulf %769, %770 : vector<8x29xf32>
    %772 = arith.addf %766, %771 : vector<8x29xf32>
    %773 = vector.extract_strided_slice %1 {offsets = [0, 5], sizes = [8, 1], strides = [1, 1]} : vector<8x32xf32> to vector<8x1xf32>
    %774 = vector.extract_strided_slice %741 {offsets = [1, 0], sizes = [1, 29], strides = [1, 1]} : vector<4x32xf32> to vector<1x29xf32>
    %775 = vector.broadcast %773 : vector<8x1xf32> to vector<8x29xf32>
    %776 = vector.broadcast %774 : vector<1x29xf32> to vector<8x29xf32>
    %777 = arith.mulf %775, %776 : vector<8x29xf32>
    %778 = arith.addf %772, %777 : vector<8x29xf32>
    %779 = vector.extract_strided_slice %1 {offsets = [0, 6], sizes = [8, 1], strides = [1, 1]} : vector<8x32xf32> to vector<8x1xf32>
    %780 = vector.extract_strided_slice %741 {offsets = [2, 0], sizes = [1, 29], strides = [1, 1]} : vector<4x32xf32> to vector<1x29xf32>
    %781 = vector.broadcast %779 : vector<8x1xf32> to vector<8x29xf32>
    %782 = vector.broadcast %780 : vector<1x29xf32> to vector<8x29xf32>
    %783 = arith.mulf %781, %782 : vector<8x29xf32>
    %784 = arith.addf %778, %783 : vector<8x29xf32>
    %785 = vector.extract_strided_slice %1 {offsets = [0, 7], sizes = [8, 1], strides = [1, 1]} : vector<8x32xf32> to vector<8x1xf32>
    %786 = vector.extract_strided_slice %741 {offsets = [3, 0], sizes = [1, 29], strides = [1, 1]} : vector<4x32xf32> to vector<1x29xf32>
    %787 = vector.broadcast %785 : vector<8x1xf32> to vector<8x29xf32>
    %788 = vector.broadcast %786 : vector<1x29xf32> to vector<8x29xf32>
    %789 = arith.mulf %787, %788 : vector<8x29xf32>
    %790 = arith.addf %784, %789 : vector<8x29xf32>
    %791 = vector.extract_strided_slice %1 {offsets = [0, 8], sizes = [8, 1], strides = [1, 1]} : vector<8x32xf32> to vector<8x1xf32>
    %792 = vector.extract_strided_slice %740 {offsets = [0, 1], sizes = [1, 29], strides = [1, 1]} : vector<4x32xf32> to vector<1x29xf32>
    %793 = vector.broadcast %791 : vector<8x1xf32> to vector<8x29xf32>
    %794 = vector.broadcast %792 : vector<1x29xf32> to vector<8x29xf32>
    %795 = arith.mulf %793, %794 : vector<8x29xf32>
    %796 = arith.addf %790, %795 : vector<8x29xf32>
    %797 = vector.extract_strided_slice %1 {offsets = [0, 9], sizes = [8, 1], strides = [1, 1]} : vector<8x32xf32> to vector<8x1xf32>
    %798 = vector.extract_strided_slice %740 {offsets = [1, 1], sizes = [1, 29], strides = [1, 1]} : vector<4x32xf32> to vector<1x29xf32>
    %799 = vector.broadcast %797 : vector<8x1xf32> to vector<8x29xf32>
    %800 = vector.broadcast %798 : vector<1x29xf32> to vector<8x29xf32>
    %801 = arith.mulf %799, %800 : vector<8x29xf32>
    %802 = arith.addf %796, %801 : vector<8x29xf32>
    %803 = vector.extract_strided_slice %1 {offsets = [0, 10], sizes = [8, 1], strides = [1, 1]} : vector<8x32xf32> to vector<8x1xf32>
    %804 = vector.extract_strided_slice %740 {offsets = [2, 1], sizes = [1, 29], strides = [1, 1]} : vector<4x32xf32> to vector<1x29xf32>
    %805 = vector.broadcast %803 : vector<8x1xf32> to vector<8x29xf32>
    %806 = vector.broadcast %804 : vector<1x29xf32> to vector<8x29xf32>
    %807 = arith.mulf %805, %806 : vector<8x29xf32>
    %808 = arith.addf %802, %807 : vector<8x29xf32>
    %809 = vector.extract_strided_slice %1 {offsets = [0, 11], sizes = [8, 1], strides = [1, 1]} : vector<8x32xf32> to vector<8x1xf32>
    %810 = vector.extract_strided_slice %740 {offsets = [3, 1], sizes = [1, 29], strides = [1, 1]} : vector<4x32xf32> to vector<1x29xf32>
    %811 = vector.broadcast %809 : vector<8x1xf32> to vector<8x29xf32>
    %812 = vector.broadcast %810 : vector<1x29xf32> to vector<8x29xf32>
    %813 = arith.mulf %811, %812 : vector<8x29xf32>
    %814 = arith.addf %808, %813 : vector<8x29xf32>
    %815 = vector.extract_strided_slice %1 {offsets = [0, 12], sizes = [8, 1], strides = [1, 1]} : vector<8x32xf32> to vector<8x1xf32>
    %816 = vector.extract_strided_slice %741 {offsets = [0, 1], sizes = [1, 29], strides = [1, 1]} : vector<4x32xf32> to vector<1x29xf32>
    %817 = vector.broadcast %815 : vector<8x1xf32> to vector<8x29xf32>
    %818 = vector.broadcast %816 : vector<1x29xf32> to vector<8x29xf32>
    %819 = arith.mulf %817, %818 : vector<8x29xf32>
    %820 = arith.addf %814, %819 : vector<8x29xf32>
    %821 = vector.extract_strided_slice %1 {offsets = [0, 13], sizes = [8, 1], strides = [1, 1]} : vector<8x32xf32> to vector<8x1xf32>
    %822 = vector.extract_strided_slice %741 {offsets = [1, 1], sizes = [1, 29], strides = [1, 1]} : vector<4x32xf32> to vector<1x29xf32>
    %823 = vector.broadcast %821 : vector<8x1xf32> to vector<8x29xf32>
    %824 = vector.broadcast %822 : vector<1x29xf32> to vector<8x29xf32>
    %825 = arith.mulf %823, %824 : vector<8x29xf32>
    %826 = arith.addf %820, %825 : vector<8x29xf32>
    %827 = vector.extract_strided_slice %1 {offsets = [0, 14], sizes = [8, 1], strides = [1, 1]} : vector<8x32xf32> to vector<8x1xf32>
    %828 = vector.extract_strided_slice %741 {offsets = [2, 1], sizes = [1, 29], strides = [1, 1]} : vector<4x32xf32> to vector<1x29xf32>
    %829 = vector.broadcast %827 : vector<8x1xf32> to vector<8x29xf32>
    %830 = vector.broadcast %828 : vector<1x29xf32> to vector<8x29xf32>
    %831 = arith.mulf %829, %830 : vector<8x29xf32>
    %832 = arith.addf %826, %831 : vector<8x29xf32>
    %833 = vector.extract_strided_slice %1 {offsets = [0, 15], sizes = [8, 1], strides = [1, 1]} : vector<8x32xf32> to vector<8x1xf32>
    %834 = vector.extract_strided_slice %741 {offsets = [3, 1], sizes = [1, 29], strides = [1, 1]} : vector<4x32xf32> to vector<1x29xf32>
    %835 = vector.broadcast %833 : vector<8x1xf32> to vector<8x29xf32>
    %836 = vector.broadcast %834 : vector<1x29xf32> to vector<8x29xf32>
    %837 = arith.mulf %835, %836 : vector<8x29xf32>
    %838 = arith.addf %832, %837 : vector<8x29xf32>
    %839 = vector.extract_strided_slice %1 {offsets = [0, 16], sizes = [8, 1], strides = [1, 1]} : vector<8x32xf32> to vector<8x1xf32>
    %840 = vector.extract_strided_slice %740 {offsets = [0, 2], sizes = [1, 29], strides = [1, 1]} : vector<4x32xf32> to vector<1x29xf32>
    %841 = vector.broadcast %839 : vector<8x1xf32> to vector<8x29xf32>
    %842 = vector.broadcast %840 : vector<1x29xf32> to vector<8x29xf32>
    %843 = arith.mulf %841, %842 : vector<8x29xf32>
    %844 = arith.addf %838, %843 : vector<8x29xf32>
    %845 = vector.extract_strided_slice %1 {offsets = [0, 17], sizes = [8, 1], strides = [1, 1]} : vector<8x32xf32> to vector<8x1xf32>
    %846 = vector.extract_strided_slice %740 {offsets = [1, 2], sizes = [1, 29], strides = [1, 1]} : vector<4x32xf32> to vector<1x29xf32>
    %847 = vector.broadcast %845 : vector<8x1xf32> to vector<8x29xf32>
    %848 = vector.broadcast %846 : vector<1x29xf32> to vector<8x29xf32>
    %849 = arith.mulf %847, %848 : vector<8x29xf32>
    %850 = arith.addf %844, %849 : vector<8x29xf32>
    %851 = vector.extract_strided_slice %1 {offsets = [0, 18], sizes = [8, 1], strides = [1, 1]} : vector<8x32xf32> to vector<8x1xf32>
    %852 = vector.extract_strided_slice %740 {offsets = [2, 2], sizes = [1, 29], strides = [1, 1]} : vector<4x32xf32> to vector<1x29xf32>
    %853 = vector.broadcast %851 : vector<8x1xf32> to vector<8x29xf32>
    %854 = vector.broadcast %852 : vector<1x29xf32> to vector<8x29xf32>
    %855 = arith.mulf %853, %854 : vector<8x29xf32>
    %856 = arith.addf %850, %855 : vector<8x29xf32>
    %857 = vector.extract_strided_slice %1 {offsets = [0, 19], sizes = [8, 1], strides = [1, 1]} : vector<8x32xf32> to vector<8x1xf32>
    %858 = vector.extract_strided_slice %740 {offsets = [3, 2], sizes = [1, 29], strides = [1, 1]} : vector<4x32xf32> to vector<1x29xf32>
    %859 = vector.broadcast %857 : vector<8x1xf32> to vector<8x29xf32>
    %860 = vector.broadcast %858 : vector<1x29xf32> to vector<8x29xf32>
    %861 = arith.mulf %859, %860 : vector<8x29xf32>
    %862 = arith.addf %856, %861 : vector<8x29xf32>
    %863 = vector.extract_strided_slice %1 {offsets = [0, 20], sizes = [8, 1], strides = [1, 1]} : vector<8x32xf32> to vector<8x1xf32>
    %864 = vector.extract_strided_slice %741 {offsets = [0, 2], sizes = [1, 29], strides = [1, 1]} : vector<4x32xf32> to vector<1x29xf32>
    %865 = vector.broadcast %863 : vector<8x1xf32> to vector<8x29xf32>
    %866 = vector.broadcast %864 : vector<1x29xf32> to vector<8x29xf32>
    %867 = arith.mulf %865, %866 : vector<8x29xf32>
    %868 = arith.addf %862, %867 : vector<8x29xf32>
    %869 = vector.extract_strided_slice %1 {offsets = [0, 21], sizes = [8, 1], strides = [1, 1]} : vector<8x32xf32> to vector<8x1xf32>
    %870 = vector.extract_strided_slice %741 {offsets = [1, 2], sizes = [1, 29], strides = [1, 1]} : vector<4x32xf32> to vector<1x29xf32>
    %871 = vector.broadcast %869 : vector<8x1xf32> to vector<8x29xf32>
    %872 = vector.broadcast %870 : vector<1x29xf32> to vector<8x29xf32>
    %873 = arith.mulf %871, %872 : vector<8x29xf32>
    %874 = arith.addf %868, %873 : vector<8x29xf32>
    %875 = vector.extract_strided_slice %1 {offsets = [0, 22], sizes = [8, 1], strides = [1, 1]} : vector<8x32xf32> to vector<8x1xf32>
    %876 = vector.extract_strided_slice %741 {offsets = [2, 2], sizes = [1, 29], strides = [1, 1]} : vector<4x32xf32> to vector<1x29xf32>
    %877 = vector.broadcast %875 : vector<8x1xf32> to vector<8x29xf32>
    %878 = vector.broadcast %876 : vector<1x29xf32> to vector<8x29xf32>
    %879 = arith.mulf %877, %878 : vector<8x29xf32>
    %880 = arith.addf %874, %879 : vector<8x29xf32>
    %881 = vector.extract_strided_slice %1 {offsets = [0, 23], sizes = [8, 1], strides = [1, 1]} : vector<8x32xf32> to vector<8x1xf32>
    %882 = vector.extract_strided_slice %741 {offsets = [3, 2], sizes = [1, 29], strides = [1, 1]} : vector<4x32xf32> to vector<1x29xf32>
    %883 = vector.broadcast %881 : vector<8x1xf32> to vector<8x29xf32>
    %884 = vector.broadcast %882 : vector<1x29xf32> to vector<8x29xf32>
    %885 = arith.mulf %883, %884 : vector<8x29xf32>
    %886 = arith.addf %880, %885 : vector<8x29xf32>
    %887 = vector.extract_strided_slice %1 {offsets = [0, 24], sizes = [8, 1], strides = [1, 1]} : vector<8x32xf32> to vector<8x1xf32>
    %888 = vector.extract_strided_slice %740 {offsets = [0, 3], sizes = [1, 29], strides = [1, 1]} : vector<4x32xf32> to vector<1x29xf32>
    %889 = vector.broadcast %887 : vector<8x1xf32> to vector<8x29xf32>
    %890 = vector.broadcast %888 : vector<1x29xf32> to vector<8x29xf32>
    %891 = arith.mulf %889, %890 : vector<8x29xf32>
    %892 = arith.addf %886, %891 : vector<8x29xf32>
    %893 = vector.extract_strided_slice %1 {offsets = [0, 25], sizes = [8, 1], strides = [1, 1]} : vector<8x32xf32> to vector<8x1xf32>
    %894 = vector.extract_strided_slice %740 {offsets = [1, 3], sizes = [1, 29], strides = [1, 1]} : vector<4x32xf32> to vector<1x29xf32>
    %895 = vector.broadcast %893 : vector<8x1xf32> to vector<8x29xf32>
    %896 = vector.broadcast %894 : vector<1x29xf32> to vector<8x29xf32>
    %897 = arith.mulf %895, %896 : vector<8x29xf32>
    %898 = arith.addf %892, %897 : vector<8x29xf32>
    %899 = vector.extract_strided_slice %1 {offsets = [0, 26], sizes = [8, 1], strides = [1, 1]} : vector<8x32xf32> to vector<8x1xf32>
    %900 = vector.extract_strided_slice %740 {offsets = [2, 3], sizes = [1, 29], strides = [1, 1]} : vector<4x32xf32> to vector<1x29xf32>
    %901 = vector.broadcast %899 : vector<8x1xf32> to vector<8x29xf32>
    %902 = vector.broadcast %900 : vector<1x29xf32> to vector<8x29xf32>
    %903 = arith.mulf %901, %902 : vector<8x29xf32>
    %904 = arith.addf %898, %903 : vector<8x29xf32>
    %905 = vector.extract_strided_slice %1 {offsets = [0, 27], sizes = [8, 1], strides = [1, 1]} : vector<8x32xf32> to vector<8x1xf32>
    %906 = vector.extract_strided_slice %740 {offsets = [3, 3], sizes = [1, 29], strides = [1, 1]} : vector<4x32xf32> to vector<1x29xf32>
    %907 = vector.broadcast %905 : vector<8x1xf32> to vector<8x29xf32>
    %908 = vector.broadcast %906 : vector<1x29xf32> to vector<8x29xf32>
    %909 = arith.mulf %907, %908 : vector<8x29xf32>
    %910 = arith.addf %904, %909 : vector<8x29xf32>
    %911 = vector.extract_strided_slice %1 {offsets = [0, 28], sizes = [8, 1], strides = [1, 1]} : vector<8x32xf32> to vector<8x1xf32>
    %912 = vector.extract_strided_slice %741 {offsets = [0, 3], sizes = [1, 29], strides = [1, 1]} : vector<4x32xf32> to vector<1x29xf32>
    %913 = vector.broadcast %911 : vector<8x1xf32> to vector<8x29xf32>
    %914 = vector.broadcast %912 : vector<1x29xf32> to vector<8x29xf32>
    %915 = arith.mulf %913, %914 : vector<8x29xf32>
    %916 = arith.addf %910, %915 : vector<8x29xf32>
    %917 = vector.extract_strided_slice %1 {offsets = [0, 29], sizes = [8, 1], strides = [1, 1]} : vector<8x32xf32> to vector<8x1xf32>
    %918 = vector.extract_strided_slice %741 {offsets = [1, 3], sizes = [1, 29], strides = [1, 1]} : vector<4x32xf32> to vector<1x29xf32>
    %919 = vector.broadcast %917 : vector<8x1xf32> to vector<8x29xf32>
    %920 = vector.broadcast %918 : vector<1x29xf32> to vector<8x29xf32>
    %921 = arith.mulf %919, %920 : vector<8x29xf32>
    %922 = arith.addf %916, %921 : vector<8x29xf32>
    %923 = vector.extract_strided_slice %1 {offsets = [0, 30], sizes = [8, 1], strides = [1, 1]} : vector<8x32xf32> to vector<8x1xf32>
    %924 = vector.extract_strided_slice %741 {offsets = [2, 3], sizes = [1, 29], strides = [1, 1]} : vector<4x32xf32> to vector<1x29xf32>
    %925 = vector.broadcast %923 : vector<8x1xf32> to vector<8x29xf32>
    %926 = vector.broadcast %924 : vector<1x29xf32> to vector<8x29xf32>
    %927 = arith.mulf %925, %926 : vector<8x29xf32>
    %928 = arith.addf %922, %927 : vector<8x29xf32>
    %929 = vector.extract_strided_slice %1 {offsets = [0, 31], sizes = [8, 1], strides = [1, 1]} : vector<8x32xf32> to vector<8x1xf32>
    %930 = vector.extract_strided_slice %741 {offsets = [3, 3], sizes = [1, 29], strides = [1, 1]} : vector<4x32xf32> to vector<1x29xf32>
    %931 = vector.broadcast %929 : vector<8x1xf32> to vector<8x29xf32>
    %932 = vector.broadcast %930 : vector<1x29xf32> to vector<8x29xf32>
    %933 = arith.mulf %931, %932 : vector<8x29xf32>
    %934 = arith.addf %928, %933 : vector<8x29xf32>
    %935 = vector.broadcast %2 : vector<8x1xf32> to vector<8x29xf32>
    %936 = arith.mulf %934, %935 : vector<8x29xf32>
    %937 = vector.broadcast %3 : vector<8x1xf32> to vector<8x29xf32>
    %938 = arith.addf %936, %937 : vector<8x29xf32>
    %cst_31 = arith.constant 0.000000e+00 : f32
    %939 = vector.broadcast %cst_31 : f32 to vector<8x29xf32>
    %940 = arith.maximumf %938, %939 : vector<8x29xf32>
    %cst_32 = arith.constant 0.000000e+00 : f32
    %941 = vector.broadcast %cst_32 : f32 to vector<16x27xf32>
    %942 = vector.extract_strided_slice %5 {offsets = [0, 0], sizes = [16, 1], strides = [1, 1]} : vector<16x24xf32> to vector<16x1xf32>
    %943 = vector.extract_strided_slice %940 {offsets = [0, 0], sizes = [1, 27], strides = [1, 1]} : vector<8x29xf32> to vector<1x27xf32>
    %944 = vector.broadcast %942 : vector<16x1xf32> to vector<16x27xf32>
    %945 = vector.broadcast %943 : vector<1x27xf32> to vector<16x27xf32>
    %946 = arith.mulf %944, %945 : vector<16x27xf32>
    %947 = arith.addf %941, %946 : vector<16x27xf32>
    %948 = vector.extract_strided_slice %5 {offsets = [0, 1], sizes = [16, 1], strides = [1, 1]} : vector<16x24xf32> to vector<16x1xf32>
    %949 = vector.extract_strided_slice %940 {offsets = [1, 0], sizes = [1, 27], strides = [1, 1]} : vector<8x29xf32> to vector<1x27xf32>
    %950 = vector.broadcast %948 : vector<16x1xf32> to vector<16x27xf32>
    %951 = vector.broadcast %949 : vector<1x27xf32> to vector<16x27xf32>
    %952 = arith.mulf %950, %951 : vector<16x27xf32>
    %953 = arith.addf %947, %952 : vector<16x27xf32>
    %954 = vector.extract_strided_slice %5 {offsets = [0, 2], sizes = [16, 1], strides = [1, 1]} : vector<16x24xf32> to vector<16x1xf32>
    %955 = vector.extract_strided_slice %940 {offsets = [2, 0], sizes = [1, 27], strides = [1, 1]} : vector<8x29xf32> to vector<1x27xf32>
    %956 = vector.broadcast %954 : vector<16x1xf32> to vector<16x27xf32>
    %957 = vector.broadcast %955 : vector<1x27xf32> to vector<16x27xf32>
    %958 = arith.mulf %956, %957 : vector<16x27xf32>
    %959 = arith.addf %953, %958 : vector<16x27xf32>
    %960 = vector.extract_strided_slice %5 {offsets = [0, 3], sizes = [16, 1], strides = [1, 1]} : vector<16x24xf32> to vector<16x1xf32>
    %961 = vector.extract_strided_slice %940 {offsets = [3, 0], sizes = [1, 27], strides = [1, 1]} : vector<8x29xf32> to vector<1x27xf32>
    %962 = vector.broadcast %960 : vector<16x1xf32> to vector<16x27xf32>
    %963 = vector.broadcast %961 : vector<1x27xf32> to vector<16x27xf32>
    %964 = arith.mulf %962, %963 : vector<16x27xf32>
    %965 = arith.addf %959, %964 : vector<16x27xf32>
    %966 = vector.extract_strided_slice %5 {offsets = [0, 4], sizes = [16, 1], strides = [1, 1]} : vector<16x24xf32> to vector<16x1xf32>
    %967 = vector.extract_strided_slice %940 {offsets = [4, 0], sizes = [1, 27], strides = [1, 1]} : vector<8x29xf32> to vector<1x27xf32>
    %968 = vector.broadcast %966 : vector<16x1xf32> to vector<16x27xf32>
    %969 = vector.broadcast %967 : vector<1x27xf32> to vector<16x27xf32>
    %970 = arith.mulf %968, %969 : vector<16x27xf32>
    %971 = arith.addf %965, %970 : vector<16x27xf32>
    %972 = vector.extract_strided_slice %5 {offsets = [0, 5], sizes = [16, 1], strides = [1, 1]} : vector<16x24xf32> to vector<16x1xf32>
    %973 = vector.extract_strided_slice %940 {offsets = [5, 0], sizes = [1, 27], strides = [1, 1]} : vector<8x29xf32> to vector<1x27xf32>
    %974 = vector.broadcast %972 : vector<16x1xf32> to vector<16x27xf32>
    %975 = vector.broadcast %973 : vector<1x27xf32> to vector<16x27xf32>
    %976 = arith.mulf %974, %975 : vector<16x27xf32>
    %977 = arith.addf %971, %976 : vector<16x27xf32>
    %978 = vector.extract_strided_slice %5 {offsets = [0, 6], sizes = [16, 1], strides = [1, 1]} : vector<16x24xf32> to vector<16x1xf32>
    %979 = vector.extract_strided_slice %940 {offsets = [6, 0], sizes = [1, 27], strides = [1, 1]} : vector<8x29xf32> to vector<1x27xf32>
    %980 = vector.broadcast %978 : vector<16x1xf32> to vector<16x27xf32>
    %981 = vector.broadcast %979 : vector<1x27xf32> to vector<16x27xf32>
    %982 = arith.mulf %980, %981 : vector<16x27xf32>
    %983 = arith.addf %977, %982 : vector<16x27xf32>
    %984 = vector.extract_strided_slice %5 {offsets = [0, 7], sizes = [16, 1], strides = [1, 1]} : vector<16x24xf32> to vector<16x1xf32>
    %985 = vector.extract_strided_slice %940 {offsets = [7, 0], sizes = [1, 27], strides = [1, 1]} : vector<8x29xf32> to vector<1x27xf32>
    %986 = vector.broadcast %984 : vector<16x1xf32> to vector<16x27xf32>
    %987 = vector.broadcast %985 : vector<1x27xf32> to vector<16x27xf32>
    %988 = arith.mulf %986, %987 : vector<16x27xf32>
    %989 = arith.addf %983, %988 : vector<16x27xf32>
    %990 = vector.extract_strided_slice %5 {offsets = [0, 8], sizes = [16, 1], strides = [1, 1]} : vector<16x24xf32> to vector<16x1xf32>
    %991 = vector.extract_strided_slice %940 {offsets = [0, 1], sizes = [1, 27], strides = [1, 1]} : vector<8x29xf32> to vector<1x27xf32>
    %992 = vector.broadcast %990 : vector<16x1xf32> to vector<16x27xf32>
    %993 = vector.broadcast %991 : vector<1x27xf32> to vector<16x27xf32>
    %994 = arith.mulf %992, %993 : vector<16x27xf32>
    %995 = arith.addf %989, %994 : vector<16x27xf32>
    %996 = vector.extract_strided_slice %5 {offsets = [0, 9], sizes = [16, 1], strides = [1, 1]} : vector<16x24xf32> to vector<16x1xf32>
    %997 = vector.extract_strided_slice %940 {offsets = [1, 1], sizes = [1, 27], strides = [1, 1]} : vector<8x29xf32> to vector<1x27xf32>
    %998 = vector.broadcast %996 : vector<16x1xf32> to vector<16x27xf32>
    %999 = vector.broadcast %997 : vector<1x27xf32> to vector<16x27xf32>
    %1000 = arith.mulf %998, %999 : vector<16x27xf32>
    %1001 = arith.addf %995, %1000 : vector<16x27xf32>
    %1002 = vector.extract_strided_slice %5 {offsets = [0, 10], sizes = [16, 1], strides = [1, 1]} : vector<16x24xf32> to vector<16x1xf32>
    %1003 = vector.extract_strided_slice %940 {offsets = [2, 1], sizes = [1, 27], strides = [1, 1]} : vector<8x29xf32> to vector<1x27xf32>
    %1004 = vector.broadcast %1002 : vector<16x1xf32> to vector<16x27xf32>
    %1005 = vector.broadcast %1003 : vector<1x27xf32> to vector<16x27xf32>
    %1006 = arith.mulf %1004, %1005 : vector<16x27xf32>
    %1007 = arith.addf %1001, %1006 : vector<16x27xf32>
    %1008 = vector.extract_strided_slice %5 {offsets = [0, 11], sizes = [16, 1], strides = [1, 1]} : vector<16x24xf32> to vector<16x1xf32>
    %1009 = vector.extract_strided_slice %940 {offsets = [3, 1], sizes = [1, 27], strides = [1, 1]} : vector<8x29xf32> to vector<1x27xf32>
    %1010 = vector.broadcast %1008 : vector<16x1xf32> to vector<16x27xf32>
    %1011 = vector.broadcast %1009 : vector<1x27xf32> to vector<16x27xf32>
    %1012 = arith.mulf %1010, %1011 : vector<16x27xf32>
    %1013 = arith.addf %1007, %1012 : vector<16x27xf32>
    %1014 = vector.extract_strided_slice %5 {offsets = [0, 12], sizes = [16, 1], strides = [1, 1]} : vector<16x24xf32> to vector<16x1xf32>
    %1015 = vector.extract_strided_slice %940 {offsets = [4, 1], sizes = [1, 27], strides = [1, 1]} : vector<8x29xf32> to vector<1x27xf32>
    %1016 = vector.broadcast %1014 : vector<16x1xf32> to vector<16x27xf32>
    %1017 = vector.broadcast %1015 : vector<1x27xf32> to vector<16x27xf32>
    %1018 = arith.mulf %1016, %1017 : vector<16x27xf32>
    %1019 = arith.addf %1013, %1018 : vector<16x27xf32>
    %1020 = vector.extract_strided_slice %5 {offsets = [0, 13], sizes = [16, 1], strides = [1, 1]} : vector<16x24xf32> to vector<16x1xf32>
    %1021 = vector.extract_strided_slice %940 {offsets = [5, 1], sizes = [1, 27], strides = [1, 1]} : vector<8x29xf32> to vector<1x27xf32>
    %1022 = vector.broadcast %1020 : vector<16x1xf32> to vector<16x27xf32>
    %1023 = vector.broadcast %1021 : vector<1x27xf32> to vector<16x27xf32>
    %1024 = arith.mulf %1022, %1023 : vector<16x27xf32>
    %1025 = arith.addf %1019, %1024 : vector<16x27xf32>
    %1026 = vector.extract_strided_slice %5 {offsets = [0, 14], sizes = [16, 1], strides = [1, 1]} : vector<16x24xf32> to vector<16x1xf32>
    %1027 = vector.extract_strided_slice %940 {offsets = [6, 1], sizes = [1, 27], strides = [1, 1]} : vector<8x29xf32> to vector<1x27xf32>
    %1028 = vector.broadcast %1026 : vector<16x1xf32> to vector<16x27xf32>
    %1029 = vector.broadcast %1027 : vector<1x27xf32> to vector<16x27xf32>
    %1030 = arith.mulf %1028, %1029 : vector<16x27xf32>
    %1031 = arith.addf %1025, %1030 : vector<16x27xf32>
    %1032 = vector.extract_strided_slice %5 {offsets = [0, 15], sizes = [16, 1], strides = [1, 1]} : vector<16x24xf32> to vector<16x1xf32>
    %1033 = vector.extract_strided_slice %940 {offsets = [7, 1], sizes = [1, 27], strides = [1, 1]} : vector<8x29xf32> to vector<1x27xf32>
    %1034 = vector.broadcast %1032 : vector<16x1xf32> to vector<16x27xf32>
    %1035 = vector.broadcast %1033 : vector<1x27xf32> to vector<16x27xf32>
    %1036 = arith.mulf %1034, %1035 : vector<16x27xf32>
    %1037 = arith.addf %1031, %1036 : vector<16x27xf32>
    %1038 = vector.extract_strided_slice %5 {offsets = [0, 16], sizes = [16, 1], strides = [1, 1]} : vector<16x24xf32> to vector<16x1xf32>
    %1039 = vector.extract_strided_slice %940 {offsets = [0, 2], sizes = [1, 27], strides = [1, 1]} : vector<8x29xf32> to vector<1x27xf32>
    %1040 = vector.broadcast %1038 : vector<16x1xf32> to vector<16x27xf32>
    %1041 = vector.broadcast %1039 : vector<1x27xf32> to vector<16x27xf32>
    %1042 = arith.mulf %1040, %1041 : vector<16x27xf32>
    %1043 = arith.addf %1037, %1042 : vector<16x27xf32>
    %1044 = vector.extract_strided_slice %5 {offsets = [0, 17], sizes = [16, 1], strides = [1, 1]} : vector<16x24xf32> to vector<16x1xf32>
    %1045 = vector.extract_strided_slice %940 {offsets = [1, 2], sizes = [1, 27], strides = [1, 1]} : vector<8x29xf32> to vector<1x27xf32>
    %1046 = vector.broadcast %1044 : vector<16x1xf32> to vector<16x27xf32>
    %1047 = vector.broadcast %1045 : vector<1x27xf32> to vector<16x27xf32>
    %1048 = arith.mulf %1046, %1047 : vector<16x27xf32>
    %1049 = arith.addf %1043, %1048 : vector<16x27xf32>
    %1050 = vector.extract_strided_slice %5 {offsets = [0, 18], sizes = [16, 1], strides = [1, 1]} : vector<16x24xf32> to vector<16x1xf32>
    %1051 = vector.extract_strided_slice %940 {offsets = [2, 2], sizes = [1, 27], strides = [1, 1]} : vector<8x29xf32> to vector<1x27xf32>
    %1052 = vector.broadcast %1050 : vector<16x1xf32> to vector<16x27xf32>
    %1053 = vector.broadcast %1051 : vector<1x27xf32> to vector<16x27xf32>
    %1054 = arith.mulf %1052, %1053 : vector<16x27xf32>
    %1055 = arith.addf %1049, %1054 : vector<16x27xf32>
    %1056 = vector.extract_strided_slice %5 {offsets = [0, 19], sizes = [16, 1], strides = [1, 1]} : vector<16x24xf32> to vector<16x1xf32>
    %1057 = vector.extract_strided_slice %940 {offsets = [3, 2], sizes = [1, 27], strides = [1, 1]} : vector<8x29xf32> to vector<1x27xf32>
    %1058 = vector.broadcast %1056 : vector<16x1xf32> to vector<16x27xf32>
    %1059 = vector.broadcast %1057 : vector<1x27xf32> to vector<16x27xf32>
    %1060 = arith.mulf %1058, %1059 : vector<16x27xf32>
    %1061 = arith.addf %1055, %1060 : vector<16x27xf32>
    %1062 = vector.extract_strided_slice %5 {offsets = [0, 20], sizes = [16, 1], strides = [1, 1]} : vector<16x24xf32> to vector<16x1xf32>
    %1063 = vector.extract_strided_slice %940 {offsets = [4, 2], sizes = [1, 27], strides = [1, 1]} : vector<8x29xf32> to vector<1x27xf32>
    %1064 = vector.broadcast %1062 : vector<16x1xf32> to vector<16x27xf32>
    %1065 = vector.broadcast %1063 : vector<1x27xf32> to vector<16x27xf32>
    %1066 = arith.mulf %1064, %1065 : vector<16x27xf32>
    %1067 = arith.addf %1061, %1066 : vector<16x27xf32>
    %1068 = vector.extract_strided_slice %5 {offsets = [0, 21], sizes = [16, 1], strides = [1, 1]} : vector<16x24xf32> to vector<16x1xf32>
    %1069 = vector.extract_strided_slice %940 {offsets = [5, 2], sizes = [1, 27], strides = [1, 1]} : vector<8x29xf32> to vector<1x27xf32>
    %1070 = vector.broadcast %1068 : vector<16x1xf32> to vector<16x27xf32>
    %1071 = vector.broadcast %1069 : vector<1x27xf32> to vector<16x27xf32>
    %1072 = arith.mulf %1070, %1071 : vector<16x27xf32>
    %1073 = arith.addf %1067, %1072 : vector<16x27xf32>
    %1074 = vector.extract_strided_slice %5 {offsets = [0, 22], sizes = [16, 1], strides = [1, 1]} : vector<16x24xf32> to vector<16x1xf32>
    %1075 = vector.extract_strided_slice %940 {offsets = [6, 2], sizes = [1, 27], strides = [1, 1]} : vector<8x29xf32> to vector<1x27xf32>
    %1076 = vector.broadcast %1074 : vector<16x1xf32> to vector<16x27xf32>
    %1077 = vector.broadcast %1075 : vector<1x27xf32> to vector<16x27xf32>
    %1078 = arith.mulf %1076, %1077 : vector<16x27xf32>
    %1079 = arith.addf %1073, %1078 : vector<16x27xf32>
    %1080 = vector.extract_strided_slice %5 {offsets = [0, 23], sizes = [16, 1], strides = [1, 1]} : vector<16x24xf32> to vector<16x1xf32>
    %1081 = vector.extract_strided_slice %940 {offsets = [7, 2], sizes = [1, 27], strides = [1, 1]} : vector<8x29xf32> to vector<1x27xf32>
    %1082 = vector.broadcast %1080 : vector<16x1xf32> to vector<16x27xf32>
    %1083 = vector.broadcast %1081 : vector<1x27xf32> to vector<16x27xf32>
    %1084 = arith.mulf %1082, %1083 : vector<16x27xf32>
    %1085 = arith.addf %1079, %1084 : vector<16x27xf32>
    %1086 = vector.broadcast %6 : vector<16x1xf32> to vector<16x27xf32>
    %1087 = arith.mulf %1085, %1086 : vector<16x27xf32>
    %1088 = vector.broadcast %7 : vector<16x1xf32> to vector<16x27xf32>
    %1089 = arith.addf %1087, %1088 : vector<16x27xf32>
    %cst_33 = arith.constant 0.000000e+00 : f32
    %1090 = vector.broadcast %cst_33 : f32 to vector<16x27xf32>
    %1091 = arith.maximumf %1089, %1090 : vector<16x27xf32>
    %c2_34 = arith.constant 2 : index
    %c0_35 = arith.constant 0 : index
    %c0_36 = arith.constant 0 : index
    %1092 = vector.load %arg4[%c2_34, %c0_35, %c0_36] : memref<4x16x27xf32, #tpu.memory_space<vmem>>, vector<1x16x27xf32>
    %1093 = vector.shape_cast %1092 : vector<1x16x27xf32> to vector<16x27xf32>
    %1094 = vector.shape_cast %1091 : vector<16x27xf32> to vector<1x16x27xf32>
    tpu.vector_store %arg4[%c2_34, %c0_35, %c0_36], %1094 {strides = array<i32>} : memref<4x16x27xf32, #tpu.memory_space<vmem>>, vector<1x16x27xf32>,
    %c3 = arith.constant 3 : index
    %c0_37 = arith.constant 0 : index
    %c0_38 = arith.constant 0 : index
    %1095 = vector.load %arg1[%c3, %c0_37, %c0_38] : memref<4x4x64xf32, #tpu.memory_space<vmem>>, vector<1x4x64xf32>
    %1096 = vector.shape_cast %1095 : vector<1x4x64xf32> to vector<4x64xf32>
    %cst_39 = arith.constant dense<0.000000e+00> : vector<4x32xf32>
    %1097 = tpu.matmul %1096, %16, %cst_39 {dimension_numbers = #tpu.dot_dimension_numbers<[1], [0], [0], [1], [0, 0, 1, 1], [], []>} : vector<4x64xf32>, vector<64x32xf32>, vector<4x32xf32> -> vector<4x32xf32>
    %cst_40 = arith.constant dense<0.000000e+00> : vector<4x32xf32>
    %1098 = tpu.matmul %1096, %23, %cst_40 {dimension_numbers = #tpu.dot_dimension_numbers<[1], [0], [0], [1], [0, 0, 1, 1], [], []>} : vector<4x64xf32>, vector<64x32xf32>, vector<4x32xf32> -> vector<4x32xf32>
    %cst_41 = arith.constant 0.000000e+00 : f32
    %1099 = vector.broadcast %cst_41 : f32 to vector<8x29xf32>
    %1100 = vector.extract_strided_slice %1 {offsets = [0, 0], sizes = [8, 1], strides = [1, 1]} : vector<8x32xf32> to vector<8x1xf32>
    %1101 = vector.extract_strided_slice %1097 {offsets = [0, 0], sizes = [1, 29], strides = [1, 1]} : vector<4x32xf32> to vector<1x29xf32>
    %1102 = vector.broadcast %1100 : vector<8x1xf32> to vector<8x29xf32>
    %1103 = vector.broadcast %1101 : vector<1x29xf32> to vector<8x29xf32>
    %1104 = arith.mulf %1102, %1103 : vector<8x29xf32>
    %1105 = arith.addf %1099, %1104 : vector<8x29xf32>
    %1106 = vector.extract_strided_slice %1 {offsets = [0, 1], sizes = [8, 1], strides = [1, 1]} : vector<8x32xf32> to vector<8x1xf32>
    %1107 = vector.extract_strided_slice %1097 {offsets = [1, 0], sizes = [1, 29], strides = [1, 1]} : vector<4x32xf32> to vector<1x29xf32>
    %1108 = vector.broadcast %1106 : vector<8x1xf32> to vector<8x29xf32>
    %1109 = vector.broadcast %1107 : vector<1x29xf32> to vector<8x29xf32>
    %1110 = arith.mulf %1108, %1109 : vector<8x29xf32>
    %1111 = arith.addf %1105, %1110 : vector<8x29xf32>
    %1112 = vector.extract_strided_slice %1 {offsets = [0, 2], sizes = [8, 1], strides = [1, 1]} : vector<8x32xf32> to vector<8x1xf32>
    %1113 = vector.extract_strided_slice %1097 {offsets = [2, 0], sizes = [1, 29], strides = [1, 1]} : vector<4x32xf32> to vector<1x29xf32>
    %1114 = vector.broadcast %1112 : vector<8x1xf32> to vector<8x29xf32>
    %1115 = vector.broadcast %1113 : vector<1x29xf32> to vector<8x29xf32>
    %1116 = arith.mulf %1114, %1115 : vector<8x29xf32>
    %1117 = arith.addf %1111, %1116 : vector<8x29xf32>
    %1118 = vector.extract_strided_slice %1 {offsets = [0, 3], sizes = [8, 1], strides = [1, 1]} : vector<8x32xf32> to vector<8x1xf32>
    %1119 = vector.extract_strided_slice %1097 {offsets = [3, 0], sizes = [1, 29], strides = [1, 1]} : vector<4x32xf32> to vector<1x29xf32>
    %1120 = vector.broadcast %1118 : vector<8x1xf32> to vector<8x29xf32>
    %1121 = vector.broadcast %1119 : vector<1x29xf32> to vector<8x29xf32>
    %1122 = arith.mulf %1120, %1121 : vector<8x29xf32>
    %1123 = arith.addf %1117, %1122 : vector<8x29xf32>
    %1124 = vector.extract_strided_slice %1 {offsets = [0, 4], sizes = [8, 1], strides = [1, 1]} : vector<8x32xf32> to vector<8x1xf32>
    %1125 = vector.extract_strided_slice %1098 {offsets = [0, 0], sizes = [1, 29], strides = [1, 1]} : vector<4x32xf32> to vector<1x29xf32>
    %1126 = vector.broadcast %1124 : vector<8x1xf32> to vector<8x29xf32>
    %1127 = vector.broadcast %1125 : vector<1x29xf32> to vector<8x29xf32>
    %1128 = arith.mulf %1126, %1127 : vector<8x29xf32>
    %1129 = arith.addf %1123, %1128 : vector<8x29xf32>
    %1130 = vector.extract_strided_slice %1 {offsets = [0, 5], sizes = [8, 1], strides = [1, 1]} : vector<8x32xf32> to vector<8x1xf32>
    %1131 = vector.extract_strided_slice %1098 {offsets = [1, 0], sizes = [1, 29], strides = [1, 1]} : vector<4x32xf32> to vector<1x29xf32>
    %1132 = vector.broadcast %1130 : vector<8x1xf32> to vector<8x29xf32>
    %1133 = vector.broadcast %1131 : vector<1x29xf32> to vector<8x29xf32>
    %1134 = arith.mulf %1132, %1133 : vector<8x29xf32>
    %1135 = arith.addf %1129, %1134 : vector<8x29xf32>
    %1136 = vector.extract_strided_slice %1 {offsets = [0, 6], sizes = [8, 1], strides = [1, 1]} : vector<8x32xf32> to vector<8x1xf32>
    %1137 = vector.extract_strided_slice %1098 {offsets = [2, 0], sizes = [1, 29], strides = [1, 1]} : vector<4x32xf32> to vector<1x29xf32>
    %1138 = vector.broadcast %1136 : vector<8x1xf32> to vector<8x29xf32>
    %1139 = vector.broadcast %1137 : vector<1x29xf32> to vector<8x29xf32>
    %1140 = arith.mulf %1138, %1139 : vector<8x29xf32>
    %1141 = arith.addf %1135, %1140 : vector<8x29xf32>
    %1142 = vector.extract_strided_slice %1 {offsets = [0, 7], sizes = [8, 1], strides = [1, 1]} : vector<8x32xf32> to vector<8x1xf32>
    %1143 = vector.extract_strided_slice %1098 {offsets = [3, 0], sizes = [1, 29], strides = [1, 1]} : vector<4x32xf32> to vector<1x29xf32>
    %1144 = vector.broadcast %1142 : vector<8x1xf32> to vector<8x29xf32>
    %1145 = vector.broadcast %1143 : vector<1x29xf32> to vector<8x29xf32>
    %1146 = arith.mulf %1144, %1145 : vector<8x29xf32>
    %1147 = arith.addf %1141, %1146 : vector<8x29xf32>
    %1148 = vector.extract_strided_slice %1 {offsets = [0, 8], sizes = [8, 1], strides = [1, 1]} : vector<8x32xf32> to vector<8x1xf32>
    %1149 = vector.extract_strided_slice %1097 {offsets = [0, 1], sizes = [1, 29], strides = [1, 1]} : vector<4x32xf32> to vector<1x29xf32>
    %1150 = vector.broadcast %1148 : vector<8x1xf32> to vector<8x29xf32>
    %1151 = vector.broadcast %1149 : vector<1x29xf32> to vector<8x29xf32>
    %1152 = arith.mulf %1150, %1151 : vector<8x29xf32>
    %1153 = arith.addf %1147, %1152 : vector<8x29xf32>
    %1154 = vector.extract_strided_slice %1 {offsets = [0, 9], sizes = [8, 1], strides = [1, 1]} : vector<8x32xf32> to vector<8x1xf32>
    %1155 = vector.extract_strided_slice %1097 {offsets = [1, 1], sizes = [1, 29], strides = [1, 1]} : vector<4x32xf32> to vector<1x29xf32>
    %1156 = vector.broadcast %1154 : vector<8x1xf32> to vector<8x29xf32>
    %1157 = vector.broadcast %1155 : vector<1x29xf32> to vector<8x29xf32>
    %1158 = arith.mulf %1156, %1157 : vector<8x29xf32>
    %1159 = arith.addf %1153, %1158 : vector<8x29xf32>
    %1160 = vector.extract_strided_slice %1 {offsets = [0, 10], sizes = [8, 1], strides = [1, 1]} : vector<8x32xf32> to vector<8x1xf32>
    %1161 = vector.extract_strided_slice %1097 {offsets = [2, 1], sizes = [1, 29], strides = [1, 1]} : vector<4x32xf32> to vector<1x29xf32>
    %1162 = vector.broadcast %1160 : vector<8x1xf32> to vector<8x29xf32>
    %1163 = vector.broadcast %1161 : vector<1x29xf32> to vector<8x29xf32>
    %1164 = arith.mulf %1162, %1163 : vector<8x29xf32>
    %1165 = arith.addf %1159, %1164 : vector<8x29xf32>
    %1166 = vector.extract_strided_slice %1 {offsets = [0, 11], sizes = [8, 1], strides = [1, 1]} : vector<8x32xf32> to vector<8x1xf32>
    %1167 = vector.extract_strided_slice %1097 {offsets = [3, 1], sizes = [1, 29], strides = [1, 1]} : vector<4x32xf32> to vector<1x29xf32>
    %1168 = vector.broadcast %1166 : vector<8x1xf32> to vector<8x29xf32>
    %1169 = vector.broadcast %1167 : vector<1x29xf32> to vector<8x29xf32>
    %1170 = arith.mulf %1168, %1169 : vector<8x29xf32>
    %1171 = arith.addf %1165, %1170 : vector<8x29xf32>
    %1172 = vector.extract_strided_slice %1 {offsets = [0, 12], sizes = [8, 1], strides = [1, 1]} : vector<8x32xf32> to vector<8x1xf32>
    %1173 = vector.extract_strided_slice %1098 {offsets = [0, 1], sizes = [1, 29], strides = [1, 1]} : vector<4x32xf32> to vector<1x29xf32>
    %1174 = vector.broadcast %1172 : vector<8x1xf32> to vector<8x29xf32>
    %1175 = vector.broadcast %1173 : vector<1x29xf32> to vector<8x29xf32>
    %1176 = arith.mulf %1174, %1175 : vector<8x29xf32>
    %1177 = arith.addf %1171, %1176 : vector<8x29xf32>
    %1178 = vector.extract_strided_slice %1 {offsets = [0, 13], sizes = [8, 1], strides = [1, 1]} : vector<8x32xf32> to vector<8x1xf32>
    %1179 = vector.extract_strided_slice %1098 {offsets = [1, 1], sizes = [1, 29], strides = [1, 1]} : vector<4x32xf32> to vector<1x29xf32>
    %1180 = vector.broadcast %1178 : vector<8x1xf32> to vector<8x29xf32>
    %1181 = vector.broadcast %1179 : vector<1x29xf32> to vector<8x29xf32>
    %1182 = arith.mulf %1180, %1181 : vector<8x29xf32>
    %1183 = arith.addf %1177, %1182 : vector<8x29xf32>
    %1184 = vector.extract_strided_slice %1 {offsets = [0, 14], sizes = [8, 1], strides = [1, 1]} : vector<8x32xf32> to vector<8x1xf32>
    %1185 = vector.extract_strided_slice %1098 {offsets = [2, 1], sizes = [1, 29], strides = [1, 1]} : vector<4x32xf32> to vector<1x29xf32>
    %1186 = vector.broadcast %1184 : vector<8x1xf32> to vector<8x29xf32>
    %1187 = vector.broadcast %1185 : vector<1x29xf32> to vector<8x29xf32>
    %1188 = arith.mulf %1186, %1187 : vector<8x29xf32>
    %1189 = arith.addf %1183, %1188 : vector<8x29xf32>
    %1190 = vector.extract_strided_slice %1 {offsets = [0, 15], sizes = [8, 1], strides = [1, 1]} : vector<8x32xf32> to vector<8x1xf32>
    %1191 = vector.extract_strided_slice %1098 {offsets = [3, 1], sizes = [1, 29], strides = [1, 1]} : vector<4x32xf32> to vector<1x29xf32>
    %1192 = vector.broadcast %1190 : vector<8x1xf32> to vector<8x29xf32>
    %1193 = vector.broadcast %1191 : vector<1x29xf32> to vector<8x29xf32>
    %1194 = arith.mulf %1192, %1193 : vector<8x29xf32>
    %1195 = arith.addf %1189, %1194 : vector<8x29xf32>
    %1196 = vector.extract_strided_slice %1 {offsets = [0, 16], sizes = [8, 1], strides = [1, 1]} : vector<8x32xf32> to vector<8x1xf32>
    %1197 = vector.extract_strided_slice %1097 {offsets = [0, 2], sizes = [1, 29], strides = [1, 1]} : vector<4x32xf32> to vector<1x29xf32>
    %1198 = vector.broadcast %1196 : vector<8x1xf32> to vector<8x29xf32>
    %1199 = vector.broadcast %1197 : vector<1x29xf32> to vector<8x29xf32>
    %1200 = arith.mulf %1198, %1199 : vector<8x29xf32>
    %1201 = arith.addf %1195, %1200 : vector<8x29xf32>
    %1202 = vector.extract_strided_slice %1 {offsets = [0, 17], sizes = [8, 1], strides = [1, 1]} : vector<8x32xf32> to vector<8x1xf32>
    %1203 = vector.extract_strided_slice %1097 {offsets = [1, 2], sizes = [1, 29], strides = [1, 1]} : vector<4x32xf32> to vector<1x29xf32>
    %1204 = vector.broadcast %1202 : vector<8x1xf32> to vector<8x29xf32>
    %1205 = vector.broadcast %1203 : vector<1x29xf32> to vector<8x29xf32>
    %1206 = arith.mulf %1204, %1205 : vector<8x29xf32>
    %1207 = arith.addf %1201, %1206 : vector<8x29xf32>
    %1208 = vector.extract_strided_slice %1 {offsets = [0, 18], sizes = [8, 1], strides = [1, 1]} : vector<8x32xf32> to vector<8x1xf32>
    %1209 = vector.extract_strided_slice %1097 {offsets = [2, 2], sizes = [1, 29], strides = [1, 1]} : vector<4x32xf32> to vector<1x29xf32>
    %1210 = vector.broadcast %1208 : vector<8x1xf32> to vector<8x29xf32>
    %1211 = vector.broadcast %1209 : vector<1x29xf32> to vector<8x29xf32>
    %1212 = arith.mulf %1210, %1211 : vector<8x29xf32>
    %1213 = arith.addf %1207, %1212 : vector<8x29xf32>
    %1214 = vector.extract_strided_slice %1 {offsets = [0, 19], sizes = [8, 1], strides = [1, 1]} : vector<8x32xf32> to vector<8x1xf32>
    %1215 = vector.extract_strided_slice %1097 {offsets = [3, 2], sizes = [1, 29], strides = [1, 1]} : vector<4x32xf32> to vector<1x29xf32>
    %1216 = vector.broadcast %1214 : vector<8x1xf32> to vector<8x29xf32>
    %1217 = vector.broadcast %1215 : vector<1x29xf32> to vector<8x29xf32>
    %1218 = arith.mulf %1216, %1217 : vector<8x29xf32>
    %1219 = arith.addf %1213, %1218 : vector<8x29xf32>
    %1220 = vector.extract_strided_slice %1 {offsets = [0, 20], sizes = [8, 1], strides = [1, 1]} : vector<8x32xf32> to vector<8x1xf32>
    %1221 = vector.extract_strided_slice %1098 {offsets = [0, 2], sizes = [1, 29], strides = [1, 1]} : vector<4x32xf32> to vector<1x29xf32>
    %1222 = vector.broadcast %1220 : vector<8x1xf32> to vector<8x29xf32>
    %1223 = vector.broadcast %1221 : vector<1x29xf32> to vector<8x29xf32>
    %1224 = arith.mulf %1222, %1223 : vector<8x29xf32>
    %1225 = arith.addf %1219, %1224 : vector<8x29xf32>
    %1226 = vector.extract_strided_slice %1 {offsets = [0, 21], sizes = [8, 1], strides = [1, 1]} : vector<8x32xf32> to vector<8x1xf32>
    %1227 = vector.extract_strided_slice %1098 {offsets = [1, 2], sizes = [1, 29], strides = [1, 1]} : vector<4x32xf32> to vector<1x29xf32>
    %1228 = vector.broadcast %1226 : vector<8x1xf32> to vector<8x29xf32>
    %1229 = vector.broadcast %1227 : vector<1x29xf32> to vector<8x29xf32>
    %1230 = arith.mulf %1228, %1229 : vector<8x29xf32>
    %1231 = arith.addf %1225, %1230 : vector<8x29xf32>
    %1232 = vector.extract_strided_slice %1 {offsets = [0, 22], sizes = [8, 1], strides = [1, 1]} : vector<8x32xf32> to vector<8x1xf32>
    %1233 = vector.extract_strided_slice %1098 {offsets = [2, 2], sizes = [1, 29], strides = [1, 1]} : vector<4x32xf32> to vector<1x29xf32>
    %1234 = vector.broadcast %1232 : vector<8x1xf32> to vector<8x29xf32>
    %1235 = vector.broadcast %1233 : vector<1x29xf32> to vector<8x29xf32>
    %1236 = arith.mulf %1234, %1235 : vector<8x29xf32>
    %1237 = arith.addf %1231, %1236 : vector<8x29xf32>
    %1238 = vector.extract_strided_slice %1 {offsets = [0, 23], sizes = [8, 1], strides = [1, 1]} : vector<8x32xf32> to vector<8x1xf32>
    %1239 = vector.extract_strided_slice %1098 {offsets = [3, 2], sizes = [1, 29], strides = [1, 1]} : vector<4x32xf32> to vector<1x29xf32>
    %1240 = vector.broadcast %1238 : vector<8x1xf32> to vector<8x29xf32>
    %1241 = vector.broadcast %1239 : vector<1x29xf32> to vector<8x29xf32>
    %1242 = arith.mulf %1240, %1241 : vector<8x29xf32>
    %1243 = arith.addf %1237, %1242 : vector<8x29xf32>
    %1244 = vector.extract_strided_slice %1 {offsets = [0, 24], sizes = [8, 1], strides = [1, 1]} : vector<8x32xf32> to vector<8x1xf32>
    %1245 = vector.extract_strided_slice %1097 {offsets = [0, 3], sizes = [1, 29], strides = [1, 1]} : vector<4x32xf32> to vector<1x29xf32>
    %1246 = vector.broadcast %1244 : vector<8x1xf32> to vector<8x29xf32>
    %1247 = vector.broadcast %1245 : vector<1x29xf32> to vector<8x29xf32>
    %1248 = arith.mulf %1246, %1247 : vector<8x29xf32>
    %1249 = arith.addf %1243, %1248 : vector<8x29xf32>
    %1250 = vector.extract_strided_slice %1 {offsets = [0, 25], sizes = [8, 1], strides = [1, 1]} : vector<8x32xf32> to vector<8x1xf32>
    %1251 = vector.extract_strided_slice %1097 {offsets = [1, 3], sizes = [1, 29], strides = [1, 1]} : vector<4x32xf32> to vector<1x29xf32>
    %1252 = vector.broadcast %1250 : vector<8x1xf32> to vector<8x29xf32>
    %1253 = vector.broadcast %1251 : vector<1x29xf32> to vector<8x29xf32>
    %1254 = arith.mulf %1252, %1253 : vector<8x29xf32>
    %1255 = arith.addf %1249, %1254 : vector<8x29xf32>
    %1256 = vector.extract_strided_slice %1 {offsets = [0, 26], sizes = [8, 1], strides = [1, 1]} : vector<8x32xf32> to vector<8x1xf32>
    %1257 = vector.extract_strided_slice %1097 {offsets = [2, 3], sizes = [1, 29], strides = [1, 1]} : vector<4x32xf32> to vector<1x29xf32>
    %1258 = vector.broadcast %1256 : vector<8x1xf32> to vector<8x29xf32>
    %1259 = vector.broadcast %1257 : vector<1x29xf32> to vector<8x29xf32>
    %1260 = arith.mulf %1258, %1259 : vector<8x29xf32>
    %1261 = arith.addf %1255, %1260 : vector<8x29xf32>
    %1262 = vector.extract_strided_slice %1 {offsets = [0, 27], sizes = [8, 1], strides = [1, 1]} : vector<8x32xf32> to vector<8x1xf32>
    %1263 = vector.extract_strided_slice %1097 {offsets = [3, 3], sizes = [1, 29], strides = [1, 1]} : vector<4x32xf32> to vector<1x29xf32>
    %1264 = vector.broadcast %1262 : vector<8x1xf32> to vector<8x29xf32>
    %1265 = vector.broadcast %1263 : vector<1x29xf32> to vector<8x29xf32>
    %1266 = arith.mulf %1264, %1265 : vector<8x29xf32>
    %1267 = arith.addf %1261, %1266 : vector<8x29xf32>
    %1268 = vector.extract_strided_slice %1 {offsets = [0, 28], sizes = [8, 1], strides = [1, 1]} : vector<8x32xf32> to vector<8x1xf32>
    %1269 = vector.extract_strided_slice %1098 {offsets = [0, 3], sizes = [1, 29], strides = [1, 1]} : vector<4x32xf32> to vector<1x29xf32>
    %1270 = vector.broadcast %1268 : vector<8x1xf32> to vector<8x29xf32>
    %1271 = vector.broadcast %1269 : vector<1x29xf32> to vector<8x29xf32>
    %1272 = arith.mulf %1270, %1271 : vector<8x29xf32>
    %1273 = arith.addf %1267, %1272 : vector<8x29xf32>
    %1274 = vector.extract_strided_slice %1 {offsets = [0, 29], sizes = [8, 1], strides = [1, 1]} : vector<8x32xf32> to vector<8x1xf32>
    %1275 = vector.extract_strided_slice %1098 {offsets = [1, 3], sizes = [1, 29], strides = [1, 1]} : vector<4x32xf32> to vector<1x29xf32>
    %1276 = vector.broadcast %1274 : vector<8x1xf32> to vector<8x29xf32>
    %1277 = vector.broadcast %1275 : vector<1x29xf32> to vector<8x29xf32>
    %1278 = arith.mulf %1276, %1277 : vector<8x29xf32>
    %1279 = arith.addf %1273, %1278 : vector<8x29xf32>
    %1280 = vector.extract_strided_slice %1 {offsets = [0, 30], sizes = [8, 1], strides = [1, 1]} : vector<8x32xf32> to vector<8x1xf32>
    %1281 = vector.extract_strided_slice %1098 {offsets = [2, 3], sizes = [1, 29], strides = [1, 1]} : vector<4x32xf32> to vector<1x29xf32>
    %1282 = vector.broadcast %1280 : vector<8x1xf32> to vector<8x29xf32>
    %1283 = vector.broadcast %1281 : vector<1x29xf32> to vector<8x29xf32>
    %1284 = arith.mulf %1282, %1283 : vector<8x29xf32>
    %1285 = arith.addf %1279, %1284 : vector<8x29xf32>
    %1286 = vector.extract_strided_slice %1 {offsets = [0, 31], sizes = [8, 1], strides = [1, 1]} : vector<8x32xf32> to vector<8x1xf32>
    %1287 = vector.extract_strided_slice %1098 {offsets = [3, 3], sizes = [1, 29], strides = [1, 1]} : vector<4x32xf32> to vector<1x29xf32>
    %1288 = vector.broadcast %1286 : vector<8x1xf32> to vector<8x29xf32>
    %1289 = vector.broadcast %1287 : vector<1x29xf32> to vector<8x29xf32>
    %1290 = arith.mulf %1288, %1289 : vector<8x29xf32>
    %1291 = arith.addf %1285, %1290 : vector<8x29xf32>
    %1292 = vector.broadcast %2 : vector<8x1xf32> to vector<8x29xf32>
    %1293 = arith.mulf %1291, %1292 : vector<8x29xf32>
    %1294 = vector.broadcast %3 : vector<8x1xf32> to vector<8x29xf32>
    %1295 = arith.addf %1293, %1294 : vector<8x29xf32>
    %cst_42 = arith.constant 0.000000e+00 : f32
    %1296 = vector.broadcast %cst_42 : f32 to vector<8x29xf32>
    %1297 = arith.maximumf %1295, %1296 : vector<8x29xf32>
    %cst_43 = arith.constant 0.000000e+00 : f32
    %1298 = vector.broadcast %cst_43 : f32 to vector<16x27xf32>
    %1299 = vector.extract_strided_slice %5 {offsets = [0, 0], sizes = [16, 1], strides = [1, 1]} : vector<16x24xf32> to vector<16x1xf32>
    %1300 = vector.extract_strided_slice %1297 {offsets = [0, 0], sizes = [1, 27], strides = [1, 1]} : vector<8x29xf32> to vector<1x27xf32>
    %1301 = vector.broadcast %1299 : vector<16x1xf32> to vector<16x27xf32>
    %1302 = vector.broadcast %1300 : vector<1x27xf32> to vector<16x27xf32>
    %1303 = arith.mulf %1301, %1302 : vector<16x27xf32>
    %1304 = arith.addf %1298, %1303 : vector<16x27xf32>
    %1305 = vector.extract_strided_slice %5 {offsets = [0, 1], sizes = [16, 1], strides = [1, 1]} : vector<16x24xf32> to vector<16x1xf32>
    %1306 = vector.extract_strided_slice %1297 {offsets = [1, 0], sizes = [1, 27], strides = [1, 1]} : vector<8x29xf32> to vector<1x27xf32>
    %1307 = vector.broadcast %1305 : vector<16x1xf32> to vector<16x27xf32>
    %1308 = vector.broadcast %1306 : vector<1x27xf32> to vector<16x27xf32>
    %1309 = arith.mulf %1307, %1308 : vector<16x27xf32>
    %1310 = arith.addf %1304, %1309 : vector<16x27xf32>
    %1311 = vector.extract_strided_slice %5 {offsets = [0, 2], sizes = [16, 1], strides = [1, 1]} : vector<16x24xf32> to vector<16x1xf32>
    %1312 = vector.extract_strided_slice %1297 {offsets = [2, 0], sizes = [1, 27], strides = [1, 1]} : vector<8x29xf32> to vector<1x27xf32>
    %1313 = vector.broadcast %1311 : vector<16x1xf32> to vector<16x27xf32>
    %1314 = vector.broadcast %1312 : vector<1x27xf32> to vector<16x27xf32>
    %1315 = arith.mulf %1313, %1314 : vector<16x27xf32>
    %1316 = arith.addf %1310, %1315 : vector<16x27xf32>
    %1317 = vector.extract_strided_slice %5 {offsets = [0, 3], sizes = [16, 1], strides = [1, 1]} : vector<16x24xf32> to vector<16x1xf32>
    %1318 = vector.extract_strided_slice %1297 {offsets = [3, 0], sizes = [1, 27], strides = [1, 1]} : vector<8x29xf32> to vector<1x27xf32>
    %1319 = vector.broadcast %1317 : vector<16x1xf32> to vector<16x27xf32>
    %1320 = vector.broadcast %1318 : vector<1x27xf32> to vector<16x27xf32>
    %1321 = arith.mulf %1319, %1320 : vector<16x27xf32>
    %1322 = arith.addf %1316, %1321 : vector<16x27xf32>
    %1323 = vector.extract_strided_slice %5 {offsets = [0, 4], sizes = [16, 1], strides = [1, 1]} : vector<16x24xf32> to vector<16x1xf32>
    %1324 = vector.extract_strided_slice %1297 {offsets = [4, 0], sizes = [1, 27], strides = [1, 1]} : vector<8x29xf32> to vector<1x27xf32>
    %1325 = vector.broadcast %1323 : vector<16x1xf32> to vector<16x27xf32>
    %1326 = vector.broadcast %1324 : vector<1x27xf32> to vector<16x27xf32>
    %1327 = arith.mulf %1325, %1326 : vector<16x27xf32>
    %1328 = arith.addf %1322, %1327 : vector<16x27xf32>
    %1329 = vector.extract_strided_slice %5 {offsets = [0, 5], sizes = [16, 1], strides = [1, 1]} : vector<16x24xf32> to vector<16x1xf32>
    %1330 = vector.extract_strided_slice %1297 {offsets = [5, 0], sizes = [1, 27], strides = [1, 1]} : vector<8x29xf32> to vector<1x27xf32>
    %1331 = vector.broadcast %1329 : vector<16x1xf32> to vector<16x27xf32>
    %1332 = vector.broadcast %1330 : vector<1x27xf32> to vector<16x27xf32>
    %1333 = arith.mulf %1331, %1332 : vector<16x27xf32>
    %1334 = arith.addf %1328, %1333 : vector<16x27xf32>
    %1335 = vector.extract_strided_slice %5 {offsets = [0, 6], sizes = [16, 1], strides = [1, 1]} : vector<16x24xf32> to vector<16x1xf32>
    %1336 = vector.extract_strided_slice %1297 {offsets = [6, 0], sizes = [1, 27], strides = [1, 1]} : vector<8x29xf32> to vector<1x27xf32>
    %1337 = vector.broadcast %1335 : vector<16x1xf32> to vector<16x27xf32>
    %1338 = vector.broadcast %1336 : vector<1x27xf32> to vector<16x27xf32>
    %1339 = arith.mulf %1337, %1338 : vector<16x27xf32>
    %1340 = arith.addf %1334, %1339 : vector<16x27xf32>
    %1341 = vector.extract_strided_slice %5 {offsets = [0, 7], sizes = [16, 1], strides = [1, 1]} : vector<16x24xf32> to vector<16x1xf32>
    %1342 = vector.extract_strided_slice %1297 {offsets = [7, 0], sizes = [1, 27], strides = [1, 1]} : vector<8x29xf32> to vector<1x27xf32>
    %1343 = vector.broadcast %1341 : vector<16x1xf32> to vector<16x27xf32>
    %1344 = vector.broadcast %1342 : vector<1x27xf32> to vector<16x27xf32>
    %1345 = arith.mulf %1343, %1344 : vector<16x27xf32>
    %1346 = arith.addf %1340, %1345 : vector<16x27xf32>
    %1347 = vector.extract_strided_slice %5 {offsets = [0, 8], sizes = [16, 1], strides = [1, 1]} : vector<16x24xf32> to vector<16x1xf32>
    %1348 = vector.extract_strided_slice %1297 {offsets = [0, 1], sizes = [1, 27], strides = [1, 1]} : vector<8x29xf32> to vector<1x27xf32>
    %1349 = vector.broadcast %1347 : vector<16x1xf32> to vector<16x27xf32>
    %1350 = vector.broadcast %1348 : vector<1x27xf32> to vector<16x27xf32>
    %1351 = arith.mulf %1349, %1350 : vector<16x27xf32>
    %1352 = arith.addf %1346, %1351 : vector<16x27xf32>
    %1353 = vector.extract_strided_slice %5 {offsets = [0, 9], sizes = [16, 1], strides = [1, 1]} : vector<16x24xf32> to vector<16x1xf32>
    %1354 = vector.extract_strided_slice %1297 {offsets = [1, 1], sizes = [1, 27], strides = [1, 1]} : vector<8x29xf32> to vector<1x27xf32>
    %1355 = vector.broadcast %1353 : vector<16x1xf32> to vector<16x27xf32>
    %1356 = vector.broadcast %1354 : vector<1x27xf32> to vector<16x27xf32>
    %1357 = arith.mulf %1355, %1356 : vector<16x27xf32>
    %1358 = arith.addf %1352, %1357 : vector<16x27xf32>
    %1359 = vector.extract_strided_slice %5 {offsets = [0, 10], sizes = [16, 1], strides = [1, 1]} : vector<16x24xf32> to vector<16x1xf32>
    %1360 = vector.extract_strided_slice %1297 {offsets = [2, 1], sizes = [1, 27], strides = [1, 1]} : vector<8x29xf32> to vector<1x27xf32>
    %1361 = vector.broadcast %1359 : vector<16x1xf32> to vector<16x27xf32>
    %1362 = vector.broadcast %1360 : vector<1x27xf32> to vector<16x27xf32>
    %1363 = arith.mulf %1361, %1362 : vector<16x27xf32>
    %1364 = arith.addf %1358, %1363 : vector<16x27xf32>
    %1365 = vector.extract_strided_slice %5 {offsets = [0, 11], sizes = [16, 1], strides = [1, 1]} : vector<16x24xf32> to vector<16x1xf32>
    %1366 = vector.extract_strided_slice %1297 {offsets = [3, 1], sizes = [1, 27], strides = [1, 1]} : vector<8x29xf32> to vector<1x27xf32>
    %1367 = vector.broadcast %1365 : vector<16x1xf32> to vector<16x27xf32>
    %1368 = vector.broadcast %1366 : vector<1x27xf32> to vector<16x27xf32>
    %1369 = arith.mulf %1367, %1368 : vector<16x27xf32>
    %1370 = arith.addf %1364, %1369 : vector<16x27xf32>
    %1371 = vector.extract_strided_slice %5 {offsets = [0, 12], sizes = [16, 1], strides = [1, 1]} : vector<16x24xf32> to vector<16x1xf32>
    %1372 = vector.extract_strided_slice %1297 {offsets = [4, 1], sizes = [1, 27], strides = [1, 1]} : vector<8x29xf32> to vector<1x27xf32>
    %1373 = vector.broadcast %1371 : vector<16x1xf32> to vector<16x27xf32>
    %1374 = vector.broadcast %1372 : vector<1x27xf32> to vector<16x27xf32>
    %1375 = arith.mulf %1373, %1374 : vector<16x27xf32>
    %1376 = arith.addf %1370, %1375 : vector<16x27xf32>
    %1377 = vector.extract_strided_slice %5 {offsets = [0, 13], sizes = [16, 1], strides = [1, 1]} : vector<16x24xf32> to vector<16x1xf32>
    %1378 = vector.extract_strided_slice %1297 {offsets = [5, 1], sizes = [1, 27], strides = [1, 1]} : vector<8x29xf32> to vector<1x27xf32>
    %1379 = vector.broadcast %1377 : vector<16x1xf32> to vector<16x27xf32>
    %1380 = vector.broadcast %1378 : vector<1x27xf32> to vector<16x27xf32>
    %1381 = arith.mulf %1379, %1380 : vector<16x27xf32>
    %1382 = arith.addf %1376, %1381 : vector<16x27xf32>
    %1383 = vector.extract_strided_slice %5 {offsets = [0, 14], sizes = [16, 1], strides = [1, 1]} : vector<16x24xf32> to vector<16x1xf32>
    %1384 = vector.extract_strided_slice %1297 {offsets = [6, 1], sizes = [1, 27], strides = [1, 1]} : vector<8x29xf32> to vector<1x27xf32>
    %1385 = vector.broadcast %1383 : vector<16x1xf32> to vector<16x27xf32>
    %1386 = vector.broadcast %1384 : vector<1x27xf32> to vector<16x27xf32>
    %1387 = arith.mulf %1385, %1386 : vector<16x27xf32>
    %1388 = arith.addf %1382, %1387 : vector<16x27xf32>
    %1389 = vector.extract_strided_slice %5 {offsets = [0, 15], sizes = [16, 1], strides = [1, 1]} : vector<16x24xf32> to vector<16x1xf32>
    %1390 = vector.extract_strided_slice %1297 {offsets = [7, 1], sizes = [1, 27], strides = [1, 1]} : vector<8x29xf32> to vector<1x27xf32>
    %1391 = vector.broadcast %1389 : vector<16x1xf32> to vector<16x27xf32>
    %1392 = vector.broadcast %1390 : vector<1x27xf32> to vector<16x27xf32>
    %1393 = arith.mulf %1391, %1392 : vector<16x27xf32>
    %1394 = arith.addf %1388, %1393 : vector<16x27xf32>
    %1395 = vector.extract_strided_slice %5 {offsets = [0, 16], sizes = [16, 1], strides = [1, 1]} : vector<16x24xf32> to vector<16x1xf32>
    %1396 = vector.extract_strided_slice %1297 {offsets = [0, 2], sizes = [1, 27], strides = [1, 1]} : vector<8x29xf32> to vector<1x27xf32>
    %1397 = vector.broadcast %1395 : vector<16x1xf32> to vector<16x27xf32>
    %1398 = vector.broadcast %1396 : vector<1x27xf32> to vector<16x27xf32>
    %1399 = arith.mulf %1397, %1398 : vector<16x27xf32>
    %1400 = arith.addf %1394, %1399 : vector<16x27xf32>
    %1401 = vector.extract_strided_slice %5 {offsets = [0, 17], sizes = [16, 1], strides = [1, 1]} : vector<16x24xf32> to vector<16x1xf32>
    %1402 = vector.extract_strided_slice %1297 {offsets = [1, 2], sizes = [1, 27], strides = [1, 1]} : vector<8x29xf32> to vector<1x27xf32>
    %1403 = vector.broadcast %1401 : vector<16x1xf32> to vector<16x27xf32>
    %1404 = vector.broadcast %1402 : vector<1x27xf32> to vector<16x27xf32>
    %1405 = arith.mulf %1403, %1404 : vector<16x27xf32>
    %1406 = arith.addf %1400, %1405 : vector<16x27xf32>
    %1407 = vector.extract_strided_slice %5 {offsets = [0, 18], sizes = [16, 1], strides = [1, 1]} : vector<16x24xf32> to vector<16x1xf32>
    %1408 = vector.extract_strided_slice %1297 {offsets = [2, 2], sizes = [1, 27], strides = [1, 1]} : vector<8x29xf32> to vector<1x27xf32>
    %1409 = vector.broadcast %1407 : vector<16x1xf32> to vector<16x27xf32>
    %1410 = vector.broadcast %1408 : vector<1x27xf32> to vector<16x27xf32>
    %1411 = arith.mulf %1409, %1410 : vector<16x27xf32>
    %1412 = arith.addf %1406, %1411 : vector<16x27xf32>
    %1413 = vector.extract_strided_slice %5 {offsets = [0, 19], sizes = [16, 1], strides = [1, 1]} : vector<16x24xf32> to vector<16x1xf32>
    %1414 = vector.extract_strided_slice %1297 {offsets = [3, 2], sizes = [1, 27], strides = [1, 1]} : vector<8x29xf32> to vector<1x27xf32>
    %1415 = vector.broadcast %1413 : vector<16x1xf32> to vector<16x27xf32>
    %1416 = vector.broadcast %1414 : vector<1x27xf32> to vector<16x27xf32>
    %1417 = arith.mulf %1415, %1416 : vector<16x27xf32>
    %1418 = arith.addf %1412, %1417 : vector<16x27xf32>
    %1419 = vector.extract_strided_slice %5 {offsets = [0, 20], sizes = [16, 1], strides = [1, 1]} : vector<16x24xf32> to vector<16x1xf32>
    %1420 = vector.extract_strided_slice %1297 {offsets = [4, 2], sizes = [1, 27], strides = [1, 1]} : vector<8x29xf32> to vector<1x27xf32>
    %1421 = vector.broadcast %1419 : vector<16x1xf32> to vector<16x27xf32>
    %1422 = vector.broadcast %1420 : vector<1x27xf32> to vector<16x27xf32>
    %1423 = arith.mulf %1421, %1422 : vector<16x27xf32>
    %1424 = arith.addf %1418, %1423 : vector<16x27xf32>
    %1425 = vector.extract_strided_slice %5 {offsets = [0, 21], sizes = [16, 1], strides = [1, 1]} : vector<16x24xf32> to vector<16x1xf32>
    %1426 = vector.extract_strided_slice %1297 {offsets = [5, 2], sizes = [1, 27], strides = [1, 1]} : vector<8x29xf32> to vector<1x27xf32>
    %1427 = vector.broadcast %1425 : vector<16x1xf32> to vector<16x27xf32>
    %1428 = vector.broadcast %1426 : vector<1x27xf32> to vector<16x27xf32>
    %1429 = arith.mulf %1427, %1428 : vector<16x27xf32>
    %1430 = arith.addf %1424, %1429 : vector<16x27xf32>
    %1431 = vector.extract_strided_slice %5 {offsets = [0, 22], sizes = [16, 1], strides = [1, 1]} : vector<16x24xf32> to vector<16x1xf32>
    %1432 = vector.extract_strided_slice %1297 {offsets = [6, 2], sizes = [1, 27], strides = [1, 1]} : vector<8x29xf32> to vector<1x27xf32>
    %1433 = vector.broadcast %1431 : vector<16x1xf32> to vector<16x27xf32>
    %1434 = vector.broadcast %1432 : vector<1x27xf32> to vector<16x27xf32>
    %1435 = arith.mulf %1433, %1434 : vector<16x27xf32>
    %1436 = arith.addf %1430, %1435 : vector<16x27xf32>
    %1437 = vector.extract_strided_slice %5 {offsets = [0, 23], sizes = [16, 1], strides = [1, 1]} : vector<16x24xf32> to vector<16x1xf32>
    %1438 = vector.extract_strided_slice %1297 {offsets = [7, 2], sizes = [1, 27], strides = [1, 1]} : vector<8x29xf32> to vector<1x27xf32>
    %1439 = vector.broadcast %1437 : vector<16x1xf32> to vector<16x27xf32>
    %1440 = vector.broadcast %1438 : vector<1x27xf32> to vector<16x27xf32>
    %1441 = arith.mulf %1439, %1440 : vector<16x27xf32>
    %1442 = arith.addf %1436, %1441 : vector<16x27xf32>
    %1443 = vector.broadcast %6 : vector<16x1xf32> to vector<16x27xf32>
    %1444 = arith.mulf %1442, %1443 : vector<16x27xf32>
    %1445 = vector.broadcast %7 : vector<16x1xf32> to vector<16x27xf32>
    %1446 = arith.addf %1444, %1445 : vector<16x27xf32>
    %cst_44 = arith.constant 0.000000e+00 : f32
    %1447 = vector.broadcast %cst_44 : f32 to vector<16x27xf32>
    %1448 = arith.maximumf %1446, %1447 : vector<16x27xf32>
    %c3_45 = arith.constant 3 : index
    %c0_46 = arith.constant 0 : index
    %c0_47 = arith.constant 0 : index
    %1449 = vector.load %arg4[%c3_45, %c0_46, %c0_47] : memref<4x16x27xf32, #tpu.memory_space<vmem>>, vector<1x16x27xf32>
    %1450 = vector.shape_cast %1449 : vector<1x16x27xf32> to vector<16x27xf32>
    %1451 = vector.shape_cast %1448 : vector<16x27xf32> to vector<1x16x27xf32>
    tpu.vector_store %arg4[%c3_45, %c0_46, %c0_47], %1451 {strides = array<i32>} : memref<4x16x27xf32, #tpu.memory_space<vmem>>, vector<1x16x27xf32>,
    return
  }
  func.func @transform_0(%arg0: i32) -> (i32, i32, i32) {
    %c0_i32 = arith.constant 0 : i32
    %c0_i32_0 = arith.constant 0 : i32
    %c0_i32_1 = arith.constant 0 : i32
    return %arg0, %c0_i32, %c0_i32_0 : i32, i32, i32
  }
  func.func @transform_1(%arg0: i32) -> (i32, i32) {
    %c0_i32 = arith.constant 0 : i32
    %c0_i32_0 = arith.constant 0 : i32
    %c0_i32_1 = arith.constant 0 : i32
    return %c0_i32, %c0_i32_0 : i32, i32
  }
  func.func @transform_2(%arg0: i32) -> (i32, i32) {
    %c0_i32 = arith.constant 0 : i32
    %c0_i32_0 = arith.constant 0 : i32
    %c0_i32_1 = arith.constant 0 : i32
    return %c0_i32, %c0_i32_0 : i32, i32
  }
  func.func @transform_3(%arg0: i32) -> (i32, i32, i32) {
    %c0_i32 = arith.constant 0 : i32
    %c0_i32_0 = arith.constant 0 : i32
    %c0_i32_1 = arith.constant 0 : i32
    return %arg0, %c0_i32, %c0_i32_0 : i32, i32, i32
  }
}

</mosaic_0001>

<llo_original>
// kernel: kanres_init_forward.1
$region0: #{kanres_init_forward.1}
  #allocation0 [shape = 'u32[]', space=smem, size = 0x4, offset = 0x4, fixed_abs, tag = 'smem constant byte address 0x4 - core index']
  #allocation1 [shape = 'u32[144,128]{1,0:T(1,128)}', space=vmem, size = 0x12000, scoped, tag = 'internal scratch']
  %s0 = inlined_call_operand.vmem [shape: f32[8,4,64], index: 0, kind: input, shape index: {}]
  %s1 = inlined_call_operand.vmem [shape: f32[8,34], index: 1, kind: input, shape index: {}]
  %s2 = inlined_call_operand.vmem [shape: f32[16,26], index: 2, kind: input, shape index: {}]
  %s3 = inlined_call_operand.hbm [shape: f32[8,16,27], index: 3, kind: output, shape index: {}]
  %s4 = sld [smem:[#allocation0]]
  $region45: #{kanres_init_forward.1} parent=0
    _
  %s6 = ssub.s32 1, %s4
  %s7 = scalar_select 0, %s6, %s4
  $region1: #{kanres_init_forward.1} parent=0
    #allocation2 [shape = 'u8[65536]{0}', space=vmem, size = 0x10000, scoped, tag = 'output window, operand 0']
    #allocation3 [shape = 's32[2]{0}', space=sflag, size = 0x8, scoped, tag = 'scoped memory for kanres_init_forward.1']
    %8 = vsyncpa [#allocation3], 0
    %s9 = scalar_lea.sflag [#allocation3], 1
    %10 = vsyncpa %s9, 0
    loop: start=0, step=1, limit=4
    $region2: #{kanres_init_forward.1} parent=1 // loop_pre_header
      _
    $region3: #{kanres_init_forward.1} parent=1 // loop_header
      %s12 = sphi 0, %s16
      %p13 = scmp.ge.s32.totalorder %s12, 4
      %s22 = sphi 0, %s24
      %s25 = sphi 0, %s22
      %s26 = sphi 0, %s25
      %s42 = sphi 0, %s26
      %s46 = sphi 0, %s46
      %s48 = sphi 0, %s46
      %s49 = sphi 0, %s48
      %s63 = sphi 0, %s49
      %s67 = sphi 0, %s67
      %s69 = sphi 0, %s67
      %s70 = sphi 0, %s69
      %s84 = sphi 0, %s70
      %s90 = sphi 0, %s92
      %s93 = sphi 0, %s90
      %s94 = sphi 0, %s93
      %s110 = sphi 0, %s94
    $region4: #{kanres_init_forward.1} parent=1 // loop_header_branch
      %15 = sbr.rel (%p13) target = $region8
    $region5: #{kanres_init_forward.1} parent=1 // loop_body
      %s17 = ssub.s32 %s12, 1
      %s18 = ssub.s32 %s12, 2
      %s19 = sadd.s32 %s12, 1
      %s20 = ssub.s32 %s12, %s19
      %p21 = scmp.eq.s32.totalorder %s20, 0
      %s23 = sadd.s32 %s22, 1
      %s24 = scalar_select %p21, %s22, %s23
      %p27 = pneg %p21
      %p28 = scmp.eq.s32.totalorder %s12, 1
      %p29 = por %p27, %p28
      %p30 = scmp.ne.s32.totalorder %s22, %s25
      %p31 = scmp.eq.s32.totalorder %s12, 0
      %p32 = por %p30, %p31
      %p33 = scmp.ne.s32.totalorder %s22, %s25
      %p34 = scmp.eq.s32.totalorder %s17, 1
      %p35 = por %p33, %p34
      %p36 = scmp.ne.s32.totalorder %s25, %s26
      %p37 = scmp.eq.s32.totalorder %s17, 0
      %p38 = por %p36, %p37
      %p39 = scmp.ne.s32.totalorder %s25, %s26
      %p40 = scmp.eq.s32.totalorder %s18, 1
      %p41 = por %p39, %p40
      %p43 = scmp.ne.s32.totalorder %s26, %s42
      %p44 = scmp.eq.s32.totalorder %s18, 0
      %p45 = por %p43, %p44
      %s47 = sadd.s32 %s46, 1
      %p50 = scmp.eq.s32.totalorder %s12, 1
      %p51 = scmp.ne.s32.totalorder %s46, %s48
      %p52 = scmp.eq.s32.totalorder %s12, 0
      %p53 = por %p51, %p52
      %p54 = scmp.ne.s32.totalorder %s46, %s48
      %p55 = scmp.eq.s32.totalorder %s17, 1
      %p56 = por %p54, %p55
      %p57 = scmp.ne.s32.totalorder %s48, %s49
      %p58 = scmp.eq.s32.totalorder %s17, 0
      %p59 = por %p57, %p58
      %p60 = scmp.ne.s32.totalorder %s48, %s49
      %p61 = scmp.eq.s32.totalorder %s18, 1
      %p62 = por %p60, %p61
      %p64 = scmp.ne.s32.totalorder %s49, %s63
      %p65 = scmp.eq.s32.totalorder %s18, 0
      %p66 = por %p64, %p65
      %s68 = sadd.s32 %s67, 1
      %p71 = scmp.eq.s32.totalorder %s12, 1
      %p72 = scmp.ne.s32.totalorder %s67, %s69
      %p73 = scmp.eq.s32.totalorder %s12, 0
      %p74 = por %p72, %p73
      %p75 = scmp.ne.s32.totalorder %s67, %s69
      %p76 = scmp.eq.s32.totalorder %s17, 1
      %p77 = por %p75, %p76
      %p78 = scmp.ne.s32.totalorder %s69, %s70
      %p79 = scmp.eq.s32.totalorder %s17, 0
      %p80 = por %p78, %p79
      %p81 = scmp.ne.s32.totalorder %s69, %s70
      %p82 = scmp.eq.s32.totalorder %s18, 1
      %p83 = por %p81, %p82
      %p85 = scmp.ne.s32.totalorder %s70, %s84
      %p86 = scmp.eq.s32.totalorder %s18, 0
      %p87 = por %p85, %p86
      %s88 = ssub.s32 %s12, %s19
      %p89 = scmp.eq.s32.totalorder %s88, 0
      %s91 = sadd.s32 %s90, 1
      %s92 = scalar_select %p89, %s90, %s91
      %p95 = pneg %p89
      %p96 = scmp.eq.s32.totalorder %s12, 1
      %p97 = por %p95, %p96
      %p98 = scmp.ne.s32.totalorder %s90, %s93
      %p99 = scmp.eq.s32.totalorder %s12, 0
      %p100 = por %p98, %p99
      %p101 = scmp.ne.s32.totalorder %s90, %s93
      %p102 = scmp.eq.s32.totalorder %s17, 1
      %p103 = por %p101, %p102
      %p104 = scmp.ne.s32.totalorder %s93, %s94
      %p105 = scmp.eq.s32.totalorder %s17, 0
      %p106 = por %p104, %p105
      %p107 = scmp.ne.s32.totalorder %s93, %s94
      %p108 = scmp.eq.s32.totalorder %s18, 1
      %p109 = por %p107, %p108
      %p111 = scmp.ne.s32.totalorder %s94, %s110
      %p112 = scmp.eq.s32.totalorder %s18, 0
      %p113 = por %p111, %p112
      %p114 = scmp.le.s32.totalorder 1, %s12
      %p115 = scmp.lt.s32.totalorder %s12, 3
      %p116 = pnand %p114, %p115
      %p117 = pneg %p116
      // Predicated region
      $region9: #{kanres_init_forward.1} parent=5 // pred_check
        _
      $region10: #{kanres_init_forward.1} parent=5 // pred_check_branch
        %119 = sbr.rel (%p116) target = $region12
      $region11: #{kanres_init_forward.1} parent=5 // pred_region
        %s120 = ssub.s32 %s12, 1
        // Predicated region
        $region13: #{kanres_init_forward.1} parent=11 // pred_check
          %p121 = pneg %p59
        $region14: #{kanres_init_forward.1} parent=11 // pred_check_branch
          %123 = sbr.rel (%p121) target = $region16
        $region15: #{kanres_init_forward.1} parent=11 // pred_region
          _
        $region16: #{kanres_init_forward.1} parent=11 // pred_fallthru
          _
        // Predicated region
        $region17: #{kanres_init_forward.1} parent=11 // pred_check
          %p124 = pneg %p80
        $region18: #{kanres_init_forward.1} parent=11 // pred_check_branch
          %126 = sbr.rel (%p124) target = $region20
        $region19: #{kanres_init_forward.1} parent=11 // pred_region
          _
        $region20: #{kanres_init_forward.1} parent=11 // pred_fallthru
          _
      $region12: #{kanres_init_forward.1} parent=5 // pred_fallthru
        _
      %p127 = scmp.lt.s32.totalorder %s12, 2
      // Predicated region
      $region21: #{kanres_init_forward.1} parent=5 // pred_check
        %p128 = pneg %p127
      $region22: #{kanres_init_forward.1} parent=5 // pred_check_branch
        %130 = sbr.rel (%p128) target = $region24
      $region23: #{kanres_init_forward.1} parent=5 // pred_region
        // Predicated region
        $region25: #{kanres_init_forward.1} parent=23 // pred_check
          %p131 = pneg %p32
        $region26: #{kanres_init_forward.1} parent=23 // pred_check_branch
          %133 = sbr.rel (%p131) target = $region28
        $region27: #{kanres_init_forward.1} parent=23 // pred_region
          %s134 = smul.u32 4, %s12
          %p135 = scmp.lt.s32.totalorder %s134, 7
          %s136 = scalar_select %p135, %s134, 7
          %s137 = smul.addr %s136, 4
          %s138 = scalar_lea.vmem %s0, %s137
          %s139 = smul.u32 4, %s12
        $region28: #{kanres_init_forward.1} parent=23 // pred_fallthru
          _
      $region24: #{kanres_init_forward.1} parent=5 // pred_fallthru
        _
      %p140 = scmp.le.s32.totalorder 1, %s12
      %p141 = scmp.lt.s32.totalorder %s12, 3
      %p142 = pnand %p140, %p141
      %p143 = pneg %p142
      // Predicated region
      $region29: #{kanres_init_forward.1} parent=5 // pred_check
        _
      $region30: #{kanres_init_forward.1} parent=5 // pred_check_branch
        %145 = sbr.rel (%p142) target = $region32
      $region31: #{kanres_init_forward.1} parent=5 // pred_region
        %s146 = ssub.s32 %s12, 1
        %s147 = smul.u32 4, %s17
        %p148 = scmp.lt.s32.totalorder %s147, 7
        %s149 = scalar_select %p148, %s147, 7
        %s150 = smul.addr %s149, 4
        %s151 = scalar_lea.vmem %s0, %s150
        %p152 = pneg %p38
        %p153 = pneg %p35
        %p154 = pneg %p59
        %p155 = pneg %p56
        %p156 = pneg %p80
        %p157 = pneg %p77
        %p158 = pneg %p106
        %p159 = pneg %p103
        %s160 = sand.u32 %s93, 1
        %s161 = scalar_lea.sflag [#allocation3], %s160
        %s162 = sand.u32 %s93, 1
        %s163 = smul.addr %s162, 64
        %s164 = scalar_lea.vmem [#allocation2], %s163
        %s165 = smul.u32 4, %s17
        %p166 = scmp.lt.s32.totalorder %s165, 7
        %s167 = scalar_select %p166, %s165, 7
        %s168 = smul.addr %s167, 4
        %s169 = scalar_lea.vmem %s0, %s168
        %s170 = smul.u32 4, %s17
        %s171 = smul.u32 4, %s17
        %v172 = vld [vmem:[%s1] sm:$0xff]
        %v173 = vld [vmem:[%s2] sm:$0xff]
        %v174 = vld [vmem:[%s2 + $0x8] sm:$0xff]
        %v175 = vlaneseq
        %v176 = vshrl.u32 %v175, 7
        %v177 = vadd.s32 %v176, 8
        %v178 = vadd.s32 %v176, 16
        %v179 = vadd.s32 %v176, 24
        %v180 = vadd.s32 %v176, 32
        %v181 = vadd.s32 %v176, 40
        %v182 = vadd.s32 %v176, 48
        %v183 = vadd.s32 %v176, 56
        %v184 = vlaneseq
        %v185 = vand.u32 %v184, 127
        %v186 = vmul.u32 %v185, 2
        %vm187 = vcmp.eq.s32.totalorder %v176, %v186
        %vm188 = vcmp.eq.s32.totalorder %v177, %v186
        %vm189 = vcmp.eq.s32.totalorder %v178, %v186
        %vm190 = vcmp.eq.s32.totalorder %v179, %v186
        %vm191 = vcmp.eq.s32.totalorder %v180, %v186
        %vm192 = vcmp.eq.s32.totalorder %v181, %v186
        %vm193 = vcmp.eq.s32.totalorder %v182, %v186
        %vm194 = vcmp.eq.s32.totalorder %v183, %v186
        %v195 = vsel %vm187, 1, 0
        %v196 = vsel %vm188, 1, 0
        %v197 = vsel %vm189, 1, 0
        %v198 = vsel %vm190, 1, 0
        %v199 = vsel %vm191, 1, 0
        %v200 = vsel %vm192, 1, 0
        %v201 = vsel %vm193, 1, 0
        %v202 = vsel %vm194, 1, 0
        %v203 = vcvt.s32.f32 %v195
        %v204 = vcvt.s32.f32 %v196
        %v205 = vcvt.s32.f32 %v197
        %v206 = vcvt.s32.f32 %v198
        %v207 = vcvt.s32.f32 %v199
        %v208 = vcvt.s32.f32 %v200
        %v209 = vcvt.s32.f32 %v201
        %v210 = vcvt.s32.f32 %v202
        %v211 = vadd.s32 %v186, 1
        %vm212 = vcmp.eq.s32.totalorder %v176, %v211
        %vm213 = vcmp.eq.s32.totalorder %v177, %v211
        %vm214 = vcmp.eq.s32.totalorder %v178, %v211
        %vm215 = vcmp.eq.s32.totalorder %v179, %v211
        %vm216 = vcmp.eq.s32.totalorder %v180, %v211
        %vm217 = vcmp.eq.s32.totalorder %v181, %v211
        %vm218 = vcmp.eq.s32.totalorder %v182, %v211
        %vm219 = vcmp.eq.s32.totalorder %v183, %v211
        %v220 = vsel %vm212, 1, 0
        %v221 = vsel %vm213, 1, 0
        %v222 = vsel %vm214, 1, 0
        %v223 = vsel %vm215, 1, 0
        %v224 = vsel %vm216, 1, 0
        %v225 = vsel %vm217, 1, 0
        %v226 = vsel %vm218, 1, 0
        %v227 = vsel %vm219, 1, 0
        %v228 = vcvt.s32.f32 %v220
        %v229 = vcvt.s32.f32 %v221
        %v230 = vcvt.s32.f32 %v222
        %v231 = vcvt.s32.f32 %v223
        %v232 = vcvt.s32.f32 %v224
        %v233 = vcvt.s32.f32 %v225
        %v234 = vcvt.s32.f32 %v226
        %v235 = vcvt.s32.f32 %v227
        %v236 = vld [vmem:[%s169] sm:$0xf]
        %vm237 = vcmask 523264
        %v239 = vsel %vm237, %v236, 0
        %241 = vmatprep.subr.mxu0 0.0
        %242 = vmatpush1.msra.mxu0 %v203
        %243 = vmatprep.subr.mxu0 0.0
        %244 = vmatpush1.msra.mxu0 %v204
        %245 = vmatprep.subr.mxu0 0.0
        %246 = vmatpush1.msra.mxu0 %v205
        %247 = vmatprep.subr.mxu0 0.0
        %248 = vmatpush1.msra.mxu0 %v206
        %249 = vmatprep.subr.mxu0 0.0
        %250 = vmatpush1.msra.mxu0 %v207
        %251 = vmatprep.subr.mxu0 0.0
        %252 = vmatpush1.msra.mxu0 %v208
        %253 = vmatprep.subr.mxu0 0.0
        %254 = vmatpush1.msra.mxu0 %v209
        %255 = vmatprep.subr.mxu0 0.0
        %256 = vmatpush1.msra.mxu0 %v210
        %257 = vmatprep.subr.mxu0 0.0
        %258 = vmatpush1.msra.mxu0 0.0
        %259 = vmatprep.subr.mxu0 0.0
        %260 = vmatpush1.msra.mxu0 0.0
        %261 = vmatprep.subr.mxu0 0.0
        %262 = vmatpush1.msra.mxu0 0.0
        %263 = vmatprep.subr.mxu0 0.0
        %264 = vmatpush1.msra.mxu0 0.0
        %265 = vmatprep.subr.mxu0 0.0
        %266 = vmatpush1.msra.mxu0 0.0
        %267 = vmatprep.subr.mxu0 0.0
        %268 = vmatpush1.msra.mxu0 0.0
        %269 = vmatprep.subr.mxu0 0.0
        %270 = vmatpush1.msra.mxu0 0.0
        %271 = vmatprep.subr.mxu0 0.0
        %272 = vmatpush1.msra.mxu0 0.0
        %273 = vmatprep.subr.mxu0 0.0
        %274 = vmatpush1.msra.mxu0 0.0
        %275 = vmatprep.subr.mxu0 0.0
        %276 = vmatpush1.msra.mxu0 0.0
        %277 = vmatprep.subr.mxu0 0.0
        %278 = vmatpush1.msra.mxu0 0.0
        %279 = vmatprep.subr.mxu0 0.0
        %280 = vmatpush1.msra.mxu0 0.0
        %281 = vmatprep.subr.mxu0 0.0
        %282 = vmatpush1.msra.mxu0 0.0
        %283 = vmatprep.subr.mxu0 0.0
        %284 = vmatpush1.msra.mxu0 0.0
        %285 = vmatprep.subr.mxu0 0.0
        %286 = vmatpush1.msra.mxu0 0.0
        %287 = vmatprep.subr.mxu0 0.0
        %288 = vmatpush1.msra.mxu0 0.0
        %289 = vmatprep.subr.mxu0 0.0
        %290 = vmatpush1.msra.mxu0 0.0
        %291 = vmatprep.subr.mxu0 0.0
        %292 = vmatpush1.msra.mxu0 0.0
        %293 = vmatprep.subr.mxu0 0.0
        %294 = vmatpush1.msra.mxu0 0.0
        %295 = vmatprep.subr.mxu0 0.0
        %296 = vmatpush1.msra.mxu0 0.0
        %297 = vmatprep.subr.mxu0 0.0
        %298 = vmatpush1.msra.mxu0 0.0
        %299 = vmatprep.subr.mxu0 0.0
        %300 = vmatpush1.msra.mxu0 0.0
        %301 = vmatprep.subr.mxu0 0.0
        %302 = vmatpush1.msra.mxu0 0.0
        %303 = vmatprep.subr.mxu0 0.0
        %304 = vmatpush1.msra.mxu0 0.0
        %305 = vmatprep.mubr.f32.mxu0 0.0
        %306 = vmatmul.mubr.f32.gmra.mrb[0].mxu0 %v239
        %v307 = vpop.f32.mrb[0].mxu0
        %v308 = vadd.f32 0.0, %v307
        %v309 = vpop.f32.mrb[0].mxu0
        %310 = vdwg.mxu0
        %311 = vmatprep.subr.mxu0 0.0
        %312 = vmatpush1.msra.mxu0 %v228
        %313 = vmatprep.subr.mxu0 0.0
        %314 = vmatpush1.msra.mxu0 %v229
        %315 = vmatprep.subr.mxu0 0.0
        %316 = vmatpush1.msra.mxu0 %v230
        %317 = vmatprep.subr.mxu0 0.0
        %318 = vmatpush1.msra.mxu0 %v231
        %319 = vmatprep.subr.mxu0 0.0
        %320 = vmatpush1.msra.mxu0 %v232
        %321 = vmatprep.subr.mxu0 0.0
        %322 = vmatpush1.msra.mxu0 %v233
        %323 = vmatprep.subr.mxu0 0.0
        %324 = vmatpush1.msra.mxu0 %v234
        %325 = vmatprep.subr.mxu0 0.0
        %326 = vmatpush1.msra.mxu0 %v235
        %327 = vmatprep.subr.mxu0 0.0
        %328 = vmatpush1.msra.mxu0 0.0
        %329 = vmatprep.subr.mxu0 0.0
        %330 = vmatpush1.msra.mxu0 0.0
        %331 = vmatprep.subr.mxu0 0.0
        %332 = vmatpush1.msra.mxu0 0.0
        %333 = vmatprep.subr.mxu0 0.0
        %334 = vmatpush1.msra.mxu0 0.0
        %335 = vmatprep.subr.mxu0 0.0
        %336 = vmatpush1.msra.mxu0 0.0
        %337 = vmatprep.subr.mxu0 0.0
        %338 = vmatpush1.msra.mxu0 0.0
        %339 = vmatprep.subr.mxu0 0.0
        %340 = vmatpush1.msra.mxu0 0.0
        %341 = vmatprep.subr.mxu0 0.0
        %342 = vmatpush1.msra.mxu0 0.0
        %343 = vmatprep.subr.mxu0 0.0
        %344 = vmatpush1.msra.mxu0 0.0
        %345 = vmatprep.subr.mxu0 0.0
        %346 = vmatpush1.msra.mxu0 0.0
        %347 = vmatprep.subr.mxu0 0.0
        %348 = vmatpush1.msra.mxu0 0.0
        %349 = vmatprep.subr.mxu0 0.0
        %350 = vmatpush1.msra.mxu0 0.0
        %351 = vmatprep.subr.mxu0 0.0
        %352 = vmatpush1.msra.mxu0 0.0
        %353 = vmatprep.subr.mxu0 0.0
        %354 = vmatpush1.msra.mxu0 0.0
        %355 = vmatprep.subr.mxu0 0.0
        %356 = vmatpush1.msra.mxu0 0.0
        %357 = vmatprep.subr.mxu0 0.0
        %358 = vmatpush1.msra.mxu0 0.0
        %359 = vmatprep.subr.mxu0 0.0
        %360 = vmatpush1.msra.mxu0 0.0
        %361 = vmatprep.subr.mxu0 0.0
        %362 = vmatpush1.msra.mxu0 0.0
        %363 = vmatprep.subr.mxu0 0.0
        %364 = vmatpush1.msra.mxu0 0.0
        %365 = vmatprep.subr.mxu0 0.0
        %366 = vmatpush1.msra.mxu0 0.0
        %367 = vmatprep.subr.mxu0 0.0
        %368 = vmatpush1.msra.mxu0 0.0
        %369 = vmatprep.subr.mxu0 0.0
        %370 = vmatpush1.msra.mxu0 0.0
        %371 = vmatprep.subr.mxu0 0.0
        %372 = vmatpush1.msra.mxu0 0.0
        %373 = vmatprep.subr.mxu0 0.0
        %374 = vmatpush1.msra.mxu0 0.0
        %375 = vmatprep.mubr.f32.mxu0 0.0
        %376 = vmatmul.mubr.f32.gmra.mrb[0].mxu0 %v239
        %v377 = vpop.f32.mrb[0].mxu0
        %v378 = vadd.f32 0.0, %v377
        %v379 = vpop.f32.mrb[0].mxu0
        %380 = vdwg.mxu0
        %382 = vset.pattern.permute.xlu0 0
        %383 = vperm.xlu0 %382, %v172
        %v384 = vpop.permute.xlu0 %383
        %v386 = vlaneseq
        %v387 = vshrl.u32 %v386, 7
        %v388 = vsub.s32 0, %v387
        %v389 = vrot.slane %v308, %v388
        %v390 = vmul.f32 %v384, %v389
        %v391 = vadd.f32 %v390, 0.0
        %392 = vset.pattern.permute.xlu0 1
        %393 = vperm.xlu0 %392, %v172
        %v394 = vpop.permute.xlu0 %393
        %v396 = vlaneseq
        %v397 = vshrl.u32 %v396, 7
        %v398 = vsub.s32 1, %v397
        %v399 = vrot.slane %v308, %v398
        %v400 = vmul.f32 %v394, %v399
        %v401 = vadd.f32 %v391, %v400
        %402 = vset.pattern.permute.xlu0 2
        %403 = vperm.xlu0 %402, %v172
        %v404 = vpop.permute.xlu0 %403
        %v406 = vlaneseq
        %v407 = vshrl.u32 %v406, 7
        %v408 = vsub.s32 2, %v407
        %v409 = vrot.slane %v308, %v408
        %v410 = vmul.f32 %v404, %v409
        %v411 = vadd.f32 %v401, %v410
        %412 = vset.pattern.permute.xlu0 3
        %413 = vperm.xlu0 %412, %v172
        %v414 = vpop.permute.xlu0 %413
        %v416 = vlaneseq
        %v417 = vshrl.u32 %v416, 7
        %v418 = vsub.s32 3, %v417
        %v419 = vrot.slane %v308, %v418
        %v420 = vmul.f32 %v414, %v419
        %v421 = vadd.f32 %v411, %v420
        %422 = vset.pattern.permute.xlu0 4
        %423 = vperm.xlu0 %422, %v172
        %v424 = vpop.permute.xlu0 %423
        %v426 = vlaneseq
        %v427 = vshrl.u32 %v426, 7
        %v428 = vsub.s32 0, %v427
        %v429 = vrot.slane %v378, %v428
        %v430 = vmul.f32 %v424, %v429
        %v431 = vadd.f32 %v421, %v430
        %432 = vset.pattern.permute.xlu0 5
        %433 = vperm.xlu0 %432, %v172
        %v434 = vpop.permute.xlu0 %433
        %v436 = vlaneseq
        %v437 = vshrl.u32 %v436, 7
        %v438 = vsub.s32 1, %v437
        %v439 = vrot.slane %v378, %v438
        %v440 = vmul.f32 %v434, %v439
        %v441 = vadd.f32 %v431, %v440
        %442 = vset.pattern.permute.xlu0 6
        %443 = vperm.xlu0 %442, %v172
        %v444 = vpop.permute.xlu0 %443
        %v446 = vlaneseq
        %v447 = vshrl.u32 %v446, 7
        %v448 = vsub.s32 2, %v447
        %v449 = vrot.slane %v378, %v448
        %v450 = vmul.f32 %v444, %v449
        %v451 = vadd.f32 %v441, %v450
        %452 = vset.pattern.permute.xlu0 7
        %453 = vperm.xlu0 %452, %v172
        %v454 = vpop.permute.xlu0 %453
        %v456 = vlaneseq
        %v457 = vshrl.u32 %v456, 7
        %v458 = vsub.s32 3, %v457
        %v459 = vrot.slane %v378, %v458
        %v460 = vmul.f32 %v454, %v459
        %v461 = vadd.f32 %v451, %v460
        %462 = vset.pattern.permute.xlu0 8
        %463 = vperm.xlu0 %462, %v172
        %v464 = vpop.permute.xlu0 %463
        %v466 = vmul.f32 %v464, %v389
        %468 = vrot.lane.b32.xlu0 %v466, 127
        %v469 = vpop.permute.xlu0 %468
        %v471 = vadd.f32 %v461, %v469
        %472 = vset.pattern.permute.xlu0 9
        %473 = vperm.xlu0 %472, %v172
        %v474 = vpop.permute.xlu0 %473
        %v476 = vmul.f32 %v474, %v399
        %478 = vrot.lane.b32.xlu0 %v476, 127
        %v479 = vpop.permute.xlu0 %478
        %v481 = vadd.f32 %v471, %v479
        %482 = vset.pattern.permute.xlu0 10
        %483 = vperm.xlu0 %482, %v172
        %v484 = vpop.permute.xlu0 %483
        %v486 = vmul.f32 %v484, %v409
        %488 = vrot.lane.b32.xlu0 %v486, 127
        %v489 = vpop.permute.xlu0 %488
        %v491 = vadd.f32 %v481, %v489
        %492 = vset.pattern.permute.xlu0 11
        %493 = vperm.xlu0 %492, %v172
        %v494 = vpop.permute.xlu0 %493
        %v496 = vmul.f32 %v494, %v419
        %498 = vrot.lane.b32.xlu0 %v496, 127
        %v499 = vpop.permute.xlu0 %498
        %v501 = vadd.f32 %v491, %v499
        %502 = vset.pattern.permute.xlu0 12
        %503 = vperm.xlu0 %502, %v172
        %v504 = vpop.permute.xlu0 %503
        %v506 = vmul.f32 %v504, %v429
        %508 = vrot.lane.b32.xlu0 %v506, 127
        %v509 = vpop.permute.xlu0 %508
        %v511 = vadd.f32 %v501, %v509
        %512 = vset.pattern.permute.xlu0 13
        %513 = vperm.xlu0 %512, %v172
        %v514 = vpop.permute.xlu0 %513
        %v516 = vmul.f32 %v514, %v439
        %518 = vrot.lane.b32.xlu0 %v516, 127
        %v519 = vpop.permute.xlu0 %518
        %v521 = vadd.f32 %v511, %v519
        %522 = vset.pattern.permute.xlu0 14
        %523 = vperm.xlu0 %522, %v172
        %v524 = vpop.permute.xlu0 %523
        %v526 = vmul.f32 %v524, %v449
        %528 = vrot.lane.b32.xlu0 %v526, 127
        %v529 = vpop.permute.xlu0 %528
        %v531 = vadd.f32 %v521, %v529
        %532 = vset.pattern.permute.xlu0 15
        %533 = vperm.xlu0 %532, %v172
        %v534 = vpop.permute.xlu0 %533
        %v536 = vmul.f32 %v534, %v459
        %538 = vrot.lane.b32.xlu0 %v536, 127
        %v539 = vpop.permute.xlu0 %538
        %v541 = vadd.f32 %v531, %v539
        %542 = vset.pattern.permute.xlu0 16
        %543 = vperm.xlu0 %542, %v172
        %v544 = vpop.permute.xlu0 %543
        %v546 = vmul.f32 %v544, %v389
        %548 = vrot.lane.b32.xlu0 %v546, 126
        %v549 = vpop.permute.xlu0 %548
        %v551 = vadd.f32 %v541, %v549
        %552 = vset.pattern.permute.xlu0 17
        %553 = vperm.xlu0 %552, %v172
        %v554 = vpop.permute.xlu0 %553
        %v556 = vmul.f32 %v554, %v399
        %558 = vrot.lane.b32.xlu0 %v556, 126
        %v559 = vpop.permute.xlu0 %558
        %v561 = vadd.f32 %v551, %v559
        %562 = vset.pattern.permute.xlu0 18
        %563 = vperm.xlu0 %562, %v172
        %v564 = vpop.permute.xlu0 %563
        %v566 = vmul.f32 %v564, %v409
        %568 = vrot.lane.b32.xlu0 %v566, 126
        %v569 = vpop.permute.xlu0 %568
        %v571 = vadd.f32 %v561, %v569
        %572 = vset.pattern.permute.xlu0 19
        %573 = vperm.xlu0 %572, %v172
        %v574 = vpop.permute.xlu0 %573
        %v576 = vmul.f32 %v574, %v419
        %578 = vrot.lane.b32.xlu0 %v576, 126
        %v579 = vpop.permute.xlu0 %578
        %v581 = vadd.f32 %v571, %v579
        %582 = vset.pattern.permute.xlu0 20
        %583 = vperm.xlu0 %582, %v172
        %v584 = vpop.permute.xlu0 %583
        %v586 = vmul.f32 %v584, %v429
        %588 = vrot.lane.b32.xlu0 %v586, 126
        %v589 = vpop.permute.xlu0 %588
        %v591 = vadd.f32 %v581, %v589
        %592 = vset.pattern.permute.xlu0 21
        %593 = vperm.xlu0 %592, %v172
        %v594 = vpop.permute.xlu0 %593
        %v596 = vmul.f32 %v594, %v439
        %598 = vrot.lane.b32.xlu0 %v596, 126
        %v599 = vpop.permute.xlu0 %598
        %v601 = vadd.f32 %v591, %v599
        %602 = vset.pattern.permute.xlu0 22
        %603 = vperm.xlu0 %602, %v172
        %v604 = vpop.permute.xlu0 %603
        %v606 = vmul.f32 %v604, %v449
        %608 = vrot.lane.b32.xlu0 %v606, 126
        %v609 = vpop.permute.xlu0 %608
        %v611 = vadd.f32 %v601, %v609
        %612 = vset.pattern.permute.xlu0 23
        %613 = vperm.xlu0 %612, %v172
        %v614 = vpop.permute.xlu0 %613
        %v616 = vmul.f32 %v614, %v459
        %618 = vrot.lane.b32.xlu0 %v616, 126
        %v619 = vpop.permute.xlu0 %618
        %v621 = vadd.f32 %v611, %v619
        %622 = vset.pattern.permute.xlu0 24
        %623 = vperm.xlu0 %622, %v172
        %v624 = vpop.permute.xlu0 %623
        %v626 = vmul.f32 %v624, %v389
        %628 = vrot.lane.b32.xlu0 %v626, 125
        %v629 = vpop.permute.xlu0 %628
        %v631 = vadd.f32 %v621, %v629
        %632 = vset.pattern.permute.xlu0 25
        %633 = vperm.xlu0 %632, %v172
        %v634 = vpop.permute.xlu0 %633
        %v636 = vmul.f32 %v634, %v399
        %638 = vrot.lane.b32.xlu0 %v636, 125
        %v639 = vpop.permute.xlu0 %638
        %v641 = vadd.f32 %v631, %v639
        %642 = vset.pattern.permute.xlu0 26
        %643 = vperm.xlu0 %642, %v172
        %v644 = vpop.permute.xlu0 %643
        %v646 = vmul.f32 %v644, %v409
        %648 = vrot.lane.b32.xlu0 %v646, 125
        %v649 = vpop.permute.xlu0 %648
        %v651 = vadd.f32 %v641, %v649
        %652 = vset.pattern.permute.xlu0 27
        %653 = vperm.xlu0 %652, %v172
        %v654 = vpop.permute.xlu0 %653
        %v656 = vmul.f32 %v654, %v419
        %658 = vrot.lane.b32.xlu0 %v656, 125
        %v659 = vpop.permute.xlu0 %658
        %v661 = vadd.f32 %v651, %v659
        %662 = vset.pattern.permute.xlu0 28
        %663 = vperm.xlu0 %662, %v172
        %v664 = vpop.permute.xlu0 %663
        %v666 = vmul.f32 %v664, %v429
        %668 = vrot.lane.b32.xlu0 %v666, 125
        %v669 = vpop.permute.xlu0 %668
        %v671 = vadd.f32 %v661, %v669
        %672 = vset.pattern.permute.xlu0 29
        %673 = vperm.xlu0 %672, %v172
        %v674 = vpop.permute.xlu0 %673
        %v676 = vmul.f32 %v674, %v439
        %678 = vrot.lane.b32.xlu0 %v676, 125
        %v679 = vpop.permute.xlu0 %678
        %v681 = vadd.f32 %v671, %v679
        %682 = vset.pattern.permute.xlu0 30
        %683 = vperm.xlu0 %682, %v172
        %v684 = vpop.permute.xlu0 %683
        %v686 = vmul.f32 %v684, %v449
        %688 = vrot.lane.b32.xlu0 %v686, 125
        %v689 = vpop.permute.xlu0 %688
        %v691 = vadd.f32 %v681, %v689
        %692 = vset.pattern.permute.xlu0 31
        %693 = vperm.xlu0 %692, %v172
        %v694 = vpop.permute.xlu0 %693
        %v696 = vmul.f32 %v694, %v459
        %698 = vrot.lane.b32.xlu0 %v696, 125
        %v699 = vpop.permute.xlu0 %698
        %v701 = vadd.f32 %v691, %v699
        %702 = vset.pattern.permute.xlu0 32
        %703 = vperm.xlu0 %702, %v172
        %v704 = vpop.permute.xlu0 %703
        %v706 = vmul.f32 %v701, %v704
        %707 = vset.pattern.permute.xlu0 33
        %708 = vperm.xlu0 %707, %v172
        %v709 = vpop.permute.xlu0 %708
        %v711 = vadd.f32 %v706, %v709
        %v712 = vmax.f32 %v711, 0.0
        %714 = vset.pattern.permute.xlu0 0
        %715 = vperm.xlu0 %714, %v173
        %v716 = vpop.permute.xlu0 %715
        %719 = vset.pattern.permute.xlu0 0
        %720 = vperm.xlu0 %719, %v174
        %v721 = vpop.permute.xlu0 %720
        %v723 = vlaneseq
        %v724 = vshrl.u32 %v723, 7
        %v725 = vsub.s32 0, %v724
        %v726 = vrot.slane %v712, %v725
        %v727 = vmul.f32 %v716, %v726
        %v728 = vmul.f32 %v721, %v726
        %v729 = vadd.f32 %v727, 0.0
        %v730 = vadd.f32 %v728, 0.0
        %731 = vset.pattern.permute.xlu0 1
        %732 = vperm.xlu0 %731, %v173
        %v733 = vpop.permute.xlu0 %732
        %735 = vset.pattern.permute.xlu0 1
        %736 = vperm.xlu0 %735, %v174
        %v737 = vpop.permute.xlu0 %736
        %v739 = vlaneseq
        %v740 = vshrl.u32 %v739, 7
        %v741 = vsub.s32 1, %v740
        %v742 = vrot.slane %v712, %v741
        %v743 = vmul.f32 %v733, %v742
        %v744 = vmul.f32 %v737, %v742
        %v745 = vadd.f32 %v729, %v743
        %v746 = vadd.f32 %v730, %v744
        %747 = vset.pattern.permute.xlu0 2
        %748 = vperm.xlu0 %747, %v173
        %v749 = vpop.permute.xlu0 %748
        %751 = vset.pattern.permute.xlu0 2
        %752 = vperm.xlu0 %751, %v174
        %v753 = vpop.permute.xlu0 %752
        %v755 = vlaneseq
        %v756 = vshrl.u32 %v755, 7
        %v757 = vsub.s32 2, %v756
        %v758 = vrot.slane %v712, %v757
        %v759 = vmul.f32 %v749, %v758
        %v760 = vmul.f32 %v753, %v758
        %v761 = vadd.f32 %v745, %v759
        %v762 = vadd.f32 %v746, %v760
        %763 = vset.pattern.permute.xlu0 3
        %764 = vperm.xlu0 %763, %v173
        %v765 = vpop.permute.xlu0 %764
        %767 = vset.pattern.permute.xlu0 3
        %768 = vperm.xlu0 %767, %v174
        %v769 = vpop.permute.xlu0 %768
        %v771 = vlaneseq
        %v772 = vshrl.u32 %v771, 7
        %v773 = vsub.s32 3, %v772
        %v774 = vrot.slane %v712, %v773
        %v775 = vmul.f32 %v765, %v774
        %v776 = vmul.f32 %v769, %v774
        %v777 = vadd.f32 %v761, %v775
        %v778 = vadd.f32 %v762, %v776
        %779 = vset.pattern.permute.xlu0 4
        %780 = vperm.xlu0 %779, %v173
        %v781 = vpop.permute.xlu0 %780
        %783 = vset.pattern.permute.xlu0 4
        %784 = vperm.xlu0 %783, %v174
        %v785 = vpop.permute.xlu0 %784
        %v787 = vlaneseq
        %v788 = vshrl.u32 %v787, 7
        %v789 = vsub.s32 4, %v788
        %v790 = vrot.slane %v712, %v789
        %v791 = vmul.f32 %v781, %v790
        %v792 = vmul.f32 %v785, %v790
        %v793 = vadd.f32 %v777, %v791
        %v794 = vadd.f32 %v778, %v792
        %795 = vset.pattern.permute.xlu0 5
        %796 = vperm.xlu0 %795, %v173
        %v797 = vpop.permute.xlu0 %796
        %799 = vset.pattern.permute.xlu0 5
        %800 = vperm.xlu0 %799, %v174
        %v801 = vpop.permute.xlu0 %800
        %v803 = vlaneseq
        %v804 = vshrl.u32 %v803, 7
        %v805 = vsub.s32 5, %v804
        %v806 = vrot.slane %v712, %v805
        %v807 = vmul.f32 %v797, %v806
        %v808 = vmul.f32 %v801, %v806
        %v809 = vadd.f32 %v793, %v807
        %v810 = vadd.f32 %v794, %v808
        %811 = vset.pattern.permute.xlu0 6
        %812 = vperm.xlu0 %811, %v173
        %v813 = vpop.permute.xlu0 %812
        %815 = vset.pattern.permute.xlu0 6
        %816 = vperm.xlu0 %815, %v174
        %v817 = vpop.permute.xlu0 %816
        %v819 = vlaneseq
        %v820 = vshrl.u32 %v819, 7
        %v821 = vsub.s32 6, %v820
        %v822 = vrot.slane %v712, %v821
        %v823 = vmul.f32 %v813, %v822
        %v824 = vmul.f32 %v817, %v822
        %v825 = vadd.f32 %v809, %v823
        %v826 = vadd.f32 %v810, %v824
        %827 = vset.pattern.permute.xlu0 7
        %828 = vperm.xlu0 %827, %v173
        %v829 = vpop.permute.xlu0 %828
        %831 = vset.pattern.permute.xlu0 7
        %832 = vperm.xlu0 %831, %v174
        %v833 = vpop.permute.xlu0 %832
        %v835 = vlaneseq
        %v836 = vshrl.u32 %v835, 7
        %v837 = vsub.s32 7, %v836
        %v838 = vrot.slane %v712, %v837
        %v839 = vmul.f32 %v829, %v838
        %v840 = vmul.f32 %v833, %v838
        %v841 = vadd.f32 %v825, %v839
        %v842 = vadd.f32 %v826, %v840
        %843 = vset.pattern.permute.xlu0 8
        %844 = vperm.xlu0 %843, %v173
        %v845 = vpop.permute.xlu0 %844
        %847 = vset.pattern.permute.xlu0 8
        %848 = vperm.xlu0 %847, %v174
        %v849 = vpop.permute.xlu0 %848
        %v851 = vmul.f32 %v845, %v726
        %v852 = vmul.f32 %v849, %v726
        %855 = vrot.lane.b32.xlu0 %v851, 127
        %v856 = vpop.permute.xlu0 %855
        %857 = vrot.lane.b32.xlu0 %v852, 127
        %v858 = vpop.permute.xlu0 %857
        %v861 = vadd.f32 %v841, %v856
        %v862 = vadd.f32 %v842, %v858
        %863 = vset.pattern.permute.xlu0 9
        %864 = vperm.xlu0 %863, %v173
        %v865 = vpop.permute.xlu0 %864
        %867 = vset.pattern.permute.xlu0 9
        %868 = vperm.xlu0 %867, %v174
        %v869 = vpop.permute.xlu0 %868
        %v871 = vmul.f32 %v865, %v742
        %v872 = vmul.f32 %v869, %v742
        %875 = vrot.lane.b32.xlu0 %v871, 127
        %v876 = vpop.permute.xlu0 %875
        %877 = vrot.lane.b32.xlu0 %v872, 127
        %v878 = vpop.permute.xlu0 %877
        %v881 = vadd.f32 %v861, %v876
        %v882 = vadd.f32 %v862, %v878
        %883 = vset.pattern.permute.xlu0 10
        %884 = vperm.xlu0 %883, %v173
        %v885 = vpop.permute.xlu0 %884
        %887 = vset.pattern.permute.xlu0 10
        %888 = vperm.xlu0 %887, %v174
        %v889 = vpop.permute.xlu0 %888
        %v891 = vmul.f32 %v885, %v758
        %v892 = vmul.f32 %v889, %v758
        %895 = vrot.lane.b32.xlu0 %v891, 127
        %v896 = vpop.permute.xlu0 %895
        %897 = vrot.lane.b32.xlu0 %v892, 127
        %v898 = vpop.permute.xlu0 %897
        %v901 = vadd.f32 %v881, %v896
        %v902 = vadd.f32 %v882, %v898
        %903 = vset.pattern.permute.xlu0 11
        %904 = vperm.xlu0 %903, %v173
        %v905 = vpop.permute.xlu0 %904
        %907 = vset.pattern.permute.xlu0 11
        %908 = vperm.xlu0 %907, %v174
        %v909 = vpop.permute.xlu0 %908
        %v911 = vmul.f32 %v905, %v774
        %v912 = vmul.f32 %v909, %v774
        %915 = vrot.lane.b32.xlu0 %v911, 127
        %v916 = vpop.permute.xlu0 %915
        %917 = vrot.lane.b32.xlu0 %v912, 127
        %v918 = vpop.permute.xlu0 %917
        %v921 = vadd.f32 %v901, %v916
        %v922 = vadd.f32 %v902, %v918
        %923 = vset.pattern.permute.xlu0 12
        %924 = vperm.xlu0 %923, %v173
        %v925 = vpop.permute.xlu0 %924
        %927 = vset.pattern.permute.xlu0 12
        %928 = vperm.xlu0 %927, %v174
        %v929 = vpop.permute.xlu0 %928
        %v931 = vmul.f32 %v925, %v790
        %v932 = vmul.f32 %v929, %v790
        %935 = vrot.lane.b32.xlu0 %v931, 127
        %v936 = vpop.permute.xlu0 %935
        %937 = vrot.lane.b32.xlu0 %v932, 127
        %v938 = vpop.permute.xlu0 %937
        %v941 = vadd.f32 %v921, %v936
        %v942 = vadd.f32 %v922, %v938
        %943 = vset.pattern.permute.xlu0 13
        %944 = vperm.xlu0 %943, %v173
        %v945 = vpop.permute.xlu0 %944
        %947 = vset.pattern.permute.xlu0 13
        %948 = vperm.xlu0 %947, %v174
        %v949 = vpop.permute.xlu0 %948
        %v951 = vmul.f32 %v945, %v806
        %v952 = vmul.f32 %v949, %v806
        %955 = vrot.lane.b32.xlu0 %v951, 127
        %v956 = vpop.permute.xlu0 %955
        %957 = vrot.lane.b32.xlu0 %v952, 127
        %v958 = vpop.permute.xlu0 %957
        %v961 = vadd.f32 %v941, %v956
        %v962 = vadd.f32 %v942, %v958
        %963 = vset.pattern.permute.xlu0 14
        %964 = vperm.xlu0 %963, %v173
        %v965 = vpop.permute.xlu0 %964
        %967 = vset.pattern.permute.xlu0 14
        %968 = vperm.xlu0 %967, %v174
        %v969 = vpop.permute.xlu0 %968
        %v971 = vmul.f32 %v965, %v822
        %v972 = vmul.f32 %v969, %v822
        %975 = vrot.lane.b32.xlu0 %v971, 127
        %v976 = vpop.permute.xlu0 %975
        %977 = vrot.lane.b32.xlu0 %v972, 127
        %v978 = vpop.permute.xlu0 %977
        %v981 = vadd.f32 %v961, %v976
        %v982 = vadd.f32 %v962, %v978
        %983 = vset.pattern.permute.xlu0 15
        %984 = vperm.xlu0 %983, %v173
        %v985 = vpop.permute.xlu0 %984
        %987 = vset.pattern.permute.xlu0 15
        %988 = vperm.xlu0 %987, %v174
        %v989 = vpop.permute.xlu0 %988
        %v991 = vmul.f32 %v985, %v838
        %v992 = vmul.f32 %v989, %v838
        %995 = vrot.lane.b32.xlu0 %v991, 127
        %v996 = vpop.permute.xlu0 %995
        %997 = vrot.lane.b32.xlu0 %v992, 127
        %v998 = vpop.permute.xlu0 %997
        %v1001 = vadd.f32 %v981, %v996
        %v1002 = vadd.f32 %v982, %v998
        %1003 = vset.pattern.permute.xlu0 16
        %1004 = vperm.xlu0 %1003, %v173
        %v1005 = vpop.permute.xlu0 %1004
        %1007 = vset.pattern.permute.xlu0 16
        %1008 = vperm.xlu0 %1007, %v174
        %v1009 = vpop.permute.xlu0 %1008
        %v1011 = vmul.f32 %v1005, %v726
        %v1012 = vmul.f32 %v1009, %v726
        %1015 = vrot.lane.b32.xlu0 %v1011, 126
        %v1016 = vpop.permute.xlu0 %1015
        %1017 = vrot.lane.b32.xlu0 %v1012, 126
        %v1018 = vpop.permute.xlu0 %1017
        %v1021 = vadd.f32 %v1001, %v1016
        %v1022 = vadd.f32 %v1002, %v1018
        %1023 = vset.pattern.permute.xlu0 17
        %1024 = vperm.xlu0 %1023, %v173
        %v1025 = vpop.permute.xlu0 %1024
        %1027 = vset.pattern.permute.xlu0 17
        %1028 = vperm.xlu0 %1027, %v174
        %v1029 = vpop.permute.xlu0 %1028
        %v1031 = vmul.f32 %v1025, %v742
        %v1032 = vmul.f32 %v1029, %v742
        %1035 = vrot.lane.b32.xlu0 %v1031, 126
        %v1036 = vpop.permute.xlu0 %1035
        %1037 = vrot.lane.b32.xlu0 %v1032, 126
        %v1038 = vpop.permute.xlu0 %1037
        %v1041 = vadd.f32 %v1021, %v1036
        %v1042 = vadd.f32 %v1022, %v1038
        %1043 = vset.pattern.permute.xlu0 18
        %1044 = vperm.xlu0 %1043, %v173
        %v1045 = vpop.permute.xlu0 %1044
        %1047 = vset.pattern.permute.xlu0 18
        %1048 = vperm.xlu0 %1047, %v174
        %v1049 = vpop.permute.xlu0 %1048
        %v1051 = vmul.f32 %v1045, %v758
        %v1052 = vmul.f32 %v1049, %v758
        %1055 = vrot.lane.b32.xlu0 %v1051, 126
        %v1056 = vpop.permute.xlu0 %1055
        %1057 = vrot.lane.b32.xlu0 %v1052, 126
        %v1058 = vpop.permute.xlu0 %1057
        %v1061 = vadd.f32 %v1041, %v1056
        %v1062 = vadd.f32 %v1042, %v1058
        %1063 = vset.pattern.permute.xlu0 19
        %1064 = vperm.xlu0 %1063, %v173
        %v1065 = vpop.permute.xlu0 %1064
        %1067 = vset.pattern.permute.xlu0 19
        %1068 = vperm.xlu0 %1067, %v174
        %v1069 = vpop.permute.xlu0 %1068
        %v1071 = vmul.f32 %v1065, %v774
        %v1072 = vmul.f32 %v1069, %v774
        %1075 = vrot.lane.b32.xlu0 %v1071, 126
        %v1076 = vpop.permute.xlu0 %1075
        %1077 = vrot.lane.b32.xlu0 %v1072, 126
        %v1078 = vpop.permute.xlu0 %1077
        %v1081 = vadd.f32 %v1061, %v1076
        %v1082 = vadd.f32 %v1062, %v1078
        %1083 = vset.pattern.permute.xlu0 20
        %1084 = vperm.xlu0 %1083, %v173
        %v1085 = vpop.permute.xlu0 %1084
        %1087 = vset.pattern.permute.xlu0 20
        %1088 = vperm.xlu0 %1087, %v174
        %v1089 = vpop.permute.xlu0 %1088
        %v1091 = vmul.f32 %v1085, %v790
        %v1092 = vmul.f32 %v1089, %v790
        %1095 = vrot.lane.b32.xlu0 %v1091, 126
        %v1096 = vpop.permute.xlu0 %1095
        %1097 = vrot.lane.b32.xlu0 %v1092, 126
        %v1098 = vpop.permute.xlu0 %1097
        %v1101 = vadd.f32 %v1081, %v1096
        %v1102 = vadd.f32 %v1082, %v1098
        %1103 = vset.pattern.permute.xlu0 21
        %1104 = vperm.xlu0 %1103, %v173
        %v1105 = vpop.permute.xlu0 %1104
        %1107 = vset.pattern.permute.xlu0 21
        %1108 = vperm.xlu0 %1107, %v174
        %v1109 = vpop.permute.xlu0 %1108
        %v1111 = vmul.f32 %v1105, %v806
        %v1112 = vmul.f32 %v1109, %v806
        %1115 = vrot.lane.b32.xlu0 %v1111, 126
        %v1116 = vpop.permute.xlu0 %1115
        %1117 = vrot.lane.b32.xlu0 %v1112, 126
        %v1118 = vpop.permute.xlu0 %1117
        %v1121 = vadd.f32 %v1101, %v1116
        %v1122 = vadd.f32 %v1102, %v1118
        %1123 = vset.pattern.permute.xlu0 22
        %1124 = vperm.xlu0 %1123, %v173
        %v1125 = vpop.permute.xlu0 %1124
        %1127 = vset.pattern.permute.xlu0 22
        %1128 = vperm.xlu0 %1127, %v174
        %v1129 = vpop.permute.xlu0 %1128
        %v1131 = vmul.f32 %v1125, %v822
        %v1132 = vmul.f32 %v1129, %v822
        %1135 = vrot.lane.b32.xlu0 %v1131, 126
        %v1136 = vpop.permute.xlu0 %1135
        %1137 = vrot.lane.b32.xlu0 %v1132, 126
        %v1138 = vpop.permute.xlu0 %1137
        %v1141 = vadd.f32 %v1121, %v1136
        %v1142 = vadd.f32 %v1122, %v1138
        %1143 = vset.pattern.permute.xlu0 23
        %1144 = vperm.xlu0 %1143, %v173
        %v1145 = vpop.permute.xlu0 %1144
        %1147 = vset.pattern.permute.xlu0 23
        %1148 = vperm.xlu0 %1147, %v174
        %v1149 = vpop.permute.xlu0 %1148
        %v1151 = vmul.f32 %v1145, %v838
        %v1152 = vmul.f32 %v1149, %v838
        %1155 = vrot.lane.b32.xlu0 %v1151, 126
        %v1156 = vpop.permute.xlu0 %1155
        %1157 = vrot.lane.b32.xlu0 %v1152, 126
        %v1158 = vpop.permute.xlu0 %1157
        %v1161 = vadd.f32 %v1141, %v1156
        %v1162 = vadd.f32 %v1142, %v1158
        %1163 = vset.pattern.permute.xlu0 24
        %1164 = vperm.xlu0 %1163, %v173
        %v1165 = vpop.permute.xlu0 %1164
        %1167 = vset.pattern.permute.xlu0 24
        %1168 = vperm.xlu0 %1167, %v174
        %v1169 = vpop.permute.xlu0 %1168
        %v1171 = vmul.f32 %v1161, %v1165
        %v1172 = vmul.f32 %v1162, %v1169
        %1173 = vset.pattern.permute.xlu0 25
        %1174 = vperm.xlu0 %1173, %v173
        %v1175 = vpop.permute.xlu0 %1174
        %1177 = vset.pattern.permute.xlu0 25
        %1178 = vperm.xlu0 %1177, %v174
        %v1179 = vpop.permute.xlu0 %1178
        %v1181 = vadd.f32 %v1171, %v1175
        %v1182 = vadd.f32 %v1172, %v1179
        %v1183 = vmax.f32 %v1181, 0.0
        %v1184 = vmax.f32 %v1182, 0.0
        %vm1185 = vcmask 220160
        %1186 = vst.msk [vmem:[%s164] sm:$0xff] %vm1185, %v1183
        %1187 = vst.msk [vmem:[%s164 + $0x8] sm:$0xff] %vm1185, %v1184
        %s1188 = scalar_lea.vmem %s169, 4
        %v1189 = vld [vmem:[%s1188] sm:$0xf]
        %v1191 = vsel %vm237, %v1189, 0
        %1193 = vmatprep.subr.mxu0 0.0
        %1194 = vmatpush1.msra.mxu0 %v203
        %1195 = vmatprep.subr.mxu0 0.0
        %1196 = vmatpush1.msra.mxu0 %v204
        %1197 = vmatprep.subr.mxu0 0.0
        %1198 = vmatpush1.msra.mxu0 %v205
        %1199 = vmatprep.subr.mxu0 0.0
        %1200 = vmatpush1.msra.mxu0 %v206
        %1201 = vmatprep.subr.mxu0 0.0
        %1202 = vmatpush1.msra.mxu0 %v207
        %1203 = vmatprep.subr.mxu0 0.0
        %1204 = vmatpush1.msra.mxu0 %v208
        %1205 = vmatprep.subr.mxu0 0.0
        %1206 = vmatpush1.msra.mxu0 %v209
        %1207 = vmatprep.subr.mxu0 0.0
        %1208 = vmatpush1.msra.mxu0 %v210
        %1209 = vmatprep.subr.mxu0 0.0
        %1210 = vmatpush1.msra.mxu0 0.0
        %1211 = vmatprep.subr.mxu0 0.0
        %1212 = vmatpush1.msra.mxu0 0.0
        %1213 = vmatprep.subr.mxu0 0.0
        %1214 = vmatpush1.msra.mxu0 0.0
        %1215 = vmatprep.subr.mxu0 0.0
        %1216 = vmatpush1.msra.mxu0 0.0
        %1217 = vmatprep.subr.mxu0 0.0
        %1218 = vmatpush1.msra.mxu0 0.0
        %1219 = vmatprep.subr.mxu0 0.0
        %1220 = vmatpush1.msra.mxu0 0.0
        %1221 = vmatprep.subr.mxu0 0.0
        %1222 = vmatpush1.msra.mxu0 0.0
        %1223 = vmatprep.subr.mxu0 0.0
        %1224 = vmatpush1.msra.mxu0 0.0
        %1225 = vmatprep.subr.mxu0 0.0
        %1226 = vmatpush1.msra.mxu0 0.0
        %1227 = vmatprep.subr.mxu0 0.0
        %1228 = vmatpush1.msra.mxu0 0.0
        %1229 = vmatprep.subr.mxu0 0.0
        %1230 = vmatpush1.msra.mxu0 0.0
        %1231 = vmatprep.subr.mxu0 0.0
        %1232 = vmatpush1.msra.mxu0 0.0
        %1233 = vmatprep.subr.mxu0 0.0
        %1234 = vmatpush1.msra.mxu0 0.0
        %1235 = vmatprep.subr.mxu0 0.0
        %1236 = vmatpush1.msra.mxu0 0.0
        %1237 = vmatprep.subr.mxu0 0.0
        %1238 = vmatpush1.msra.mxu0 0.0
        %1239 = vmatprep.subr.mxu0 0.0
        %1240 = vmatpush1.msra.mxu0 0.0
        %1241 = vmatprep.subr.mxu0 0.0
        %1242 = vmatpush1.msra.mxu0 0.0
        %1243 = vmatprep.subr.mxu0 0.0
        %1244 = vmatpush1.msra.mxu0 0.0
        %1245 = vmatprep.subr.mxu0 0.0
        %1246 = vmatpush1.msra.mxu0 0.0
        %1247 = vmatprep.subr.mxu0 0.0
        %1248 = vmatpush1.msra.mxu0 0.0
        %1249 = vmatprep.subr.mxu0 0.0
        %1250 = vmatpush1.msra.mxu0 0.0
        %1251 = vmatprep.subr.mxu0 0.0
        %1252 = vmatpush1.msra.mxu0 0.0
        %1253 = vmatprep.subr.mxu0 0.0
        %1254 = vmatpush1.msra.mxu0 0.0
        %1255 = vmatprep.subr.mxu0 0.0
        %1256 = vmatpush1.msra.mxu0 0.0
        %1257 = vmatprep.mubr.f32.mxu0 0.0
        %1258 = vmatmul.mubr.f32.gmra.mrb[0].mxu0 %v1191
        %v1259 = vpop.f32.mrb[0].mxu0
        %v1260 = vadd.f32 0.0, %v1259
        %v1261 = vpop.f32.mrb[0].mxu0
        %1262 = vdwg.mxu0
        %1263 = vmatprep.subr.mxu0 0.0
        %1264 = vmatpush1.msra.mxu0 %v228
        %1265 = vmatprep.subr.mxu0 0.0
        %1266 = vmatpush1.msra.mxu0 %v229
        %1267 = vmatprep.subr.mxu0 0.0
        %1268 = vmatpush1.msra.mxu0 %v230
        %1269 = vmatprep.subr.mxu0 0.0
        %1270 = vmatpush1.msra.mxu0 %v231
        %1271 = vmatprep.subr.mxu0 0.0
        %1272 = vmatpush1.msra.mxu0 %v232
        %1273 = vmatprep.subr.mxu0 0.0
        %1274 = vmatpush1.msra.mxu0 %v233
        %1275 = vmatprep.subr.mxu0 0.0
        %1276 = vmatpush1.msra.mxu0 %v234
        %1277 = vmatprep.subr.mxu0 0.0
        %1278 = vmatpush1.msra.mxu0 %v235
        %1279 = vmatprep.subr.mxu0 0.0
        %1280 = vmatpush1.msra.mxu0 0.0
        %1281 = vmatprep.subr.mxu0 0.0
        %1282 = vmatpush1.msra.mxu0 0.0
        %1283 = vmatprep.subr.mxu0 0.0
        %1284 = vmatpush1.msra.mxu0 0.0
        %1285 = vmatprep.subr.mxu0 0.0
        %1286 = vmatpush1.msra.mxu0 0.0
        %1287 = vmatprep.subr.mxu0 0.0
        %1288 = vmatpush1.msra.mxu0 0.0
        %1289 = vmatprep.subr.mxu0 0.0
        %1290 = vmatpush1.msra.mxu0 0.0
        %1291 = vmatprep.subr.mxu0 0.0
        %1292 = vmatpush1.msra.mxu0 0.0
        %1293 = vmatprep.subr.mxu0 0.0
        %1294 = vmatpush1.msra.mxu0 0.0
        %1295 = vmatprep.subr.mxu0 0.0
        %1296 = vmatpush1.msra.mxu0 0.0
        %1297 = vmatprep.subr.mxu0 0.0
        %1298 = vmatpush1.msra.mxu0 0.0
        %1299 = vmatprep.subr.mxu0 0.0
        %1300 = vmatpush1.msra.mxu0 0.0
        %1301 = vmatprep.subr.mxu0 0.0
        %1302 = vmatpush1.msra.mxu0 0.0
        %1303 = vmatprep.subr.mxu0 0.0
        %1304 = vmatpush1.msra.mxu0 0.0
        %1305 = vmatprep.subr.mxu0 0.0
        %1306 = vmatpush1.msra.mxu0 0.0
        %1307 = vmatprep.subr.mxu0 0.0
        %1308 = vmatpush1.msra.mxu0 0.0
        %1309 = vmatprep.subr.mxu0 0.0
        %1310 = vmatpush1.msra.mxu0 0.0
        %1311 = vmatprep.subr.mxu0 0.0
        %1312 = vmatpush1.msra.mxu0 0.0
        %1313 = vmatprep.subr.mxu0 0.0
        %1314 = vmatpush1.msra.mxu0 0.0
        %1315 = vmatprep.subr.mxu0 0.0
        %1316 = vmatpush1.msra.mxu0 0.0
        %1317 = vmatprep.subr.mxu0 0.0
        %1318 = vmatpush1.msra.mxu0 0.0
        %1319 = vmatprep.subr.mxu0 0.0
        %1320 = vmatpush1.msra.mxu0 0.0
        %1321 = vmatprep.subr.mxu0 0.0
        %1322 = vmatpush1.msra.mxu0 0.0
        %1323 = vmatprep.subr.mxu0 0.0
        %1324 = vmatpush1.msra.mxu0 0.0
        %1325 = vmatprep.subr.mxu0 0.0
        %1326 = vmatpush1.msra.mxu0 0.0
        %1327 = vmatprep.mubr.f32.mxu0 0.0
        %1328 = vmatmul.mubr.f32.gmra.mrb[0].mxu0 %v1191
        %v1329 = vpop.f32.mrb[0].mxu0
        %v1330 = vadd.f32 0.0, %v1329
        %v1331 = vpop.f32.mrb[0].mxu0
        %1332 = vdwg.mxu0
        %v1333 = vlaneseq
        %v1334 = vshrl.u32 %v1333, 7
        %v1335 = vsub.s32 0, %v1334
        %v1336 = vrot.slane %v1260, %v1335
        %v1337 = vmul.f32 %v384, %v1336
        %v1338 = vadd.f32 %v1337, 0.0
        %v1339 = vlaneseq
        %v1340 = vshrl.u32 %v1339, 7
        %v1341 = vsub.s32 1, %v1340
        %v1342 = vrot.slane %v1260, %v1341
        %v1343 = vmul.f32 %v394, %v1342
        %v1344 = vadd.f32 %v1338, %v1343
        %v1345 = vlaneseq
        %v1346 = vshrl.u32 %v1345, 7
        %v1347 = vsub.s32 2, %v1346
        %v1348 = vrot.slane %v1260, %v1347
        %v1349 = vmul.f32 %v404, %v1348
        %v1350 = vadd.f32 %v1344, %v1349
        %v1351 = vlaneseq
        %v1352 = vshrl.u32 %v1351, 7
        %v1353 = vsub.s32 3, %v1352
        %v1354 = vrot.slane %v1260, %v1353
        %v1355 = vmul.f32 %v414, %v1354
        %v1356 = vadd.f32 %v1350, %v1355
        %v1357 = vlaneseq
        %v1358 = vshrl.u32 %v1357, 7
        %v1359 = vsub.s32 0, %v1358
        %v1360 = vrot.slane %v1330, %v1359
        %v1361 = vmul.f32 %v424, %v1360
        %v1362 = vadd.f32 %v1356, %v1361
        %v1363 = vlaneseq
        %v1364 = vshrl.u32 %v1363, 7
        %v1365 = vsub.s32 1, %v1364
        %v1366 = vrot.slane %v1330, %v1365
        %v1367 = vmul.f32 %v434, %v1366
        %v1368 = vadd.f32 %v1362, %v1367
        %v1369 = vlaneseq
        %v1370 = vshrl.u32 %v1369, 7
        %v1371 = vsub.s32 2, %v1370
        %v1372 = vrot.slane %v1330, %v1371
        %v1373 = vmul.f32 %v444, %v1372
        %v1374 = vadd.f32 %v1368, %v1373
        %v1375 = vlaneseq
        %v1376 = vshrl.u32 %v1375, 7
        %v1377 = vsub.s32 3, %v1376
        %v1378 = vrot.slane %v1330, %v1377
        %v1379 = vmul.f32 %v454, %v1378
        %v1380 = vadd.f32 %v1374, %v1379
        %v1381 = vmul.f32 %v464, %v1336
        %1383 = vrot.lane.b32.xlu0 %v1381, 127
        %v1384 = vpop.permute.xlu0 %1383
        %v1386 = vadd.f32 %v1380, %v1384
        %v1387 = vmul.f32 %v474, %v1342
        %1389 = vrot.lane.b32.xlu0 %v1387, 127
        %v1390 = vpop.permute.xlu0 %1389
        %v1392 = vadd.f32 %v1386, %v1390
        %v1393 = vmul.f32 %v484, %v1348
        %1395 = vrot.lane.b32.xlu0 %v1393, 127
        %v1396 = vpop.permute.xlu0 %1395
        %v1398 = vadd.f32 %v1392, %v1396
        %v1399 = vmul.f32 %v494, %v1354
        %1401 = vrot.lane.b32.xlu0 %v1399, 127
        %v1402 = vpop.permute.xlu0 %1401
        %v1404 = vadd.f32 %v1398, %v1402
        %v1405 = vmul.f32 %v504, %v1360
        %1407 = vrot.lane.b32.xlu0 %v1405, 127
        %v1408 = vpop.permute.xlu0 %1407
        %v1410 = vadd.f32 %v1404, %v1408
        %v1411 = vmul.f32 %v514, %v1366
        %1413 = vrot.lane.b32.xlu0 %v1411, 127
        %v1414 = vpop.permute.xlu0 %1413
        %v1416 = vadd.f32 %v1410, %v1414
        %v1417 = vmul.f32 %v524, %v1372
        %1419 = vrot.lane.b32.xlu0 %v1417, 127
        %v1420 = vpop.permute.xlu0 %1419
        %v1422 = vadd.f32 %v1416, %v1420
        %v1423 = vmul.f32 %v534, %v1378
        %1425 = vrot.lane.b32.xlu0 %v1423, 127
        %v1426 = vpop.permute.xlu0 %1425
        %v1428 = vadd.f32 %v1422, %v1426
        %v1429 = vmul.f32 %v544, %v1336
        %1431 = vrot.lane.b32.xlu0 %v1429, 126
        %v1432 = vpop.permute.xlu0 %1431
        %v1434 = vadd.f32 %v1428, %v1432
        %v1435 = vmul.f32 %v554, %v1342
        %1437 = vrot.lane.b32.xlu0 %v1435, 126
        %v1438 = vpop.permute.xlu0 %1437
        %v1440 = vadd.f32 %v1434, %v1438
        %v1441 = vmul.f32 %v564, %v1348
        %1443 = vrot.lane.b32.xlu0 %v1441, 126
        %v1444 = vpop.permute.xlu0 %1443
        %v1446 = vadd.f32 %v1440, %v1444
        %v1447 = vmul.f32 %v574, %v1354
        %1449 = vrot.lane.b32.xlu0 %v1447, 126
        %v1450 = vpop.permute.xlu0 %1449
        %v1452 = vadd.f32 %v1446, %v1450
        %v1453 = vmul.f32 %v584, %v1360
        %1455 = vrot.lane.b32.xlu0 %v1453, 126
        %v1456 = vpop.permute.xlu0 %1455
        %v1458 = vadd.f32 %v1452, %v1456
        %v1459 = vmul.f32 %v594, %v1366
        %1461 = vrot.lane.b32.xlu0 %v1459, 126
        %v1462 = vpop.permute.xlu0 %1461
        %v1464 = vadd.f32 %v1458, %v1462
        %v1465 = vmul.f32 %v604, %v1372
        %1467 = vrot.lane.b32.xlu0 %v1465, 126
        %v1468 = vpop.permute.xlu0 %1467
        %v1470 = vadd.f32 %v1464, %v1468
        %v1471 = vmul.f32 %v614, %v1378
        %1473 = vrot.lane.b32.xlu0 %v1471, 126
        %v1474 = vpop.permute.xlu0 %1473
        %v1476 = vadd.f32 %v1470, %v1474
        %v1477 = vmul.f32 %v624, %v1336
        %1479 = vrot.lane.b32.xlu0 %v1477, 125
        %v1480 = vpop.permute.xlu0 %1479
        %v1482 = vadd.f32 %v1476, %v1480
        %v1483 = vmul.f32 %v634, %v1342
        %1485 = vrot.lane.b32.xlu0 %v1483, 125
        %v1486 = vpop.permute.xlu0 %1485
        %v1488 = vadd.f32 %v1482, %v1486
        %v1489 = vmul.f32 %v644, %v1348
        %1491 = vrot.lane.b32.xlu0 %v1489, 125
        %v1492 = vpop.permute.xlu0 %1491
        %v1494 = vadd.f32 %v1488, %v1492
        %v1495 = vmul.f32 %v654, %v1354
        %1497 = vrot.lane.b32.xlu0 %v1495, 125
        %v1498 = vpop.permute.xlu0 %1497
        %v1500 = vadd.f32 %v1494, %v1498
        %v1501 = vmul.f32 %v664, %v1360
        %1503 = vrot.lane.b32.xlu0 %v1501, 125
        %v1504 = vpop.permute.xlu0 %1503
        %v1506 = vadd.f32 %v1500, %v1504
        %v1507 = vmul.f32 %v674, %v1366
        %1509 = vrot.lane.b32.xlu0 %v1507, 125
        %v1510 = vpop.permute.xlu0 %1509
        %v1512 = vadd.f32 %v1506, %v1510
        %v1513 = vmul.f32 %v684, %v1372
        %1515 = vrot.lane.b32.xlu0 %v1513, 125
        %v1516 = vpop.permute.xlu0 %1515
        %v1518 = vadd.f32 %v1512, %v1516
        %v1519 = vmul.f32 %v694, %v1378
        %1521 = vrot.lane.b32.xlu0 %v1519, 125
        %v1522 = vpop.permute.xlu0 %1521
        %v1524 = vadd.f32 %v1518, %v1522
        %v1525 = vmul.f32 %v1524, %v704
        %v1526 = vadd.f32 %v1525, %v709
        %v1527 = vmax.f32 %v1526, 0.0
        %v1528 = vlaneseq
        %v1529 = vshrl.u32 %v1528, 7
        %v1530 = vsub.s32 0, %v1529
        %v1531 = vrot.slane %v1527, %v1530
        %v1532 = vmul.f32 %v716, %v1531
        %v1533 = vmul.f32 %v721, %v1531
        %v1534 = vadd.f32 %v1532, 0.0
        %v1535 = vadd.f32 %v1533, 0.0
        %v1536 = vlaneseq
        %v1537 = vshrl.u32 %v1536, 7
        %v1538 = vsub.s32 1, %v1537
        %v1539 = vrot.slane %v1527, %v1538
        %v1540 = vmul.f32 %v733, %v1539
        %v1541 = vmul.f32 %v737, %v1539
        %v1542 = vadd.f32 %v1534, %v1540
        %v1543 = vadd.f32 %v1535, %v1541
        %v1544 = vlaneseq
        %v1545 = vshrl.u32 %v1544, 7
        %v1546 = vsub.s32 2, %v1545
        %v1547 = vrot.slane %v1527, %v1546
        %v1548 = vmul.f32 %v749, %v1547
        %v1549 = vmul.f32 %v753, %v1547
        %v1550 = vadd.f32 %v1542, %v1548
        %v1551 = vadd.f32 %v1543, %v1549
        %v1552 = vlaneseq
        %v1553 = vshrl.u32 %v1552, 7
        %v1554 = vsub.s32 3, %v1553
        %v1555 = vrot.slane %v1527, %v1554
        %v1556 = vmul.f32 %v765, %v1555
        %v1557 = vmul.f32 %v769, %v1555
        %v1558 = vadd.f32 %v1550, %v1556
        %v1559 = vadd.f32 %v1551, %v1557
        %v1560 = vlaneseq
        %v1561 = vshrl.u32 %v1560, 7
        %v1562 = vsub.s32 4, %v1561
        %v1563 = vrot.slane %v1527, %v1562
        %v1564 = vmul.f32 %v781, %v1563
        %v1565 = vmul.f32 %v785, %v1563
        %v1566 = vadd.f32 %v1558, %v1564
        %v1567 = vadd.f32 %v1559, %v1565
        %v1568 = vlaneseq
        %v1569 = vshrl.u32 %v1568, 7
        %v1570 = vsub.s32 5, %v1569
        %v1571 = vrot.slane %v1527, %v1570
        %v1572 = vmul.f32 %v797, %v1571
        %v1573 = vmul.f32 %v801, %v1571
        %v1574 = vadd.f32 %v1566, %v1572
        %v1575 = vadd.f32 %v1567, %v1573
        %v1576 = vlaneseq
        %v1577 = vshrl.u32 %v1576, 7
        %v1578 = vsub.s32 6, %v1577
        %v1579 = vrot.slane %v1527, %v1578
        %v1580 = vmul.f32 %v813, %v1579
        %v1581 = vmul.f32 %v817, %v1579
        %v1582 = vadd.f32 %v1574, %v1580
        %v1583 = vadd.f32 %v1575, %v1581
        %v1584 = vlaneseq
        %v1585 = vshrl.u32 %v1584, 7
        %v1586 = vsub.s32 7, %v1585
        %v1587 = vrot.slane %v1527, %v1586
        %v1588 = vmul.f32 %v829, %v1587
        %v1589 = vmul.f32 %v833, %v1587
        %v1590 = vadd.f32 %v1582, %v1588
        %v1591 = vadd.f32 %v1583, %v1589
        %v1592 = vmul.f32 %v845, %v1531
        %v1593 = vmul.f32 %v849, %v1531
        %1596 = vrot.lane.b32.xlu0 %v1592, 127
        %v1597 = vpop.permute.xlu0 %1596
        %1598 = vrot.lane.b32.xlu0 %v1593, 127
        %v1599 = vpop.permute.xlu0 %1598
        %v1602 = vadd.f32 %v1590, %v1597
        %v1603 = vadd.f32 %v1591, %v1599
        %v1604 = vmul.f32 %v865, %v1539
        %v1605 = vmul.f32 %v869, %v1539
        %1608 = vrot.lane.b32.xlu0 %v1604, 127
        %v1609 = vpop.permute.xlu0 %1608
        %1610 = vrot.lane.b32.xlu0 %v1605, 127
        %v1611 = vpop.permute.xlu0 %1610
        %v1614 = vadd.f32 %v1602, %v1609
        %v1615 = vadd.f32 %v1603, %v1611
        %v1616 = vmul.f32 %v885, %v1547
        %v1617 = vmul.f32 %v889, %v1547
        %1620 = vrot.lane.b32.xlu0 %v1616, 127
        %v1621 = vpop.permute.xlu0 %1620
        %1622 = vrot.lane.b32.xlu0 %v1617, 127
        %v1623 = vpop.permute.xlu0 %1622
        %v1626 = vadd.f32 %v1614, %v1621
        %v1627 = vadd.f32 %v1615, %v1623
        %v1628 = vmul.f32 %v905, %v1555
        %v1629 = vmul.f32 %v909, %v1555
        %1632 = vrot.lane.b32.xlu0 %v1628, 127
        %v1633 = vpop.permute.xlu0 %1632
        %1634 = vrot.lane.b32.xlu0 %v1629, 127
        %v1635 = vpop.permute.xlu0 %1634
        %v1638 = vadd.f32 %v1626, %v1633
        %v1639 = vadd.f32 %v1627, %v1635
        %v1640 = vmul.f32 %v925, %v1563
        %v1641 = vmul.f32 %v929, %v1563
        %1644 = vrot.lane.b32.xlu0 %v1640, 127
        %v1645 = vpop.permute.xlu0 %1644
        %1646 = vrot.lane.b32.xlu0 %v1641, 127
        %v1647 = vpop.permute.xlu0 %1646
        %v1650 = vadd.f32 %v1638, %v1645
        %v1651 = vadd.f32 %v1639, %v1647
        %v1652 = vmul.f32 %v945, %v1571
        %v1653 = vmul.f32 %v949, %v1571
        %1656 = vrot.lane.b32.xlu0 %v1652, 127
        %v1657 = vpop.permute.xlu0 %1656
        %1658 = vrot.lane.b32.xlu0 %v1653, 127
        %v1659 = vpop.permute.xlu0 %1658
        %v1662 = vadd.f32 %v1650, %v1657
        %v1663 = vadd.f32 %v1651, %v1659
        %v1664 = vmul.f32 %v965, %v1579
        %v1665 = vmul.f32 %v969, %v1579
        %1668 = vrot.lane.b32.xlu0 %v1664, 127
        %v1669 = vpop.permute.xlu0 %1668
        %1670 = vrot.lane.b32.xlu0 %v1665, 127
        %v1671 = vpop.permute.xlu0 %1670
        %v1674 = vadd.f32 %v1662, %v1669
        %v1675 = vadd.f32 %v1663, %v1671
        %v1676 = vmul.f32 %v985, %v1587
        %v1677 = vmul.f32 %v989, %v1587
        %1680 = vrot.lane.b32.xlu0 %v1676, 127
        %v1681 = vpop.permute.xlu0 %1680
        %1682 = vrot.lane.b32.xlu0 %v1677, 127
        %v1683 = vpop.permute.xlu0 %1682
        %v1686 = vadd.f32 %v1674, %v1681
        %v1687 = vadd.f32 %v1675, %v1683
        %v1688 = vmul.f32 %v1005, %v1531
        %v1689 = vmul.f32 %v1009, %v1531
        %1692 = vrot.lane.b32.xlu0 %v1688, 126
        %v1693 = vpop.permute.xlu0 %1692
        %1694 = vrot.lane.b32.xlu0 %v1689, 126
        %v1695 = vpop.permute.xlu0 %1694
        %v1698 = vadd.f32 %v1686, %v1693
        %v1699 = vadd.f32 %v1687, %v1695
        %v1700 = vmul.f32 %v1025, %v1539
        %v1701 = vmul.f32 %v1029, %v1539
        %1704 = vrot.lane.b32.xlu0 %v1700, 126
        %v1705 = vpop.permute.xlu0 %1704
        %1706 = vrot.lane.b32.xlu0 %v1701, 126
        %v1707 = vpop.permute.xlu0 %1706
        %v1710 = vadd.f32 %v1698, %v1705
        %v1711 = vadd.f32 %v1699, %v1707
        %v1712 = vmul.f32 %v1045, %v1547
        %v1713 = vmul.f32 %v1049, %v1547
        %1716 = vrot.lane.b32.xlu0 %v1712, 126
        %v1717 = vpop.permute.xlu0 %1716
        %1718 = vrot.lane.b32.xlu0 %v1713, 126
        %v1719 = vpop.permute.xlu0 %1718
        %v1722 = vadd.f32 %v1710, %v1717
        %v1723 = vadd.f32 %v1711, %v1719
        %v1724 = vmul.f32 %v1065, %v1555
        %v1725 = vmul.f32 %v1069, %v1555
        %1728 = vrot.lane.b32.xlu0 %v1724, 126
        %v1729 = vpop.permute.xlu0 %1728
        %1730 = vrot.lane.b32.xlu0 %v1725, 126
        %v1731 = vpop.permute.xlu0 %1730
        %v1734 = vadd.f32 %v1722, %v1729
        %v1735 = vadd.f32 %v1723, %v1731
        %v1736 = vmul.f32 %v1085, %v1563
        %v1737 = vmul.f32 %v1089, %v1563
        %1740 = vrot.lane.b32.xlu0 %v1736, 126
        %v1741 = vpop.permute.xlu0 %1740
        %1742 = vrot.lane.b32.xlu0 %v1737, 126
        %v1743 = vpop.permute.xlu0 %1742
        %v1746 = vadd.f32 %v1734, %v1741
        %v1747 = vadd.f32 %v1735, %v1743
        %v1748 = vmul.f32 %v1105, %v1571
        %v1749 = vmul.f32 %v1109, %v1571
        %1752 = vrot.lane.b32.xlu0 %v1748, 126
        %v1753 = vpop.permute.xlu0 %1752
        %1754 = vrot.lane.b32.xlu0 %v1749, 126
        %v1755 = vpop.permute.xlu0 %1754
        %v1758 = vadd.f32 %v1746, %v1753
        %v1759 = vadd.f32 %v1747, %v1755
        %v1760 = vmul.f32 %v1125, %v1579
        %v1761 = vmul.f32 %v1129, %v1579
        %1764 = vrot.lane.b32.xlu0 %v1760, 126
        %v1765 = vpop.permute.xlu0 %1764
        %1766 = vrot.lane.b32.xlu0 %v1761, 126
        %v1767 = vpop.permute.xlu0 %1766
        %v1770 = vadd.f32 %v1758, %v1765
        %v1771 = vadd.f32 %v1759, %v1767
        %v1772 = vmul.f32 %v1145, %v1587
        %v1773 = vmul.f32 %v1149, %v1587
        %1776 = vrot.lane.b32.xlu0 %v1772, 126
        %v1777 = vpop.permute.xlu0 %1776
        %1778 = vrot.lane.b32.xlu0 %v1773, 126
        %v1779 = vpop.permute.xlu0 %1778
        %v1782 = vadd.f32 %v1770, %v1777
        %v1783 = vadd.f32 %v1771, %v1779
        %v1784 = vmul.f32 %v1782, %v1165
        %v1785 = vmul.f32 %v1783, %v1169
        %v1786 = vadd.f32 %v1784, %v1175
        %v1787 = vadd.f32 %v1785, %v1179
        %v1788 = vmax.f32 %v1786, 0.0
        %v1789 = vmax.f32 %v1787, 0.0
        %s1790 = scalar_lea.vmem %s164, 16 [#allocation2]
        %1791 = vst.msk [vmem:[%s1790] sm:$0xff] %vm1185, %v1788
        %1792 = vst.msk [vmem:[%s1790 + $0x8] sm:$0xff] %vm1185, %v1789
        %s1793 = scalar_lea.vmem %s169, 8
        %v1794 = vld [vmem:[%s1793] sm:$0xf]
        %v1796 = vsel %vm237, %v1794, 0
        %1798 = vmatprep.subr.mxu0 0.0
        %1799 = vmatpush1.msra.mxu0 %v203
        %1800 = vmatprep.subr.mxu0 0.0
        %1801 = vmatpush1.msra.mxu0 %v204
        %1802 = vmatprep.subr.mxu0 0.0
        %1803 = vmatpush1.msra.mxu0 %v205
        %1804 = vmatprep.subr.mxu0 0.0
        %1805 = vmatpush1.msra.mxu0 %v206
        %1806 = vmatprep.subr.mxu0 0.0
        %1807 = vmatpush1.msra.mxu0 %v207
        %1808 = vmatprep.subr.mxu0 0.0
        %1809 = vmatpush1.msra.mxu0 %v208
        %1810 = vmatprep.subr.mxu0 0.0
        %1811 = vmatpush1.msra.mxu0 %v209
        %1812 = vmatprep.subr.mxu0 0.0
        %1813 = vmatpush1.msra.mxu0 %v210
        %1814 = vmatprep.subr.mxu0 0.0
        %1815 = vmatpush1.msra.mxu0 0.0
        %1816 = vmatprep.subr.mxu0 0.0
        %1817 = vmatpush1.msra.mxu0 0.0
        %1818 = vmatprep.subr.mxu0 0.0
        %1819 = vmatpush1.msra.mxu0 0.0
        %1820 = vmatprep.subr.mxu0 0.0
        %1821 = vmatpush1.msra.mxu0 0.0
        %1822 = vmatprep.subr.mxu0 0.0
        %1823 = vmatpush1.msra.mxu0 0.0
        %1824 = vmatprep.subr.mxu0 0.0
        %1825 = vmatpush1.msra.mxu0 0.0
        %1826 = vmatprep.subr.mxu0 0.0
        %1827 = vmatpush1.msra.mxu0 0.0
        %1828 = vmatprep.subr.mxu0 0.0
        %1829 = vmatpush1.msra.mxu0 0.0
        %1830 = vmatprep.subr.mxu0 0.0
        %1831 = vmatpush1.msra.mxu0 0.0
        %1832 = vmatprep.subr.mxu0 0.0
        %1833 = vmatpush1.msra.mxu0 0.0
        %1834 = vmatprep.subr.mxu0 0.0
        %1835 = vmatpush1.msra.mxu0 0.0
        %1836 = vmatprep.subr.mxu0 0.0
        %1837 = vmatpush1.msra.mxu0 0.0
        %1838 = vmatprep.subr.mxu0 0.0
        %1839 = vmatpush1.msra.mxu0 0.0
        %1840 = vmatprep.subr.mxu0 0.0
        %1841 = vmatpush1.msra.mxu0 0.0
        %1842 = vmatprep.subr.mxu0 0.0
        %1843 = vmatpush1.msra.mxu0 0.0
        %1844 = vmatprep.subr.mxu0 0.0
        %1845 = vmatpush1.msra.mxu0 0.0
        %1846 = vmatprep.subr.mxu0 0.0
        %1847 = vmatpush1.msra.mxu0 0.0
        %1848 = vmatprep.subr.mxu0 0.0
        %1849 = vmatpush1.msra.mxu0 0.0
        %1850 = vmatprep.subr.mxu0 0.0
        %1851 = vmatpush1.msra.mxu0 0.0
        %1852 = vmatprep.subr.mxu0 0.0
        %1853 = vmatpush1.msra.mxu0 0.0
        %1854 = vmatprep.subr.mxu0 0.0
        %1855 = vmatpush1.msra.mxu0 0.0
        %1856 = vmatprep.subr.mxu0 0.0
        %1857 = vmatpush1.msra.mxu0 0.0
        %1858 = vmatprep.subr.mxu0 0.0
        %1859 = vmatpush1.msra.mxu0 0.0
        %1860 = vmatprep.subr.mxu0 0.0
        %1861 = vmatpush1.msra.mxu0 0.0
        %1862 = vmatprep.mubr.f32.mxu0 0.0
        %1863 = vmatmul.mubr.f32.gmra.mrb[0].mxu0 %v1796
        %v1864 = vpop.f32.mrb[0].mxu0
        %v1865 = vadd.f32 0.0, %v1864
        %v1866 = vpop.f32.mrb[0].mxu0
        %1867 = vdwg.mxu0
        %1868 = vmatprep.subr.mxu0 0.0
        %1869 = vmatpush1.msra.mxu0 %v228
        %1870 = vmatprep.subr.mxu0 0.0
        %1871 = vmatpush1.msra.mxu0 %v229
        %1872 = vmatprep.subr.mxu0 0.0
        %1873 = vmatpush1.msra.mxu0 %v230
        %1874 = vmatprep.subr.mxu0 0.0
        %1875 = vmatpush1.msra.mxu0 %v231
        %1876 = vmatprep.subr.mxu0 0.0
        %1877 = vmatpush1.msra.mxu0 %v232
        %1878 = vmatprep.subr.mxu0 0.0
        %1879 = vmatpush1.msra.mxu0 %v233
        %1880 = vmatprep.subr.mxu0 0.0
        %1881 = vmatpush1.msra.mxu0 %v234
        %1882 = vmatprep.subr.mxu0 0.0
        %1883 = vmatpush1.msra.mxu0 %v235
        %1884 = vmatprep.subr.mxu0 0.0
        %1885 = vmatpush1.msra.mxu0 0.0
        %1886 = vmatprep.subr.mxu0 0.0
        %1887 = vmatpush1.msra.mxu0 0.0
        %1888 = vmatprep.subr.mxu0 0.0
        %1889 = vmatpush1.msra.mxu0 0.0
        %1890 = vmatprep.subr.mxu0 0.0
        %1891 = vmatpush1.msra.mxu0 0.0
        %1892 = vmatprep.subr.mxu0 0.0
        %1893 = vmatpush1.msra.mxu0 0.0
        %1894 = vmatprep.subr.mxu0 0.0
        %1895 = vmatpush1.msra.mxu0 0.0
        %1896 = vmatprep.subr.mxu0 0.0
        %1897 = vmatpush1.msra.mxu0 0.0
        %1898 = vmatprep.subr.mxu0 0.0
        %1899 = vmatpush1.msra.mxu0 0.0
        %1900 = vmatprep.subr.mxu0 0.0
        %1901 = vmatpush1.msra.mxu0 0.0
        %1902 = vmatprep.subr.mxu0 0.0
        %1903 = vmatpush1.msra.mxu0 0.0
        %1904 = vmatprep.subr.mxu0 0.0
        %1905 = vmatpush1.msra.mxu0 0.0
        %1906 = vmatprep.subr.mxu0 0.0
        %1907 = vmatpush1.msra.mxu0 0.0
        %1908 = vmatprep.subr.mxu0 0.0
        %1909 = vmatpush1.msra.mxu0 0.0
        %1910 = vmatprep.subr.mxu0 0.0
        %1911 = vmatpush1.msra.mxu0 0.0
        %1912 = vmatprep.subr.mxu0 0.0
        %1913 = vmatpush1.msra.mxu0 0.0
        %1914 = vmatprep.subr.mxu0 0.0
        %1915 = vmatpush1.msra.mxu0 0.0
        %1916 = vmatprep.subr.mxu0 0.0
        %1917 = vmatpush1.msra.mxu0 0.0
        %1918 = vmatprep.subr.mxu0 0.0
        %1919 = vmatpush1.msra.mxu0 0.0
        %1920 = vmatprep.subr.mxu0 0.0
        %1921 = vmatpush1.msra.mxu0 0.0
        %1922 = vmatprep.subr.mxu0 0.0
        %1923 = vmatpush1.msra.mxu0 0.0
        %1924 = vmatprep.subr.mxu0 0.0
        %1925 = vmatpush1.msra.mxu0 0.0
        %1926 = vmatprep.subr.mxu0 0.0
        %1927 = vmatpush1.msra.mxu0 0.0
        %1928 = vmatprep.subr.mxu0 0.0
        %1929 = vmatpush1.msra.mxu0 0.0
        %1930 = vmatprep.subr.mxu0 0.0
        %1931 = vmatpush1.msra.mxu0 0.0
        %1932 = vmatprep.mubr.f32.mxu0 0.0
        %1933 = vmatmul.mubr.f32.gmra.mrb[0].mxu0 %v1796
        %v1934 = vpop.f32.mrb[0].mxu0
        %v1935 = vadd.f32 0.0, %v1934
        %v1936 = vpop.f32.mrb[0].mxu0
        %1937 = vdwg.mxu0
        %v1938 = vlaneseq
        %v1939 = vshrl.u32 %v1938, 7
        %v1940 = vsub.s32 0, %v1939
        %v1941 = vrot.slane %v1865, %v1940
        %v1942 = vmul.f32 %v384, %v1941
        %v1943 = vadd.f32 %v1942, 0.0
        %v1944 = vlaneseq
        %v1945 = vshrl.u32 %v1944, 7
        %v1946 = vsub.s32 1, %v1945
        %v1947 = vrot.slane %v1865, %v1946
        %v1948 = vmul.f32 %v394, %v1947
        %v1949 = vadd.f32 %v1943, %v1948
        %v1950 = vlaneseq
        %v1951 = vshrl.u32 %v1950, 7
        %v1952 = vsub.s32 2, %v1951
        %v1953 = vrot.slane %v1865, %v1952
        %v1954 = vmul.f32 %v404, %v1953
        %v1955 = vadd.f32 %v1949, %v1954
        %v1956 = vlaneseq
        %v1957 = vshrl.u32 %v1956, 7
        %v1958 = vsub.s32 3, %v1957
        %v1959 = vrot.slane %v1865, %v1958
        %v1960 = vmul.f32 %v414, %v1959
        %v1961 = vadd.f32 %v1955, %v1960
        %v1962 = vlaneseq
        %v1963 = vshrl.u32 %v1962, 7
        %v1964 = vsub.s32 0, %v1963
        %v1965 = vrot.slane %v1935, %v1964
        %v1966 = vmul.f32 %v424, %v1965
        %v1967 = vadd.f32 %v1961, %v1966
        %v1968 = vlaneseq
        %v1969 = vshrl.u32 %v1968, 7
        %v1970 = vsub.s32 1, %v1969
        %v1971 = vrot.slane %v1935, %v1970
        %v1972 = vmul.f32 %v434, %v1971
        %v1973 = vadd.f32 %v1967, %v1972
        %v1974 = vlaneseq
        %v1975 = vshrl.u32 %v1974, 7
        %v1976 = vsub.s32 2, %v1975
        %v1977 = vrot.slane %v1935, %v1976
        %v1978 = vmul.f32 %v444, %v1977
        %v1979 = vadd.f32 %v1973, %v1978
        %v1980 = vlaneseq
        %v1981 = vshrl.u32 %v1980, 7
        %v1982 = vsub.s32 3, %v1981
        %v1983 = vrot.slane %v1935, %v1982
        %v1984 = vmul.f32 %v454, %v1983
        %v1985 = vadd.f32 %v1979, %v1984
        %v1986 = vmul.f32 %v464, %v1941
        %1988 = vrot.lane.b32.xlu0 %v1986, 127
        %v1989 = vpop.permute.xlu0 %1988
        %v1991 = vadd.f32 %v1985, %v1989
        %v1992 = vmul.f32 %v474, %v1947
        %1994 = vrot.lane.b32.xlu0 %v1992, 127
        %v1995 = vpop.permute.xlu0 %1994
        %v1997 = vadd.f32 %v1991, %v1995
        %v1998 = vmul.f32 %v484, %v1953
        %2000 = vrot.lane.b32.xlu0 %v1998, 127
        %v2001 = vpop.permute.xlu0 %2000
        %v2003 = vadd.f32 %v1997, %v2001
        %v2004 = vmul.f32 %v494, %v1959
        %2006 = vrot.lane.b32.xlu0 %v2004, 127
        %v2007 = vpop.permute.xlu0 %2006
        %v2009 = vadd.f32 %v2003, %v2007
        %v2010 = vmul.f32 %v504, %v1965
        %2012 = vrot.lane.b32.xlu0 %v2010, 127
        %v2013 = vpop.permute.xlu0 %2012
        %v2015 = vadd.f32 %v2009, %v2013
        %v2016 = vmul.f32 %v514, %v1971
        %2018 = vrot.lane.b32.xlu0 %v2016, 127
        %v2019 = vpop.permute.xlu0 %2018
        %v2021 = vadd.f32 %v2015, %v2019
        %v2022 = vmul.f32 %v524, %v1977
        %2024 = vrot.lane.b32.xlu0 %v2022, 127
        %v2025 = vpop.permute.xlu0 %2024
        %v2027 = vadd.f32 %v2021, %v2025
        %v2028 = vmul.f32 %v534, %v1983
        %2030 = vrot.lane.b32.xlu0 %v2028, 127
        %v2031 = vpop.permute.xlu0 %2030
        %v2033 = vadd.f32 %v2027, %v2031
        %v2034 = vmul.f32 %v544, %v1941
        %2036 = vrot.lane.b32.xlu0 %v2034, 126
        %v2037 = vpop.permute.xlu0 %2036
        %v2039 = vadd.f32 %v2033, %v2037
        %v2040 = vmul.f32 %v554, %v1947
        %2042 = vrot.lane.b32.xlu0 %v2040, 126
        %v2043 = vpop.permute.xlu0 %2042
        %v2045 = vadd.f32 %v2039, %v2043
        %v2046 = vmul.f32 %v564, %v1953
        %2048 = vrot.lane.b32.xlu0 %v2046, 126
        %v2049 = vpop.permute.xlu0 %2048
        %v2051 = vadd.f32 %v2045, %v2049
        %v2052 = vmul.f32 %v574, %v1959
        %2054 = vrot.lane.b32.xlu0 %v2052, 126
        %v2055 = vpop.permute.xlu0 %2054
        %v2057 = vadd.f32 %v2051, %v2055
        %v2058 = vmul.f32 %v584, %v1965
        %2060 = vrot.lane.b32.xlu0 %v2058, 126
        %v2061 = vpop.permute.xlu0 %2060
        %v2063 = vadd.f32 %v2057, %v2061
        %v2064 = vmul.f32 %v594, %v1971
        %2066 = vrot.lane.b32.xlu0 %v2064, 126
        %v2067 = vpop.permute.xlu0 %2066
        %v2069 = vadd.f32 %v2063, %v2067
        %v2070 = vmul.f32 %v604, %v1977
        %2072 = vrot.lane.b32.xlu0 %v2070, 126
        %v2073 = vpop.permute.xlu0 %2072
        %v2075 = vadd.f32 %v2069, %v2073
        %v2076 = vmul.f32 %v614, %v1983
        %2078 = vrot.lane.b32.xlu0 %v2076, 126
        %v2079 = vpop.permute.xlu0 %2078
        %v2081 = vadd.f32 %v2075, %v2079
        %v2082 = vmul.f32 %v624, %v1941
        %2084 = vrot.lane.b32.xlu0 %v2082, 125
        %v2085 = vpop.permute.xlu0 %2084
        %v2087 = vadd.f32 %v2081, %v2085
        %v2088 = vmul.f32 %v634, %v1947
        %2090 = vrot.lane.b32.xlu0 %v2088, 125
        %v2091 = vpop.permute.xlu0 %2090
        %v2093 = vadd.f32 %v2087, %v2091
        %v2094 = vmul.f32 %v644, %v1953
        %2096 = vrot.lane.b32.xlu0 %v2094, 125
        %v2097 = vpop.permute.xlu0 %2096
        %v2099 = vadd.f32 %v2093, %v2097
        %v2100 = vmul.f32 %v654, %v1959
        %2102 = vrot.lane.b32.xlu0 %v2100, 125
        %v2103 = vpop.permute.xlu0 %2102
        %v2105 = vadd.f32 %v2099, %v2103
        %v2106 = vmul.f32 %v664, %v1965
        %2108 = vrot.lane.b32.xlu0 %v2106, 125
        %v2109 = vpop.permute.xlu0 %2108
        %v2111 = vadd.f32 %v2105, %v2109
        %v2112 = vmul.f32 %v674, %v1971
        %2114 = vrot.lane.b32.xlu0 %v2112, 125
        %v2115 = vpop.permute.xlu0 %2114
        %v2117 = vadd.f32 %v2111, %v2115
        %v2118 = vmul.f32 %v684, %v1977
        %2120 = vrot.lane.b32.xlu0 %v2118, 125
        %v2121 = vpop.permute.xlu0 %2120
        %v2123 = vadd.f32 %v2117, %v2121
        %v2124 = vmul.f32 %v694, %v1983
        %2126 = vrot.lane.b32.xlu0 %v2124, 125
        %v2127 = vpop.permute.xlu0 %2126
        %v2129 = vadd.f32 %v2123, %v2127
        %v2130 = vmul.f32 %v2129, %v704
        %v2131 = vadd.f32 %v2130, %v709
        %v2132 = vmax.f32 %v2131, 0.0
        %v2133 = vlaneseq
        %v2134 = vshrl.u32 %v2133, 7
        %v2135 = vsub.s32 0, %v2134
        %v2136 = vrot.slane %v2132, %v2135
        %v2137 = vmul.f32 %v716, %v2136
        %v2138 = vmul.f32 %v721, %v2136
        %v2139 = vadd.f32 %v2137, 0.0
        %v2140 = vadd.f32 %v2138, 0.0
        %v2141 = vlaneseq
        %v2142 = vshrl.u32 %v2141, 7
        %v2143 = vsub.s32 1, %v2142
        %v2144 = vrot.slane %v2132, %v2143
        %v2145 = vmul.f32 %v733, %v2144
        %v2146 = vmul.f32 %v737, %v2144
        %v2147 = vadd.f32 %v2139, %v2145
        %v2148 = vadd.f32 %v2140, %v2146
        %v2149 = vlaneseq
        %v2150 = vshrl.u32 %v2149, 7
        %v2151 = vsub.s32 2, %v2150
        %v2152 = vrot.slane %v2132, %v2151
        %v2153 = vmul.f32 %v749, %v2152
        %v2154 = vmul.f32 %v753, %v2152
        %v2155 = vadd.f32 %v2147, %v2153
        %v2156 = vadd.f32 %v2148, %v2154
        %v2157 = vlaneseq
        %v2158 = vshrl.u32 %v2157, 7
        %v2159 = vsub.s32 3, %v2158
        %v2160 = vrot.slane %v2132, %v2159
        %v2161 = vmul.f32 %v765, %v2160
        %v2162 = vmul.f32 %v769, %v2160
        %v2163 = vadd.f32 %v2155, %v2161
        %v2164 = vadd.f32 %v2156, %v2162
        %v2165 = vlaneseq
        %v2166 = vshrl.u32 %v2165, 7
        %v2167 = vsub.s32 4, %v2166
        %v2168 = vrot.slane %v2132, %v2167
        %v2169 = vmul.f32 %v781, %v2168
        %v2170 = vmul.f32 %v785, %v2168
        %v2171 = vadd.f32 %v2163, %v2169
        %v2172 = vadd.f32 %v2164, %v2170
        %v2173 = vlaneseq
        %v2174 = vshrl.u32 %v2173, 7
        %v2175 = vsub.s32 5, %v2174
        %v2176 = vrot.slane %v2132, %v2175
        %v2177 = vmul.f32 %v797, %v2176
        %v2178 = vmul.f32 %v801, %v2176
        %v2179 = vadd.f32 %v2171, %v2177
        %v2180 = vadd.f32 %v2172, %v2178
        %v2181 = vlaneseq
        %v2182 = vshrl.u32 %v2181, 7
        %v2183 = vsub.s32 6, %v2182
        %v2184 = vrot.slane %v2132, %v2183
        %v2185 = vmul.f32 %v813, %v2184
        %v2186 = vmul.f32 %v817, %v2184
        %v2187 = vadd.f32 %v2179, %v2185
        %v2188 = vadd.f32 %v2180, %v2186
        %v2189 = vlaneseq
        %v2190 = vshrl.u32 %v2189, 7
        %v2191 = vsub.s32 7, %v2190
        %v2192 = vrot.slane %v2132, %v2191
        %v2193 = vmul.f32 %v829, %v2192
        %v2194 = vmul.f32 %v833, %v2192
        %v2195 = vadd.f32 %v2187, %v2193
        %v2196 = vadd.f32 %v2188, %v2194
        %v2197 = vmul.f32 %v845, %v2136
        %v2198 = vmul.f32 %v849, %v2136
        %2201 = vrot.lane.b32.xlu0 %v2197, 127
        %v2202 = vpop.permute.xlu0 %2201
        %2203 = vrot.lane.b32.xlu0 %v2198, 127
        %v2204 = vpop.permute.xlu0 %2203
        %v2207 = vadd.f32 %v2195, %v2202
        %v2208 = vadd.f32 %v2196, %v2204
        %v2209 = vmul.f32 %v865, %v2144
        %v2210 = vmul.f32 %v869, %v2144
        %2213 = vrot.lane.b32.xlu0 %v2209, 127
        %v2214 = vpop.permute.xlu0 %2213
        %2215 = vrot.lane.b32.xlu0 %v2210, 127
        %v2216 = vpop.permute.xlu0 %2215
        %v2219 = vadd.f32 %v2207, %v2214
        %v2220 = vadd.f32 %v2208, %v2216
        %v2221 = vmul.f32 %v885, %v2152
        %v2222 = vmul.f32 %v889, %v2152
        %2225 = vrot.lane.b32.xlu0 %v2221, 127
        %v2226 = vpop.permute.xlu0 %2225
        %2227 = vrot.lane.b32.xlu0 %v2222, 127
        %v2228 = vpop.permute.xlu0 %2227
        %v2231 = vadd.f32 %v2219, %v2226
        %v2232 = vadd.f32 %v2220, %v2228
        %v2233 = vmul.f32 %v905, %v2160
        %v2234 = vmul.f32 %v909, %v2160
        %2237 = vrot.lane.b32.xlu0 %v2233, 127
        %v2238 = vpop.permute.xlu0 %2237
        %2239 = vrot.lane.b32.xlu0 %v2234, 127
        %v2240 = vpop.permute.xlu0 %2239
        %v2243 = vadd.f32 %v2231, %v2238
        %v2244 = vadd.f32 %v2232, %v2240
        %v2245 = vmul.f32 %v925, %v2168
        %v2246 = vmul.f32 %v929, %v2168
        %2249 = vrot.lane.b32.xlu0 %v2245, 127
        %v2250 = vpop.permute.xlu0 %2249
        %2251 = vrot.lane.b32.xlu0 %v2246, 127
        %v2252 = vpop.permute.xlu0 %2251
        %v2255 = vadd.f32 %v2243, %v2250
        %v2256 = vadd.f32 %v2244, %v2252
        %v2257 = vmul.f32 %v945, %v2176
        %v2258 = vmul.f32 %v949, %v2176
        %2261 = vrot.lane.b32.xlu0 %v2257, 127
        %v2262 = vpop.permute.xlu0 %2261
        %2263 = vrot.lane.b32.xlu0 %v2258, 127
        %v2264 = vpop.permute.xlu0 %2263
        %v2267 = vadd.f32 %v2255, %v2262
        %v2268 = vadd.f32 %v2256, %v2264
        %v2269 = vmul.f32 %v965, %v2184
        %v2270 = vmul.f32 %v969, %v2184
        %2273 = vrot.lane.b32.xlu0 %v2269, 127
        %v2274 = vpop.permute.xlu0 %2273
        %2275 = vrot.lane.b32.xlu0 %v2270, 127
        %v2276 = vpop.permute.xlu0 %2275
        %v2279 = vadd.f32 %v2267, %v2274
        %v2280 = vadd.f32 %v2268, %v2276
        %v2281 = vmul.f32 %v985, %v2192
        %v2282 = vmul.f32 %v989, %v2192
        %2285 = vrot.lane.b32.xlu0 %v2281, 127
        %v2286 = vpop.permute.xlu0 %2285
        %2287 = vrot.lane.b32.xlu0 %v2282, 127
        %v2288 = vpop.permute.xlu0 %2287
        %v2291 = vadd.f32 %v2279, %v2286
        %v2292 = vadd.f32 %v2280, %v2288
        %v2293 = vmul.f32 %v1005, %v2136
        %v2294 = vmul.f32 %v1009, %v2136
        %2297 = vrot.lane.b32.xlu0 %v2293, 126
        %v2298 = vpop.permute.xlu0 %2297
        %2299 = vrot.lane.b32.xlu0 %v2294, 126
        %v2300 = vpop.permute.xlu0 %2299
        %v2303 = vadd.f32 %v2291, %v2298
        %v2304 = vadd.f32 %v2292, %v2300
        %v2305 = vmul.f32 %v1025, %v2144
        %v2306 = vmul.f32 %v1029, %v2144
        %2309 = vrot.lane.b32.xlu0 %v2305, 126
        %v2310 = vpop.permute.xlu0 %2309
        %2311 = vrot.lane.b32.xlu0 %v2306, 126
        %v2312 = vpop.permute.xlu0 %2311
        %v2315 = vadd.f32 %v2303, %v2310
        %v2316 = vadd.f32 %v2304, %v2312
        %v2317 = vmul.f32 %v1045, %v2152
        %v2318 = vmul.f32 %v1049, %v2152
        %2321 = vrot.lane.b32.xlu0 %v2317, 126
        %v2322 = vpop.permute.xlu0 %2321
        %2323 = vrot.lane.b32.xlu0 %v2318, 126
        %v2324 = vpop.permute.xlu0 %2323
        %v2327 = vadd.f32 %v2315, %v2322
        %v2328 = vadd.f32 %v2316, %v2324
        %v2329 = vmul.f32 %v1065, %v2160
        %v2330 = vmul.f32 %v1069, %v2160
        %2333 = vrot.lane.b32.xlu0 %v2329, 126
        %v2334 = vpop.permute.xlu0 %2333
        %2335 = vrot.lane.b32.xlu0 %v2330, 126
        %v2336 = vpop.permute.xlu0 %2335
        %v2339 = vadd.f32 %v2327, %v2334
        %v2340 = vadd.f32 %v2328, %v2336
        %v2341 = vmul.f32 %v1085, %v2168
        %v2342 = vmul.f32 %v1089, %v2168
        %2345 = vrot.lane.b32.xlu0 %v2341, 126
        %v2346 = vpop.permute.xlu0 %2345
        %2347 = vrot.lane.b32.xlu0 %v2342, 126
        %v2348 = vpop.permute.xlu0 %2347
        %v2351 = vadd.f32 %v2339, %v2346
        %v2352 = vadd.f32 %v2340, %v2348
        %v2353 = vmul.f32 %v1105, %v2176
        %v2354 = vmul.f32 %v1109, %v2176
        %2357 = vrot.lane.b32.xlu0 %v2353, 126
        %v2358 = vpop.permute.xlu0 %2357
        %2359 = vrot.lane.b32.xlu0 %v2354, 126
        %v2360 = vpop.permute.xlu0 %2359
        %v2363 = vadd.f32 %v2351, %v2358
        %v2364 = vadd.f32 %v2352, %v2360
        %v2365 = vmul.f32 %v1125, %v2184
        %v2366 = vmul.f32 %v1129, %v2184
        %2369 = vrot.lane.b32.xlu0 %v2365, 126
        %v2370 = vpop.permute.xlu0 %2369
        %2371 = vrot.lane.b32.xlu0 %v2366, 126
        %v2372 = vpop.permute.xlu0 %2371
        %v2375 = vadd.f32 %v2363, %v2370
        %v2376 = vadd.f32 %v2364, %v2372
        %v2377 = vmul.f32 %v1145, %v2192
        %v2378 = vmul.f32 %v1149, %v2192
        %2381 = vrot.lane.b32.xlu0 %v2377, 126
        %v2382 = vpop.permute.xlu0 %2381
        %2383 = vrot.lane.b32.xlu0 %v2378, 126
        %v2384 = vpop.permute.xlu0 %2383
        %v2387 = vadd.f32 %v2375, %v2382
        %v2388 = vadd.f32 %v2376, %v2384
        %v2389 = vmul.f32 %v2387, %v1165
        %v2390 = vmul.f32 %v2388, %v1169
        %v2391 = vadd.f32 %v2389, %v1175
        %v2392 = vadd.f32 %v2390, %v1179
        %v2393 = vmax.f32 %v2391, 0.0
        %v2394 = vmax.f32 %v2392, 0.0
        %s2395 = scalar_lea.vmem %s164, 32 [#allocation2]
        %2396 = vst.msk [vmem:[%s2395] sm:$0xff] %vm1185, %v2393
        %2397 = vst.msk [vmem:[%s2395 + $0x8] sm:$0xff] %vm1185, %v2394
        %s2398 = scalar_lea.vmem %s169, 12
        %v2399 = vld [vmem:[%s2398] sm:$0xf]
        %v2401 = vsel %vm237, %v2399, 0
        %2403 = vmatprep.subr.mxu0 0.0
        %2404 = vmatpush1.msra.mxu0 %v203
        %2405 = vmatprep.subr.mxu0 0.0
        %2406 = vmatpush1.msra.mxu0 %v204
        %2407 = vmatprep.subr.mxu0 0.0
        %2408 = vmatpush1.msra.mxu0 %v205
        %2409 = vmatprep.subr.mxu0 0.0
        %2410 = vmatpush1.msra.mxu0 %v206
        %2411 = vmatprep.subr.mxu0 0.0
        %2412 = vmatpush1.msra.mxu0 %v207
        %2413 = vmatprep.subr.mxu0 0.0
        %2414 = vmatpush1.msra.mxu0 %v208
        %2415 = vmatprep.subr.mxu0 0.0
        %2416 = vmatpush1.msra.mxu0 %v209
        %2417 = vmatprep.subr.mxu0 0.0
        %2418 = vmatpush1.msra.mxu0 %v210
        %2419 = vmatprep.subr.mxu0 0.0
        %2420 = vmatpush1.msra.mxu0 0.0
        %2421 = vmatprep.subr.mxu0 0.0
        %2422 = vmatpush1.msra.mxu0 0.0
        %2423 = vmatprep.subr.mxu0 0.0
        %2424 = vmatpush1.msra.mxu0 0.0
        %2425 = vmatprep.subr.mxu0 0.0
        %2426 = vmatpush1.msra.mxu0 0.0
        %2427 = vmatprep.subr.mxu0 0.0
        %2428 = vmatpush1.msra.mxu0 0.0
        %2429 = vmatprep.subr.mxu0 0.0
        %2430 = vmatpush1.msra.mxu0 0.0
        %2431 = vmatprep.subr.mxu0 0.0
        %2432 = vmatpush1.msra.mxu0 0.0
        %2433 = vmatprep.subr.mxu0 0.0
        %2434 = vmatpush1.msra.mxu0 0.0
        %2435 = vmatprep.subr.mxu0 0.0
        %2436 = vmatpush1.msra.mxu0 0.0
        %2437 = vmatprep.subr.mxu0 0.0
        %2438 = vmatpush1.msra.mxu0 0.0
        %2439 = vmatprep.subr.mxu0 0.0
        %2440 = vmatpush1.msra.mxu0 0.0
        %2441 = vmatprep.subr.mxu0 0.0
        %2442 = vmatpush1.msra.mxu0 0.0
        %2443 = vmatprep.subr.mxu0 0.0
        %2444 = vmatpush1.msra.mxu0 0.0
        %2445 = vmatprep.subr.mxu0 0.0
        %2446 = vmatpush1.msra.mxu0 0.0
        %2447 = vmatprep.subr.mxu0 0.0
        %2448 = vmatpush1.msra.mxu0 0.0
        %2449 = vmatprep.subr.mxu0 0.0
        %2450 = vmatpush1.msra.mxu0 0.0
        %2451 = vmatprep.subr.mxu0 0.0
        %2452 = vmatpush1.msra.mxu0 0.0
        %2453 = vmatprep.subr.mxu0 0.0
        %2454 = vmatpush1.msra.mxu0 0.0
        %2455 = vmatprep.subr.mxu0 0.0
        %2456 = vmatpush1.msra.mxu0 0.0
        %2457 = vmatprep.subr.mxu0 0.0
        %2458 = vmatpush1.msra.mxu0 0.0
        %2459 = vmatprep.subr.mxu0 0.0
        %2460 = vmatpush1.msra.mxu0 0.0
        %2461 = vmatprep.subr.mxu0 0.0
        %2462 = vmatpush1.msra.mxu0 0.0
        %2463 = vmatprep.subr.mxu0 0.0
        %2464 = vmatpush1.msra.mxu0 0.0
        %2465 = vmatprep.subr.mxu0 0.0
        %2466 = vmatpush1.msra.mxu0 0.0
        %2467 = vmatprep.mubr.f32.mxu0 0.0
        %2468 = vmatmul.mubr.f32.gmra.mrb[0].mxu0 %v2401
        %v2469 = vpop.f32.mrb[0].mxu0
        %v2470 = vadd.f32 0.0, %v2469
        %v2471 = vpop.f32.mrb[0].mxu0
        %2472 = vdwg.mxu0
        %2473 = vmatprep.subr.mxu0 0.0
        %2474 = vmatpush1.msra.mxu0 %v228
        %2475 = vmatprep.subr.mxu0 0.0
        %2476 = vmatpush1.msra.mxu0 %v229
        %2477 = vmatprep.subr.mxu0 0.0
        %2478 = vmatpush1.msra.mxu0 %v230
        %2479 = vmatprep.subr.mxu0 0.0
        %2480 = vmatpush1.msra.mxu0 %v231
        %2481 = vmatprep.subr.mxu0 0.0
        %2482 = vmatpush1.msra.mxu0 %v232
        %2483 = vmatprep.subr.mxu0 0.0
        %2484 = vmatpush1.msra.mxu0 %v233
        %2485 = vmatprep.subr.mxu0 0.0
        %2486 = vmatpush1.msra.mxu0 %v234
        %2487 = vmatprep.subr.mxu0 0.0
        %2488 = vmatpush1.msra.mxu0 %v235
        %2489 = vmatprep.subr.mxu0 0.0
        %2490 = vmatpush1.msra.mxu0 0.0
        %2491 = vmatprep.subr.mxu0 0.0
        %2492 = vmatpush1.msra.mxu0 0.0
        %2493 = vmatprep.subr.mxu0 0.0
        %2494 = vmatpush1.msra.mxu0 0.0
        %2495 = vmatprep.subr.mxu0 0.0
        %2496 = vmatpush1.msra.mxu0 0.0
        %2497 = vmatprep.subr.mxu0 0.0
        %2498 = vmatpush1.msra.mxu0 0.0
        %2499 = vmatprep.subr.mxu0 0.0
        %2500 = vmatpush1.msra.mxu0 0.0
        %2501 = vmatprep.subr.mxu0 0.0
        %2502 = vmatpush1.msra.mxu0 0.0
        %2503 = vmatprep.subr.mxu0 0.0
        %2504 = vmatpush1.msra.mxu0 0.0
        %2505 = vmatprep.subr.mxu0 0.0
        %2506 = vmatpush1.msra.mxu0 0.0
        %2507 = vmatprep.subr.mxu0 0.0
        %2508 = vmatpush1.msra.mxu0 0.0
        %2509 = vmatprep.subr.mxu0 0.0
        %2510 = vmatpush1.msra.mxu0 0.0
        %2511 = vmatprep.subr.mxu0 0.0
        %2512 = vmatpush1.msra.mxu0 0.0
        %2513 = vmatprep.subr.mxu0 0.0
        %2514 = vmatpush1.msra.mxu0 0.0
        %2515 = vmatprep.subr.mxu0 0.0
        %2516 = vmatpush1.msra.mxu0 0.0
        %2517 = vmatprep.subr.mxu0 0.0
        %2518 = vmatpush1.msra.mxu0 0.0
        %2519 = vmatprep.subr.mxu0 0.0
        %2520 = vmatpush1.msra.mxu0 0.0
        %2521 = vmatprep.subr.mxu0 0.0
        %2522 = vmatpush1.msra.mxu0 0.0
        %2523 = vmatprep.subr.mxu0 0.0
        %2524 = vmatpush1.msra.mxu0 0.0
        %2525 = vmatprep.subr.mxu0 0.0
        %2526 = vmatpush1.msra.mxu0 0.0
        %2527 = vmatprep.subr.mxu0 0.0
        %2528 = vmatpush1.msra.mxu0 0.0
        %2529 = vmatprep.subr.mxu0 0.0
        %2530 = vmatpush1.msra.mxu0 0.0
        %2531 = vmatprep.subr.mxu0 0.0
        %2532 = vmatpush1.msra.mxu0 0.0
        %2533 = vmatprep.subr.mxu0 0.0
        %2534 = vmatpush1.msra.mxu0 0.0
        %2535 = vmatprep.subr.mxu0 0.0
        %2536 = vmatpush1.msra.mxu0 0.0
        %2537 = vmatprep.mubr.f32.mxu0 0.0
        %2538 = vmatmul.mubr.f32.gmra.mrb[0].mxu0 %v2401
        %v2539 = vpop.f32.mrb[0].mxu0
        %v2540 = vadd.f32 0.0, %v2539
        %v2541 = vpop.f32.mrb[0].mxu0
        %2542 = vdwg.mxu0
        %v2543 = vlaneseq
        %v2544 = vshrl.u32 %v2543, 7
        %v2545 = vsub.s32 0, %v2544
        %v2546 = vrot.slane %v2470, %v2545
        %v2547 = vmul.f32 %v384, %v2546
        %v2548 = vadd.f32 %v2547, 0.0
        %v2549 = vlaneseq
        %v2550 = vshrl.u32 %v2549, 7
        %v2551 = vsub.s32 1, %v2550
        %v2552 = vrot.slane %v2470, %v2551
        %v2553 = vmul.f32 %v394, %v2552
        %v2554 = vadd.f32 %v2548, %v2553
        %v2555 = vlaneseq
        %v2556 = vshrl.u32 %v2555, 7
        %v2557 = vsub.s32 2, %v2556
        %v2558 = vrot.slane %v2470, %v2557
        %v2559 = vmul.f32 %v404, %v2558
        %v2560 = vadd.f32 %v2554, %v2559
        %v2561 = vlaneseq
        %v2562 = vshrl.u32 %v2561, 7
        %v2563 = vsub.s32 3, %v2562
        %v2564 = vrot.slane %v2470, %v2563
        %v2565 = vmul.f32 %v414, %v2564
        %v2566 = vadd.f32 %v2560, %v2565
        %v2567 = vlaneseq
        %v2568 = vshrl.u32 %v2567, 7
        %v2569 = vsub.s32 0, %v2568
        %v2570 = vrot.slane %v2540, %v2569
        %v2571 = vmul.f32 %v424, %v2570
        %v2572 = vadd.f32 %v2566, %v2571
        %v2573 = vlaneseq
        %v2574 = vshrl.u32 %v2573, 7
        %v2575 = vsub.s32 1, %v2574
        %v2576 = vrot.slane %v2540, %v2575
        %v2577 = vmul.f32 %v434, %v2576
        %v2578 = vadd.f32 %v2572, %v2577
        %v2579 = vlaneseq
        %v2580 = vshrl.u32 %v2579, 7
        %v2581 = vsub.s32 2, %v2580
        %v2582 = vrot.slane %v2540, %v2581
        %v2583 = vmul.f32 %v444, %v2582
        %v2584 = vadd.f32 %v2578, %v2583
        %v2585 = vlaneseq
        %v2586 = vshrl.u32 %v2585, 7
        %v2587 = vsub.s32 3, %v2586
        %v2588 = vrot.slane %v2540, %v2587
        %v2589 = vmul.f32 %v454, %v2588
        %v2590 = vadd.f32 %v2584, %v2589
        %v2591 = vmul.f32 %v464, %v2546
        %2593 = vrot.lane.b32.xlu0 %v2591, 127
        %v2594 = vpop.permute.xlu0 %2593
        %v2596 = vadd.f32 %v2590, %v2594
        %v2597 = vmul.f32 %v474, %v2552
        %2599 = vrot.lane.b32.xlu0 %v2597, 127
        %v2600 = vpop.permute.xlu0 %2599
        %v2602 = vadd.f32 %v2596, %v2600
        %v2603 = vmul.f32 %v484, %v2558
        %2605 = vrot.lane.b32.xlu0 %v2603, 127
        %v2606 = vpop.permute.xlu0 %2605
        %v2608 = vadd.f32 %v2602, %v2606
        %v2609 = vmul.f32 %v494, %v2564
        %2611 = vrot.lane.b32.xlu0 %v2609, 127
        %v2612 = vpop.permute.xlu0 %2611
        %v2614 = vadd.f32 %v2608, %v2612
        %v2615 = vmul.f32 %v504, %v2570
        %2617 = vrot.lane.b32.xlu0 %v2615, 127
        %v2618 = vpop.permute.xlu0 %2617
        %v2620 = vadd.f32 %v2614, %v2618
        %v2621 = vmul.f32 %v514, %v2576
        %2623 = vrot.lane.b32.xlu0 %v2621, 127
        %v2624 = vpop.permute.xlu0 %2623
        %v2626 = vadd.f32 %v2620, %v2624
        %v2627 = vmul.f32 %v524, %v2582
        %2629 = vrot.lane.b32.xlu0 %v2627, 127
        %v2630 = vpop.permute.xlu0 %2629
        %v2632 = vadd.f32 %v2626, %v2630
        %v2633 = vmul.f32 %v534, %v2588
        %2635 = vrot.lane.b32.xlu0 %v2633, 127
        %v2636 = vpop.permute.xlu0 %2635
        %v2638 = vadd.f32 %v2632, %v2636
        %v2639 = vmul.f32 %v544, %v2546
        %2641 = vrot.lane.b32.xlu0 %v2639, 126
        %v2642 = vpop.permute.xlu0 %2641
        %v2644 = vadd.f32 %v2638, %v2642
        %v2645 = vmul.f32 %v554, %v2552
        %2647 = vrot.lane.b32.xlu0 %v2645, 126
        %v2648 = vpop.permute.xlu0 %2647
        %v2650 = vadd.f32 %v2644, %v2648
        %v2651 = vmul.f32 %v564, %v2558
        %2653 = vrot.lane.b32.xlu0 %v2651, 126
        %v2654 = vpop.permute.xlu0 %2653
        %v2656 = vadd.f32 %v2650, %v2654
        %v2657 = vmul.f32 %v574, %v2564
        %2659 = vrot.lane.b32.xlu0 %v2657, 126
        %v2660 = vpop.permute.xlu0 %2659
        %v2662 = vadd.f32 %v2656, %v2660
        %v2663 = vmul.f32 %v584, %v2570
        %2665 = vrot.lane.b32.xlu0 %v2663, 126
        %v2666 = vpop.permute.xlu0 %2665
        %v2668 = vadd.f32 %v2662, %v2666
        %v2669 = vmul.f32 %v594, %v2576
        %2671 = vrot.lane.b32.xlu0 %v2669, 126
        %v2672 = vpop.permute.xlu0 %2671
        %v2674 = vadd.f32 %v2668, %v2672
        %v2675 = vmul.f32 %v604, %v2582
        %2677 = vrot.lane.b32.xlu0 %v2675, 126
        %v2678 = vpop.permute.xlu0 %2677
        %v2680 = vadd.f32 %v2674, %v2678
        %v2681 = vmul.f32 %v614, %v2588
        %2683 = vrot.lane.b32.xlu0 %v2681, 126
        %v2684 = vpop.permute.xlu0 %2683
        %v2686 = vadd.f32 %v2680, %v2684
        %v2687 = vmul.f32 %v624, %v2546
        %2689 = vrot.lane.b32.xlu0 %v2687, 125
        %v2690 = vpop.permute.xlu0 %2689
        %v2692 = vadd.f32 %v2686, %v2690
        %v2693 = vmul.f32 %v634, %v2552
        %2695 = vrot.lane.b32.xlu0 %v2693, 125
        %v2696 = vpop.permute.xlu0 %2695
        %v2698 = vadd.f32 %v2692, %v2696
        %v2699 = vmul.f32 %v644, %v2558
        %2701 = vrot.lane.b32.xlu0 %v2699, 125
        %v2702 = vpop.permute.xlu0 %2701
        %v2704 = vadd.f32 %v2698, %v2702
        %v2705 = vmul.f32 %v654, %v2564
        %2707 = vrot.lane.b32.xlu0 %v2705, 125
        %v2708 = vpop.permute.xlu0 %2707
        %v2710 = vadd.f32 %v2704, %v2708
        %v2711 = vmul.f32 %v664, %v2570
        %2713 = vrot.lane.b32.xlu0 %v2711, 125
        %v2714 = vpop.permute.xlu0 %2713
        %v2716 = vadd.f32 %v2710, %v2714
        %v2717 = vmul.f32 %v674, %v2576
        %2719 = vrot.lane.b32.xlu0 %v2717, 125
        %v2720 = vpop.permute.xlu0 %2719
        %v2722 = vadd.f32 %v2716, %v2720
        %v2723 = vmul.f32 %v684, %v2582
        %2725 = vrot.lane.b32.xlu0 %v2723, 125
        %v2726 = vpop.permute.xlu0 %2725
        %v2728 = vadd.f32 %v2722, %v2726
        %v2729 = vmul.f32 %v694, %v2588
        %2731 = vrot.lane.b32.xlu0 %v2729, 125
        %v2732 = vpop.permute.xlu0 %2731
        %v2734 = vadd.f32 %v2728, %v2732
        %v2735 = vmul.f32 %v2734, %v704
        %v2736 = vadd.f32 %v2735, %v709
        %v2737 = vmax.f32 %v2736, 0.0
        %v2738 = vlaneseq
        %v2739 = vshrl.u32 %v2738, 7
        %v2740 = vsub.s32 0, %v2739
        %v2741 = vrot.slane %v2737, %v2740
        %v2742 = vmul.f32 %v716, %v2741
        %v2743 = vmul.f32 %v721, %v2741
        %v2744 = vadd.f32 %v2742, 0.0
        %v2745 = vadd.f32 %v2743, 0.0
        %v2746 = vlaneseq
        %v2747 = vshrl.u32 %v2746, 7
        %v2748 = vsub.s32 1, %v2747
        %v2749 = vrot.slane %v2737, %v2748
        %v2750 = vmul.f32 %v733, %v2749
        %v2751 = vmul.f32 %v737, %v2749
        %v2752 = vadd.f32 %v2744, %v2750
        %v2753 = vadd.f32 %v2745, %v2751
        %v2754 = vlaneseq
        %v2755 = vshrl.u32 %v2754, 7
        %v2756 = vsub.s32 2, %v2755
        %v2757 = vrot.slane %v2737, %v2756
        %v2758 = vmul.f32 %v749, %v2757
        %v2759 = vmul.f32 %v753, %v2757
        %v2760 = vadd.f32 %v2752, %v2758
        %v2761 = vadd.f32 %v2753, %v2759
        %v2762 = vlaneseq
        %v2763 = vshrl.u32 %v2762, 7
        %v2764 = vsub.s32 3, %v2763
        %v2765 = vrot.slane %v2737, %v2764
        %v2766 = vmul.f32 %v765, %v2765
        %v2767 = vmul.f32 %v769, %v2765
        %v2768 = vadd.f32 %v2760, %v2766
        %v2769 = vadd.f32 %v2761, %v2767
        %v2770 = vlaneseq
        %v2771 = vshrl.u32 %v2770, 7
        %v2772 = vsub.s32 4, %v2771
        %v2773 = vrot.slane %v2737, %v2772
        %v2774 = vmul.f32 %v781, %v2773
        %v2775 = vmul.f32 %v785, %v2773
        %v2776 = vadd.f32 %v2768, %v2774
        %v2777 = vadd.f32 %v2769, %v2775
        %v2778 = vlaneseq
        %v2779 = vshrl.u32 %v2778, 7
        %v2780 = vsub.s32 5, %v2779
        %v2781 = vrot.slane %v2737, %v2780
        %v2782 = vmul.f32 %v797, %v2781
        %v2783 = vmul.f32 %v801, %v2781
        %v2784 = vadd.f32 %v2776, %v2782
        %v2785 = vadd.f32 %v2777, %v2783
        %v2786 = vlaneseq
        %v2787 = vshrl.u32 %v2786, 7
        %v2788 = vsub.s32 6, %v2787
        %v2789 = vrot.slane %v2737, %v2788
        %v2790 = vmul.f32 %v813, %v2789
        %v2791 = vmul.f32 %v817, %v2789
        %v2792 = vadd.f32 %v2784, %v2790
        %v2793 = vadd.f32 %v2785, %v2791
        %v2794 = vlaneseq
        %v2795 = vshrl.u32 %v2794, 7
        %v2796 = vsub.s32 7, %v2795
        %v2797 = vrot.slane %v2737, %v2796
        %v2798 = vmul.f32 %v829, %v2797
        %v2799 = vmul.f32 %v833, %v2797
        %v2800 = vadd.f32 %v2792, %v2798
        %v2801 = vadd.f32 %v2793, %v2799
        %v2802 = vmul.f32 %v845, %v2741
        %v2803 = vmul.f32 %v849, %v2741
        %2806 = vrot.lane.b32.xlu0 %v2802, 127
        %v2807 = vpop.permute.xlu0 %2806
        %2808 = vrot.lane.b32.xlu0 %v2803, 127
        %v2809 = vpop.permute.xlu0 %2808
        %v2812 = vadd.f32 %v2800, %v2807
        %v2813 = vadd.f32 %v2801, %v2809
        %v2814 = vmul.f32 %v865, %v2749
        %v2815 = vmul.f32 %v869, %v2749
        %2818 = vrot.lane.b32.xlu0 %v2814, 127
        %v2819 = vpop.permute.xlu0 %2818
        %2820 = vrot.lane.b32.xlu0 %v2815, 127
        %v2821 = vpop.permute.xlu0 %2820
        %v2824 = vadd.f32 %v2812, %v2819
        %v2825 = vadd.f32 %v2813, %v2821
        %v2826 = vmul.f32 %v885, %v2757
        %v2827 = vmul.f32 %v889, %v2757
        %2830 = vrot.lane.b32.xlu0 %v2826, 127
        %v2831 = vpop.permute.xlu0 %2830
        %2832 = vrot.lane.b32.xlu0 %v2827, 127
        %v2833 = vpop.permute.xlu0 %2832
        %v2836 = vadd.f32 %v2824, %v2831
        %v2837 = vadd.f32 %v2825, %v2833
        %v2838 = vmul.f32 %v905, %v2765
        %v2839 = vmul.f32 %v909, %v2765
        %2842 = vrot.lane.b32.xlu0 %v2838, 127
        %v2843 = vpop.permute.xlu0 %2842
        %2844 = vrot.lane.b32.xlu0 %v2839, 127
        %v2845 = vpop.permute.xlu0 %2844
        %v2848 = vadd.f32 %v2836, %v2843
        %v2849 = vadd.f32 %v2837, %v2845
        %v2850 = vmul.f32 %v925, %v2773
        %v2851 = vmul.f32 %v929, %v2773
        %2854 = vrot.lane.b32.xlu0 %v2850, 127
        %v2855 = vpop.permute.xlu0 %2854
        %2856 = vrot.lane.b32.xlu0 %v2851, 127
        %v2857 = vpop.permute.xlu0 %2856
        %v2860 = vadd.f32 %v2848, %v2855
        %v2861 = vadd.f32 %v2849, %v2857
        %v2862 = vmul.f32 %v945, %v2781
        %v2863 = vmul.f32 %v949, %v2781
        %2866 = vrot.lane.b32.xlu0 %v2862, 127
        %v2867 = vpop.permute.xlu0 %2866
        %2868 = vrot.lane.b32.xlu0 %v2863, 127
        %v2869 = vpop.permute.xlu0 %2868
        %v2872 = vadd.f32 %v2860, %v2867
        %v2873 = vadd.f32 %v2861, %v2869
        %v2874 = vmul.f32 %v965, %v2789
        %v2875 = vmul.f32 %v969, %v2789
        %2878 = vrot.lane.b32.xlu0 %v2874, 127
        %v2879 = vpop.permute.xlu0 %2878
        %2880 = vrot.lane.b32.xlu0 %v2875, 127
        %v2881 = vpop.permute.xlu0 %2880
        %v2884 = vadd.f32 %v2872, %v2879
        %v2885 = vadd.f32 %v2873, %v2881
        %v2886 = vmul.f32 %v985, %v2797
        %v2887 = vmul.f32 %v989, %v2797
        %2890 = vrot.lane.b32.xlu0 %v2886, 127
        %v2891 = vpop.permute.xlu0 %2890
        %2892 = vrot.lane.b32.xlu0 %v2887, 127
        %v2893 = vpop.permute.xlu0 %2892
        %v2896 = vadd.f32 %v2884, %v2891
        %v2897 = vadd.f32 %v2885, %v2893
        %v2898 = vmul.f32 %v1005, %v2741
        %v2899 = vmul.f32 %v1009, %v2741
        %2902 = vrot.lane.b32.xlu0 %v2898, 126
        %v2903 = vpop.permute.xlu0 %2902
        %2904 = vrot.lane.b32.xlu0 %v2899, 126
        %v2905 = vpop.permute.xlu0 %2904
        %v2908 = vadd.f32 %v2896, %v2903
        %v2909 = vadd.f32 %v2897, %v2905
        %v2910 = vmul.f32 %v1025, %v2749
        %v2911 = vmul.f32 %v1029, %v2749
        %2914 = vrot.lane.b32.xlu0 %v2910, 126
        %v2915 = vpop.permute.xlu0 %2914
        %2916 = vrot.lane.b32.xlu0 %v2911, 126
        %v2917 = vpop.permute.xlu0 %2916
        %v2920 = vadd.f32 %v2908, %v2915
        %v2921 = vadd.f32 %v2909, %v2917
        %v2922 = vmul.f32 %v1045, %v2757
        %v2923 = vmul.f32 %v1049, %v2757
        %2926 = vrot.lane.b32.xlu0 %v2922, 126
        %v2927 = vpop.permute.xlu0 %2926
        %2928 = vrot.lane.b32.xlu0 %v2923, 126
        %v2929 = vpop.permute.xlu0 %2928
        %v2932 = vadd.f32 %v2920, %v2927
        %v2933 = vadd.f32 %v2921, %v2929
        %v2934 = vmul.f32 %v1065, %v2765
        %v2935 = vmul.f32 %v1069, %v2765
        %2938 = vrot.lane.b32.xlu0 %v2934, 126
        %v2939 = vpop.permute.xlu0 %2938
        %2940 = vrot.lane.b32.xlu0 %v2935, 126
        %v2941 = vpop.permute.xlu0 %2940
        %v2944 = vadd.f32 %v2932, %v2939
        %v2945 = vadd.f32 %v2933, %v2941
        %v2946 = vmul.f32 %v1085, %v2773
        %v2947 = vmul.f32 %v1089, %v2773
        %2950 = vrot.lane.b32.xlu0 %v2946, 126
        %v2951 = vpop.permute.xlu0 %2950
        %2952 = vrot.lane.b32.xlu0 %v2947, 126
        %v2953 = vpop.permute.xlu0 %2952
        %v2956 = vadd.f32 %v2944, %v2951
        %v2957 = vadd.f32 %v2945, %v2953
        %v2958 = vmul.f32 %v1105, %v2781
        %v2959 = vmul.f32 %v1109, %v2781
        %2962 = vrot.lane.b32.xlu0 %v2958, 126
        %v2963 = vpop.permute.xlu0 %2962
        %2964 = vrot.lane.b32.xlu0 %v2959, 126
        %v2965 = vpop.permute.xlu0 %2964
        %v2968 = vadd.f32 %v2956, %v2963
        %v2969 = vadd.f32 %v2957, %v2965
        %v2970 = vmul.f32 %v1125, %v2789
        %v2971 = vmul.f32 %v1129, %v2789
        %2974 = vrot.lane.b32.xlu0 %v2970, 126
        %v2975 = vpop.permute.xlu0 %2974
        %2976 = vrot.lane.b32.xlu0 %v2971, 126
        %v2977 = vpop.permute.xlu0 %2976
        %v2980 = vadd.f32 %v2968, %v2975
        %v2981 = vadd.f32 %v2969, %v2977
        %v2982 = vmul.f32 %v1145, %v2797
        %v2983 = vmul.f32 %v1149, %v2797
        %2986 = vrot.lane.b32.xlu0 %v2982, 126
        %v2987 = vpop.permute.xlu0 %2986
        %2988 = vrot.lane.b32.xlu0 %v2983, 126
        %v2989 = vpop.permute.xlu0 %2988
        %v2992 = vadd.f32 %v2980, %v2987
        %v2993 = vadd.f32 %v2981, %v2989
        %v2994 = vmul.f32 %v2992, %v1165
        %v2995 = vmul.f32 %v2993, %v1169
        %v2996 = vadd.f32 %v2994, %v1175
        %v2997 = vadd.f32 %v2995, %v1179
        %v2998 = vmax.f32 %v2996, 0.0
        %v2999 = vmax.f32 %v2997, 0.0
        %s3000 = scalar_lea.vmem %s164, 48 [#allocation2]
        %3001 = vst.msk [vmem:[%s3000] sm:$0xff] %vm1185, %v2998
        %3002 = vst.msk [vmem:[%s3000 + $0x8] sm:$0xff] %vm1185, %v2999
        %s3003 = sand.u32 %s93, 1
        %s3004 = scalar_lea.sflag [#allocation3], %s3003
        %s3005 = sand.u32 %s93, 1
        %s3006 = smul.addr %s3005, 64
        %s3007 = scalar_lea.vmem [#allocation2], %s3006
        // Predicated region
        $region33: #{kanres_init_forward.1} parent=31 // pred_check
          %p3008 = pneg %p103
        $region34: #{kanres_init_forward.1} parent=31 // pred_check_branch
          %3010 = sbr.rel (%p3008) target = $region36
        $region35: #{kanres_init_forward.1} parent=31 // pred_region
          %s3011 = smul.u32 4, %s17
          %s3013 = ssub.s32 1024, 1024
          %3014 = vsyncadd %s3004, %s3013
          %s3015 = smul.addr %s3011, 2
          %s3016 = smul.addr %s3015, 128
          %s3017 = scalar_lea.hbm %s3, %s3016
          %s3018 = sshll.u32 %s3007, 4
          %s3019 = int_to_ptr.vmem [resolvable:$true] %s3018
          %3024 = dma.vmem_to_hbm [thread:$0]  %s3019, 1024, %s3017, %s3004, 128, 128, 8
        $region36: #{kanres_init_forward.1} parent=31 // pred_fallthru
          _
      $region32: #{kanres_init_forward.1} parent=5 // pred_fallthru
        _
      %p3025 = scmp.le.s32.totalorder 2, %s12
      // Predicated region
      $region37: #{kanres_init_forward.1} parent=5 // pred_check
        %p3026 = pneg %p3025
      $region38: #{kanres_init_forward.1} parent=5 // pred_check_branch
        %3028 = sbr.rel (%p3026) target = $region40
      $region39: #{kanres_init_forward.1} parent=5 // pred_region
        %s3029 = ssub.s32 %s12, 2
        // Predicated region
        $region41: #{kanres_init_forward.1} parent=39 // pred_check
          %p3030 = pneg %p109
        $region42: #{kanres_init_forward.1} parent=39 // pred_check_branch
          %3032 = sbr.rel (%p3030) target = $region44
        $region43: #{kanres_init_forward.1} parent=39 // pred_region
          %s3033 = sand.u32 %s94, 1
          %s3034 = scalar_lea.sflag [#allocation3], %s3033
          %s3035 = sand.u32 %s94, 1
          %s3036 = smul.addr %s3035, 64
          %s3037 = scalar_lea.vmem [#allocation2], %s3036
          %3038 = dma.done %s3034, 1024
        $region44: #{kanres_init_forward.1} parent=39 // pred_fallthru
          _
      $region40: #{kanres_init_forward.1} parent=5 // pred_fallthru
        _
    $region6: #{kanres_init_forward.1} parent=1 // loop_footer
      %s16 = sadd.s32 1, %s12
    $region7: #{kanres_init_forward.1} parent=1 // loop_footer_branch
      %11 = sbr.rel target = $region3
    $region8: #{kanres_init_forward.1} parent=1 // loop_exit
      _
    %3039 = vsyncpa [#allocation3], 1
    %s3040 = scalar_lea.sflag [#allocation3], 1
    %3041 = vsyncpa %s3040, 1

</llo_original>
